<compile_context>
chip_gen: v6e
topology: v6e:2x2x1
jax: 0.10.0
libtpu: 0.0.40
codegen_flags: <defaults>
</compile_context>

<pallas_src>
import functools

import jax
import jax.numpy as jnp
import numpy as np
from jax import lax
from jax.experimental import pallas as pl
from jax.experimental.pallas import tpu as pltpu


# -----------------------------------------------------------------------------
# Fused kernel: 3x (conv3x3 + folded-BN + ReLU)  ->  fused 1x1 heads
# -----------------------------------------------------------------------------
def _fused_head_kernel(x_ref, w1_ref, b1_ref, w2_ref, b2_ref, w3_ref, b3_ref,
                       wht_ref, bht_ref, o_ref, *, row_tile, img_h):
    # x_ref  : (H+6, W, Cin)  bf16, image zero-padded by 3 rows top/bottom
    # wN_ref : (9*Cin, 64)    bf16, BN scale pre-folded, im2col (kh,kw,cin) layout
    # bN_ref : (1, 64)        f32 folded BN bias
    # wht_ref: (Ctot, 64)     bf16 transposed concat [cls | box | dir] 1x1 weights
    # bht_ref: (Ctot, 1)      f32 concatenated head biases
    # o_ref  : (Ctot, TH*W)   f32 channel-first output slab for this row tile
    TH = row_tile
    W = x_ref.shape[1]
    # first output image row handled by this tile
    s = pl.multiple_of(pl.program_id(1) * TH, TH)

    def conv3x3(img, w_ref, b_ref, out_bf16=True):
        # img: (R, W, Cin) bf16 with halo rows; valid in H, SAME (zero) in W.
        R, Wd, cin = img.shape
        cout = w_ref.shape[1]
        zc = jnp.zeros((R, 1, cin), img.dtype)
        xp = jnp.concatenate([zc, img, zc], axis=1)               # (R, W+2, Cin)
        # im2col: one (rows*W, 9*Cin) patch matrix -> single MXU matmul.
        cols = [xp[dy:dy + R - 2, dx:dx + Wd, :]
                for dy in range(3) for dx in range(3)]
        patches = jnp.concatenate(cols, axis=-1).reshape((R - 2) * Wd, 9 * cin)
        acc = jnp.dot(patches, w_ref[...], preferred_element_type=jnp.float32)
        y = jnp.maximum(acc + b_ref[0], 0.0)                      # f32
        if out_bf16:
            y = y.astype(jnp.bfloat16)                            # cast once per act
        return y.reshape(R - 2, Wd, cout)

    def zero_outside(y, first_row):
        # Rows whose image-row index falls outside [0, img_h) correspond to the
        # next layer's "SAME" zero padding -> force them to zero (exact stacked-
        # conv semantics at tile boundaries).
        ridx = first_row + lax.broadcasted_iota(jnp.int32, (y.shape[0], 1, 1), 0)
        keep = jnp.logical_and(ridx >= 0, ridx < img_h)
        return jnp.where(keep, y, jnp.zeros_like(y))

    # input rows [s-3, s+TH+3) of the image == padded rows [s, s+TH+6)
    xt = x_ref[pl.ds(s, TH + 6)]                                   # (TH+6, W, Cin)
    y1 = zero_outside(conv3x3(xt, w1_ref, b1_ref), s - 2)          # (TH+4, W, 64)
    y2 = zero_outside(conv3x3(y1, w2_ref, b2_ref), s - 1)          # (TH+2, W, 64)
    y3 = conv3x3(y2, w3_ref, b3_ref, out_bf16=False)               # (TH,   W, 64) f32

    # Fused 1x1 heads, produced channel-first so the store is lane-dense:
    #   (Ctot, 64) @ (64, TH*W)  ->  (Ctot, TH*W)
    feat_t = jnp.transpose(y3.reshape(TH * W, 64)).astype(jnp.bfloat16)
    heads_t = jnp.dot(wht_ref[...], feat_t,
                      preferred_element_type=jnp.float32) + bht_ref[...]
    o_ref[...] = heads_t.astype(o_ref.dtype)


def fused_small_object_head(x_pad, w1, b1, w2, b2, w3, b3, wht, bht,
                            *, row_tile, img_h):
    B, Hp, W, Cin = x_pad.shape          # Hp = H + 6
    H = img_h
    n_tiles = H // row_tile
    Ctot = wht.shape[0]

    kernel = functools.partial(_fused_head_kernel, row_tile=row_tile, img_h=H)
    flops = 2 * B * H * W * (9 * Cin * 64 + 2 * 9 * 64 * 64 + 64 * Ctot)
    bytes_accessed = (x_pad.size * x_pad.dtype.itemsize
                      + sum(int(a.size) * a.dtype.itemsize
                            for a in (w1, b1, w2, b2, w3, b3, wht, bht))
                      + B * Ctot * H * W * 4)

    return pl.pallas_call(
        kernel,
        out_shape=jax.ShapeDtypeStruct((B, Ctot, H * W), jnp.float32),
        grid=(B, n_tiles),
        in_specs=[
            pl.BlockSpec((None, Hp, W, Cin), lambda b, t: (b, 0, 0, 0)),
            pl.BlockSpec(w1.shape, lambda b, t: (0, 0)),
            pl.BlockSpec(b1.shape, lambda b, t: (0, 0)),
            pl.BlockSpec(w2.shape, lambda b, t: (0, 0)),
            pl.BlockSpec(b2.shape, lambda b, t: (0, 0)),
            pl.BlockSpec(w3.shape, lambda b, t: (0, 0)),
            pl.BlockSpec(b3.shape, lambda b, t: (0, 0)),
            pl.BlockSpec(wht.shape, lambda b, t: (0, 0)),
            pl.BlockSpec(bht.shape, lambda b, t: (0, 0)),
        ],
        out_specs=pl.BlockSpec((None, Ctot, row_tile * W), lambda b, t: (b, 0, t)),
        compiler_params=pltpu.CompilerParams(
            dimension_semantics=("parallel", "parallel"),
            vmem_limit_bytes=64 * 1024 * 1024),
        cost_estimate=pl.CostEstimate(flops=int(flops), transcendentals=0,
                                      bytes_accessed=int(bytes_accessed)),
    )(x_pad, w1, b1, w2, b2, w3, b3, wht, bht)


# -----------------------------------------------------------------------------
# Parameter construction / preparation
# -----------------------------------------------------------------------------
def make_params(key, num_filters, num_class, num_anchor_per_loc, box_code_size,
                num_direction_bins, encode_background_as_zeros=True):
    """Deterministic synthetic parameters with the same shapes as the PyTorch module."""
    if encode_background_as_zeros:
        num_cls = num_anchor_per_loc * num_class
    else:
        num_cls = num_anchor_per_loc * (num_class + 1)
    num_box = num_anchor_per_loc * box_code_size
    num_dir = num_anchor_per_loc * num_direction_bins

    ks = jax.random.split(key, 7)
    eps = 1e-5
    # eval-mode BN with gamma=1, beta=0, running_mean=0, running_var=1
    bn_scale = jnp.full((64,), 1.0 / np.sqrt(1.0 + eps), jnp.float32)
    bn_bias = jnp.zeros((64,), jnp.float32)

    def conv_w(k, cin, cout, ksz):
        return (0.1 * jax.random.normal(k, (ksz, ksz, cin, cout))).astype(jnp.float32)

    return {
        "net": [
            (conv_w(ks[0], num_filters, 64, 3), bn_scale, bn_bias),
            (conv_w(ks[1], 64, 64, 3), bn_scale, bn_bias),
            (conv_w(ks[2], 64, 64, 3), bn_scale, bn_bias),
        ],
        "cls": ((0.1 * jax.random.normal(ks[3], (64, num_cls))).astype(jnp.float32),
                (0.1 * jax.random.normal(ks[4], (num_cls,))).astype(jnp.float32)),
        "box": ((0.1 * jax.random.normal(ks[5], (64, num_box))).astype(jnp.float32),
                (0.01 * jnp.arange(num_box, dtype=jnp.float32))),
        "dir": ((0.1 * jax.random.normal(ks[6], (64, num_dir))).astype(jnp.float32),
                (0.01 * jnp.arange(num_dir, dtype=jnp.float32))),
    }


def _prepare_fused_params(params):
    """Fold BN scale into conv weights (im2col layout) and concat the 1x1 heads."""
    net = []
    for (w, s, b) in params["net"]:
        kh, kw, cin, cout = w.shape
        wf = (w * s).reshape(kh * kw * cin, cout).astype(jnp.bfloat16)
        net.append((wf, b.reshape(1, cout).astype(jnp.float32)))

    wc, bc = params["cls"]
    wb, bb = params["box"]
    wd, bd = params["dir"]
    wh = jnp.concatenate([wc, wb, wd], axis=1)                    # (64, Ctot)
    wht = jnp.transpose(wh).astype(jnp.bfloat16)                  # (Ctot, 64)
    bht = jnp.concatenate([bc, bb, bd], axis=0).reshape(-1, 1).astype(jnp.float32)
    return net, wht, bht


def _pick_row_tile(H, W, target=64):
    # Largest row tile <= target that divides H and keeps the output block lane-dense.
    for th in range(min(H, target), 0, -1):
        if H % th == 0 and (th * W) % 128 == 0:
            return th
    return H   # single tile: block == full array, always a legal BlockSpec


# -----------------------------------------------------------------------------
# SmallObjectHead forward (Pallas)
# -----------------------------------------------------------------------------
@functools.partial(jax.jit, static_argnames=("num_class", "num_anchor_per_loc",
                                             "box_code_size", "num_direction_bins",
                                             "row_tile"))
def small_object_head_forward(x_nchw, params, *, num_class, num_anchor_per_loc,
                              box_code_size, num_direction_bins, row_tile=None):
    # Relayout NCHW -> NHWC, cast to bf16 (halves input DMA) and add the 3-row halo.
    x = jnp.transpose(x_nchw, (0, 2, 3, 1)).astype(jnp.bfloat16)
    B, H, W, Cin = x.shape
    if (row_tile is None or H % row_tile != 0
            or ((row_tile * W) % 128 != 0 and row_tile != H)):
        row_tile = _pick_row_tile(H, W)
    x = jnp.pad(x, ((0, 0), (3, 3), (0, 0), (0, 0)))

    net, wht, bht = _prepare_fused_params(params)
    (w1, b1), (w2, b2), (w3, b3) = net
    y = fused_small_object_head(x, w1, b1, w2, b2, w3, b3, wht, bht,
                                row_tile=row_tile, img_h=H)       # (B, Ctot, H*W)

    ncls = params["cls"][0].shape[1]
    nbox = params["box"][0].shape[1]

    def split(y_c, A, last):
        # mirrors: view(B, A, last, H, W).permute(0,1,3,4,2).view(B, -1, last)
        z = y_c.reshape(B, A, last, H, W)
        z = jnp.transpose(z, (0, 1, 3, 4, 2))
        return z.reshape(B, A * H * W, last)

    cls_y = y[:, :ncls, :]
    box_y = y[:, ncls:ncls + nbox, :]
    dir_y = y[:, ncls + nbox:, :]
    return {
        "box_preds": split(box_y, num_anchor_per_loc, box_code_size),
        "cls_preds": split(cls_y, num_anchor_per_loc, num_class),
        "dir_cls_preds": split(dir_y, num_anchor_per_loc, num_direction_bins),
    }


# -----------------------------------------------------------------------------
# Pure-JAX reference (bf16-matched numerics) for a correctness sanity check
# -----------------------------------------------------------------------------
def reference_forward(x_nchw, params, *, num_class, num_anchor_per_loc,
                      box_code_size, num_direction_bins):
    x = jnp.transpose(x_nchw, (0, 2, 3, 1)).astype(jnp.float32)
    for (w, s, b) in params["net"]:
        wf = (w * s).astype(jnp.bfloat16)                # same BN fold + bf16 quant
        y = lax.conv_general_dilated(x.astype(jnp.bfloat16), wf, (1, 1), "SAME",
                                     dimension_numbers=("NHWC", "HWIO", "NHWC"),
                                     preferred_element_type=jnp.float32)
        x = jnp.maximum(y + b, 0.0)

    def conv1x1(xa, w, bias):
        Bc, Hc, Wc, Cc = xa.shape
        y = jnp.dot(xa.reshape(Bc * Hc * Wc, Cc).astype(jnp.bfloat16),
                    w.astype(jnp.bfloat16), preferred_element_type=jnp.float32)
        return y.reshape(Bc, Hc, Wc, -1) + bias

    def split_nhwc(y, A, last):
        Bc, Hc, Wc, _ = y.shape
        z = y.reshape(Bc, Hc, Wc, A, last)
        z = jnp.transpose(z, (0, 3, 1, 2, 4))
        return z.reshape(Bc, A * Hc * Wc, last)

    cls_y = conv1x1(x, *params["cls"])
    box_y = conv1x1(x, *params["box"])
    dir_y = conv1x1(x, *params["dir"])
    return {
        "box_preds": split_nhwc(box_y, num_anchor_per_loc, box_code_size),
        "cls_preds": split_nhwc(cls_y, num_anchor_per_loc, num_class),
        "dir_cls_preds": split_nhwc(dir_y, num_anchor_per_loc, num_direction_bins),
    }


# -----------------------------------------------------------------------------
if __name__ == "__main__":
    # Small config consistent with the module's __init__.
    num_filters = 4
    num_class = 2
    num_anchor_per_loc = 2
    box_code_size = 7
    num_direction_bins = 2
    B, H, W = 2, 16, 16

    key = jax.random.PRNGKey(0)
    kx, kp = jax.random.split(key)
    x = jax.random.normal(kx, (B, num_filters, H, W), dtype=jnp.float32)  # NCHW
    params = make_params(kp, num_filters, num_class, num_anchor_per_loc,
                         box_code_size, num_direction_bins,
                         encode_background_as_zeros=True)

    # row_tile=8 exercises the multi-tile (halo + boundary-mask) path: grid=(2, 2).
    out = small_object_head_forward(
        x, params, num_class=num_class, num_anchor_per_loc=num_anchor_per_loc,
        box_code_size=box_code_size, num_direction_bins=num_direction_bins,
        row_tile=8)
    out = jax.block_until_ready(out)

    ref = reference_forward(
        x, params, num_class=num_class, num_anchor_per_loc=num_anchor_per_loc,
        box_code_size=box_code_size, num_direction_bins=num_direction_bins)

    assert out["box_preds"].shape == (B, num_anchor_per_loc * H * W, box_code_size)
    assert out["cls_preds"].shape == (B, num_anchor_per_loc * H * W, num_class)
    assert out["dir_cls_preds"].shape == (B, num_anchor_per_loc * H * W, num_direction_bins)
    for k in ("box_preds", "cls_preds", "dir_cls_preds"):
        np.testing.assert_allclose(np.asarray(out[k]), np.asarray(ref[k]),
                                   rtol=1e-2, atol=1e-2)

    print("KERNEL_OK")
</pallas_src>

<mosaic_0001>
module attributes {stable_mosaic.version = 11 : i64} {
  func.func @_fused_head_kernel(%arg0: i32, %arg1: i32, %arg2: memref<1x22x16x4xbf16, #tpu.memory_space<vmem>>, %arg3: memref<36x64xbf16, #tpu.memory_space<vmem>>, %arg4: memref<1x64xf32, #tpu.memory_space<vmem>>, %arg5: memref<576x64xbf16, #tpu.memory_space<vmem>>, %arg6: memref<1x64xf32, #tpu.memory_space<vmem>>, %arg7: memref<576x64xbf16, #tpu.memory_space<vmem>>, %arg8: memref<1x64xf32, #tpu.memory_space<vmem>>, %arg9: memref<22x64xbf16, #tpu.memory_space<vmem>>, %arg10: memref<22x1xf32, #tpu.memory_space<vmem>>, %arg11: memref<1x22x128xf32, #tpu.memory_space<vmem>>) attributes {dimension_semantics = [#tpu.dimension_semantics<parallel>, #tpu.dimension_semantics<parallel>], iteration_bounds = array<i64: 2, 2>, scalar_prefetch = 0 : i64, scratch_operands = 0 : i64, tpu.core_type = #tpu.core_type<tc>, window_params = [{transform_indices = @transform_0, window_bounds = array<i64: 1, 22, 16, 4>}, {pipeline_mode = #tpu.pipeline_mode<synchronous>, transform_indices = @transform_1, window_bounds = array<i64: 36, 64>}, {pipeline_mode = #tpu.pipeline_mode<synchronous>, transform_indices = @transform_2, window_bounds = array<i64: 1, 64>}, {pipeline_mode = #tpu.pipeline_mode<synchronous>, transform_indices = @transform_3, window_bounds = array<i64: 576, 64>}, {pipeline_mode = #tpu.pipeline_mode<synchronous>, transform_indices = @transform_4, window_bounds = array<i64: 1, 64>}, {pipeline_mode = #tpu.pipeline_mode<synchronous>, transform_indices = @transform_5, window_bounds = array<i64: 576, 64>}, {pipeline_mode = #tpu.pipeline_mode<synchronous>, transform_indices = @transform_6, window_bounds = array<i64: 1, 64>}, {pipeline_mode = #tpu.pipeline_mode<synchronous>, transform_indices = @transform_7, window_bounds = array<i64: 22, 64>}, {pipeline_mode = #tpu.pipeline_mode<synchronous>, transform_indices = @transform_8, window_bounds = array<i64: 22, 1>}, {transform_indices = @transform_9, window_bounds = array<i64: 1, 22, 128>}]} {
    %c8_i32 = arith.constant 8 : i32
    %0 = arith.muli %arg1, %c8_i32 : i32
    %1 = tpu.assume_multiple %0, 8 : i32
    %c0 = arith.constant 0 : index
    %2 = arith.index_cast %1 : i32 to index
    %c0_0 = arith.constant 0 : index
    %c0_1 = arith.constant 0 : index
    %3 = vector.load %arg2[%c0, %2, %c0_0, %c0_1] : memref<1x22x16x4xbf16, #tpu.memory_space<vmem>>, vector<1x14x16x4xbf16>
    %4 = vector.shape_cast %3 : vector<1x14x16x4xbf16> to vector<14x16x4xbf16>
    %cst = arith.constant 0.000000e+00 : bf16
    %5 = vector.broadcast %cst : bf16 to vector<14x1x4xbf16>
    %6 = tpu.concatenate %5, %4, %5 in 1 : vector<14x1x4xbf16>, vector<14x16x4xbf16>, vector<14x1x4xbf16> -> vector<14x18x4xbf16>
    %7 = vector.extract_strided_slice %6 {offsets = [0, 0, 0], sizes = [12, 16, 4], strides = [1, 1, 1]} : vector<14x18x4xbf16> to vector<12x16x4xbf16>
    %8 = vector.extract_strided_slice %6 {offsets = [0, 1, 0], sizes = [12, 16, 4], strides = [1, 1, 1]} : vector<14x18x4xbf16> to vector<12x16x4xbf16>
    %9 = vector.extract_strided_slice %6 {offsets = [0, 2, 0], sizes = [12, 16, 4], strides = [1, 1, 1]} : vector<14x18x4xbf16> to vector<12x16x4xbf16>
    %10 = vector.extract_strided_slice %6 {offsets = [1, 0, 0], sizes = [12, 16, 4], strides = [1, 1, 1]} : vector<14x18x4xbf16> to vector<12x16x4xbf16>
    %11 = vector.extract_strided_slice %6 {offsets = [1, 1, 0], sizes = [12, 16, 4], strides = [1, 1, 1]} : vector<14x18x4xbf16> to vector<12x16x4xbf16>
    %12 = vector.extract_strided_slice %6 {offsets = [1, 2, 0], sizes = [12, 16, 4], strides = [1, 1, 1]} : vector<14x18x4xbf16> to vector<12x16x4xbf16>
    %13 = vector.extract_strided_slice %6 {offsets = [2, 0, 0], sizes = [12, 16, 4], strides = [1, 1, 1]} : vector<14x18x4xbf16> to vector<12x16x4xbf16>
    %14 = vector.extract_strided_slice %6 {offsets = [2, 1, 0], sizes = [12, 16, 4], strides = [1, 1, 1]} : vector<14x18x4xbf16> to vector<12x16x4xbf16>
    %15 = vector.extract_strided_slice %6 {offsets = [2, 2, 0], sizes = [12, 16, 4], strides = [1, 1, 1]} : vector<14x18x4xbf16> to vector<12x16x4xbf16>
    %16 = tpu.concatenate %7, %8, %9, %10, %11, %12, %13, %14, %15 in 2 : vector<12x16x4xbf16>, vector<12x16x4xbf16>, vector<12x16x4xbf16>, vector<12x16x4xbf16>, vector<12x16x4xbf16>, vector<12x16x4xbf16>, vector<12x16x4xbf16>, vector<12x16x4xbf16>, vector<12x16x4xbf16> -> vector<12x16x36xbf16>
    %17 = vector.shape_cast %16 : vector<12x16x36xbf16> to vector<192x36xbf16>
    %c0_2 = arith.constant 0 : index
    %c0_3 = arith.constant 0 : index
    %18 = vector.load %arg3[%c0_2, %c0_3] : memref<36x64xbf16, #tpu.memory_space<vmem>>, vector<36x64xbf16>
    %cst_4 = arith.constant dense<0.000000e+00> : vector<192x64xf32>
    %19 = tpu.matmul %17, %18, %cst_4 {dimension_numbers = #tpu.dot_dimension_numbers<[1], [0], [0], [1], [0, 0, 1, 1], [], []>} : vector<192x36xbf16>, vector<36x64xbf16>, vector<192x64xf32> -> vector<192x64xf32>
    %c0_5 = arith.constant 0 : index
    %c0_6 = arith.constant 0 : index
    %20 = vector.load %arg4[%c0_5, %c0_6] : memref<1x64xf32, #tpu.memory_space<vmem>>, vector<1x64xf32>
    %21 = vector.shape_cast %20 : vector<1x64xf32> to vector<64xf32>
    %22 = vector.shape_cast %21 : vector<64xf32> to vector<1x64xf32>
    %23 = vector.broadcast %22 : vector<1x64xf32> to vector<192x64xf32>
    %24 = arith.addf %19, %23 : vector<192x64xf32>
    %cst_7 = arith.constant 0.000000e+00 : f32
    %25 = vector.broadcast %cst_7 : f32 to vector<192x64xf32>
    %26 = arith.maximumf %24, %25 : vector<192x64xf32>
    %27 = arith.truncf %26 : vector<192x64xf32> to vector<192x64xbf16>
    %28 = vector.shape_cast %27 : vector<192x64xbf16> to vector<12x16x64xbf16>
    %c2_i32 = arith.constant 2 : i32
    %29 = arith.subi %1, %c2_i32 : i32
    %30 = tpu.iota {dimensions = array<i32: 0>} : vector<12x1x1xi32>
    %31 = vector.broadcast %29 : i32 to vector<12x1x1xi32>
    %32 = arith.addi %31, %30 : vector<12x1x1xi32>
    %c0_i32 = arith.constant 0 : i32
    %33 = vector.broadcast %c0_i32 : i32 to vector<12x1x1xi32>
    %34 = arith.cmpi sge, %32, %33 : vector<12x1x1xi32>
    %c16_i32 = arith.constant 16 : i32
    %35 = vector.broadcast %c16_i32 : i32 to vector<12x1x1xi32>
    %36 = arith.cmpi slt, %32, %35 : vector<12x1x1xi32>
    %37 = arith.andi %34, %36 : vector<12x1x1xi1>
    %cst_8 = arith.constant 0.000000e+00 : bf16
    %38 = vector.broadcast %cst_8 : bf16 to vector<12x16x64xbf16>
    %39 = vector.shape_cast %37 : vector<12x1x1xi1> to vector<12x1x1xi1>
    %40 = vector.broadcast %39 : vector<12x1x1xi1> to vector<12x16x64xi1>
    %41 = arith.select %40, %28, %38 : vector<12x16x64xi1>, vector<12x16x64xbf16>
    %cst_9 = arith.constant 0.000000e+00 : bf16
    %42 = vector.broadcast %cst_9 : bf16 to vector<12x1x64xbf16>
    %43 = tpu.concatenate %42, %41, %42 in 1 : vector<12x1x64xbf16>, vector<12x16x64xbf16>, vector<12x1x64xbf16> -> vector<12x18x64xbf16>
    %44 = vector.extract_strided_slice %43 {offsets = [0, 0, 0], sizes = [10, 16, 64], strides = [1, 1, 1]} : vector<12x18x64xbf16> to vector<10x16x64xbf16>
    %45 = vector.extract_strided_slice %43 {offsets = [0, 1, 0], sizes = [10, 16, 64], strides = [1, 1, 1]} : vector<12x18x64xbf16> to vector<10x16x64xbf16>
    %46 = vector.extract_strided_slice %43 {offsets = [0, 2, 0], sizes = [10, 16, 64], strides = [1, 1, 1]} : vector<12x18x64xbf16> to vector<10x16x64xbf16>
    %47 = vector.extract_strided_slice %43 {offsets = [1, 0, 0], sizes = [10, 16, 64], strides = [1, 1, 1]} : vector<12x18x64xbf16> to vector<10x16x64xbf16>
    %48 = vector.extract_strided_slice %43 {offsets = [1, 1, 0], sizes = [10, 16, 64], strides = [1, 1, 1]} : vector<12x18x64xbf16> to vector<10x16x64xbf16>
    %49 = vector.extract_strided_slice %43 {offsets = [1, 2, 0], sizes = [10, 16, 64], strides = [1, 1, 1]} : vector<12x18x64xbf16> to vector<10x16x64xbf16>
    %50 = vector.extract_strided_slice %43 {offsets = [2, 0, 0], sizes = [10, 16, 64], strides = [1, 1, 1]} : vector<12x18x64xbf16> to vector<10x16x64xbf16>
    %51 = vector.extract_strided_slice %43 {offsets = [2, 1, 0], sizes = [10, 16, 64], strides = [1, 1, 1]} : vector<12x18x64xbf16> to vector<10x16x64xbf16>
    %52 = vector.extract_strided_slice %43 {offsets = [2, 2, 0], sizes = [10, 16, 64], strides = [1, 1, 1]} : vector<12x18x64xbf16> to vector<10x16x64xbf16>
    %53 = tpu.concatenate %44, %45, %46, %47, %48, %49, %50, %51, %52 in 2 : vector<10x16x64xbf16>, vector<10x16x64xbf16>, vector<10x16x64xbf16>, vector<10x16x64xbf16>, vector<10x16x64xbf16>, vector<10x16x64xbf16>, vector<10x16x64xbf16>, vector<10x16x64xbf16>, vector<10x16x64xbf16> -> vector<10x16x576xbf16>
    %54 = vector.shape_cast %53 : vector<10x16x576xbf16> to vector<160x576xbf16>
    %c0_10 = arith.constant 0 : index
    %c0_11 = arith.constant 0 : index
    %55 = vector.load %arg5[%c0_10, %c0_11] : memref<576x64xbf16, #tpu.memory_space<vmem>>, vector<576x64xbf16>
    %cst_12 = arith.constant dense<0.000000e+00> : vector<160x64xf32>
    %56 = tpu.matmul %54, %55, %cst_12 {dimension_numbers = #tpu.dot_dimension_numbers<[1], [0], [0], [1], [0, 0, 1, 1], [], []>} : vector<160x576xbf16>, vector<576x64xbf16>, vector<160x64xf32> -> vector<160x64xf32>
    %c0_13 = arith.constant 0 : index
    %c0_14 = arith.constant 0 : index
    %57 = vector.load %arg6[%c0_13, %c0_14] : memref<1x64xf32, #tpu.memory_space<vmem>>, vector<1x64xf32>
    %58 = vector.shape_cast %57 : vector<1x64xf32> to vector<64xf32>
    %59 = vector.shape_cast %58 : vector<64xf32> to vector<1x64xf32>
    %60 = vector.broadcast %59 : vector<1x64xf32> to vector<160x64xf32>
    %61 = arith.addf %56, %60 : vector<160x64xf32>
    %cst_15 = arith.constant 0.000000e+00 : f32
    %62 = vector.broadcast %cst_15 : f32 to vector<160x64xf32>
    %63 = arith.maximumf %61, %62 : vector<160x64xf32>
    %64 = arith.truncf %63 : vector<160x64xf32> to vector<160x64xbf16>
    %65 = vector.shape_cast %64 : vector<160x64xbf16> to vector<10x16x64xbf16>
    %c1_i32 = arith.constant 1 : i32
    %66 = arith.subi %1, %c1_i32 : i32
    %67 = tpu.iota {dimensions = array<i32: 0>} : vector<10x1x1xi32>
    %68 = vector.broadcast %66 : i32 to vector<10x1x1xi32>
    %69 = arith.addi %68, %67 : vector<10x1x1xi32>
    %c0_i32_16 = arith.constant 0 : i32
    %70 = vector.broadcast %c0_i32_16 : i32 to vector<10x1x1xi32>
    %71 = arith.cmpi sge, %69, %70 : vector<10x1x1xi32>
    %c16_i32_17 = arith.constant 16 : i32
    %72 = vector.broadcast %c16_i32_17 : i32 to vector<10x1x1xi32>
    %73 = arith.cmpi slt, %69, %72 : vector<10x1x1xi32>
    %74 = arith.andi %71, %73 : vector<10x1x1xi1>
    %cst_18 = arith.constant 0.000000e+00 : bf16
    %75 = vector.broadcast %cst_18 : bf16 to vector<10x16x64xbf16>
    %76 = vector.shape_cast %74 : vector<10x1x1xi1> to vector<10x1x1xi1>
    %77 = vector.broadcast %76 : vector<10x1x1xi1> to vector<10x16x64xi1>
    %78 = arith.select %77, %65, %75 : vector<10x16x64xi1>, vector<10x16x64xbf16>
    %cst_19 = arith.constant 0.000000e+00 : bf16
    %79 = vector.broadcast %cst_19 : bf16 to vector<10x1x64xbf16>
    %80 = tpu.concatenate %79, %78, %79 in 1 : vector<10x1x64xbf16>, vector<10x16x64xbf16>, vector<10x1x64xbf16> -> vector<10x18x64xbf16>
    %81 = vector.extract_strided_slice %80 {offsets = [0, 0, 0], sizes = [8, 16, 64], strides = [1, 1, 1]} : vector<10x18x64xbf16> to vector<8x16x64xbf16>
    %82 = vector.extract_strided_slice %80 {offsets = [0, 1, 0], sizes = [8, 16, 64], strides = [1, 1, 1]} : vector<10x18x64xbf16> to vector<8x16x64xbf16>
    %83 = vector.extract_strided_slice %80 {offsets = [0, 2, 0], sizes = [8, 16, 64], strides = [1, 1, 1]} : vector<10x18x64xbf16> to vector<8x16x64xbf16>
    %84 = vector.extract_strided_slice %80 {offsets = [1, 0, 0], sizes = [8, 16, 64], strides = [1, 1, 1]} : vector<10x18x64xbf16> to vector<8x16x64xbf16>
    %85 = vector.extract_strided_slice %80 {offsets = [1, 1, 0], sizes = [8, 16, 64], strides = [1, 1, 1]} : vector<10x18x64xbf16> to vector<8x16x64xbf16>
    %86 = vector.extract_strided_slice %80 {offsets = [1, 2, 0], sizes = [8, 16, 64], strides = [1, 1, 1]} : vector<10x18x64xbf16> to vector<8x16x64xbf16>
    %87 = vector.extract_strided_slice %80 {offsets = [2, 0, 0], sizes = [8, 16, 64], strides = [1, 1, 1]} : vector<10x18x64xbf16> to vector<8x16x64xbf16>
    %88 = vector.extract_strided_slice %80 {offsets = [2, 1, 0], sizes = [8, 16, 64], strides = [1, 1, 1]} : vector<10x18x64xbf16> to vector<8x16x64xbf16>
    %89 = vector.extract_strided_slice %80 {offsets = [2, 2, 0], sizes = [8, 16, 64], strides = [1, 1, 1]} : vector<10x18x64xbf16> to vector<8x16x64xbf16>
    %90 = tpu.concatenate %81, %82, %83, %84, %85, %86, %87, %88, %89 in 2 : vector<8x16x64xbf16>, vector<8x16x64xbf16>, vector<8x16x64xbf16>, vector<8x16x64xbf16>, vector<8x16x64xbf16>, vector<8x16x64xbf16>, vector<8x16x64xbf16>, vector<8x16x64xbf16>, vector<8x16x64xbf16> -> vector<8x16x576xbf16>
    %91 = vector.shape_cast %90 : vector<8x16x576xbf16> to vector<128x576xbf16>
    %c0_20 = arith.constant 0 : index
    %c0_21 = arith.constant 0 : index
    %92 = vector.load %arg7[%c0_20, %c0_21] : memref<576x64xbf16, #tpu.memory_space<vmem>>, vector<576x64xbf16>
    %cst_22 = arith.constant dense<0.000000e+00> : vector<128x64xf32>
    %93 = tpu.matmul %91, %92, %cst_22 {dimension_numbers = #tpu.dot_dimension_numbers<[1], [0], [0], [1], [0, 0, 1, 1], [], []>} : vector<128x576xbf16>, vector<576x64xbf16>, vector<128x64xf32> -> vector<128x64xf32>
    %c0_23 = arith.constant 0 : index
    %c0_24 = arith.constant 0 : index
    %94 = vector.load %arg8[%c0_23, %c0_24] : memref<1x64xf32, #tpu.memory_space<vmem>>, vector<1x64xf32>
    %95 = vector.shape_cast %94 : vector<1x64xf32> to vector<64xf32>
    %96 = vector.shape_cast %95 : vector<64xf32> to vector<1x64xf32>
    %97 = vector.broadcast %96 : vector<1x64xf32> to vector<128x64xf32>
    %98 = arith.addf %93, %97 : vector<128x64xf32>
    %cst_25 = arith.constant 0.000000e+00 : f32
    %99 = vector.broadcast %cst_25 : f32 to vector<128x64xf32>
    %100 = arith.maximumf %98, %99 : vector<128x64xf32>
    %101 = vector.shape_cast %100 : vector<128x64xf32> to vector<8x16x64xf32>
    %102 = vector.shape_cast %101 : vector<8x16x64xf32> to vector<128x64xf32>
    %103 = tpu.transpose %102, [1, 0] : vector<128x64xf32> -> vector<64x128xf32>
    %104 = arith.truncf %103 : vector<64x128xf32> to vector<64x128xbf16>
    %c0_26 = arith.constant 0 : index
    %c0_27 = arith.constant 0 : index
    %105 = vector.load %arg9[%c0_26, %c0_27] : memref<22x64xbf16, #tpu.memory_space<vmem>>, vector<22x64xbf16>
    %cst_28 = arith.constant dense<0.000000e+00> : vector<22x128xf32>
    %106 = tpu.matmul %105, %104, %cst_28 {dimension_numbers = #tpu.dot_dimension_numbers<[1], [0], [0], [1], [0, 0, 1, 1], [], []>} : vector<22x64xbf16>, vector<64x128xbf16>, vector<22x128xf32> -> vector<22x128xf32>
    %c0_29 = arith.constant 0 : index
    %c0_30 = arith.constant 0 : index
    %107 = vector.load %arg10[%c0_29, %c0_30] : memref<22x1xf32, #tpu.memory_space<vmem>>, vector<22x1xf32>
    %108 = vector.broadcast %107 : vector<22x1xf32> to vector<22x128xf32>
    %109 = arith.addf %106, %108 : vector<22x128xf32>
    %c0_31 = arith.constant 0 : index
    %c0_32 = arith.constant 0 : index
    %c0_33 = arith.constant 0 : index
    %110 = vector.load %arg11[%c0_31, %c0_32, %c0_33] : memref<1x22x128xf32, #tpu.memory_space<vmem>>, vector<1x22x128xf32>
    %111 = vector.shape_cast %110 : vector<1x22x128xf32> to vector<22x128xf32>
    %112 = vector.shape_cast %109 : vector<22x128xf32> to vector<1x22x128xf32>
    tpu.vector_store %arg11[%c0_31, %c0_32, %c0_33], %112 {strides = array<i32>} : memref<1x22x128xf32, #tpu.memory_space<vmem>>, vector<1x22x128xf32>,
    return
  }
  func.func @transform_0(%arg0: i32, %arg1: i32) -> (i32, i32, i32, i32) {
    %c0_i32 = arith.constant 0 : i32
    %c0_i32_0 = arith.constant 0 : i32
    %c0_i32_1 = arith.constant 0 : i32
    %c0_i32_2 = arith.constant 0 : i32
    return %arg0, %c0_i32, %c0_i32_0, %c0_i32_1 : i32, i32, i32, i32
  }
  func.func @transform_1(%arg0: i32, %arg1: i32) -> (i32, i32) {
    %c0_i32 = arith.constant 0 : i32
    %c0_i32_0 = arith.constant 0 : i32
    %c0_i32_1 = arith.constant 0 : i32
    return %c0_i32, %c0_i32_0 : i32, i32
  }
  func.func @transform_2(%arg0: i32, %arg1: i32) -> (i32, i32) {
    %c0_i32 = arith.constant 0 : i32
    %c0_i32_0 = arith.constant 0 : i32
    %c0_i32_1 = arith.constant 0 : i32
    return %c0_i32, %c0_i32_0 : i32, i32
  }
  func.func @transform_3(%arg0: i32, %arg1: i32) -> (i32, i32) {
    %c0_i32 = arith.constant 0 : i32
    %c0_i32_0 = arith.constant 0 : i32
    %c0_i32_1 = arith.constant 0 : i32
    return %c0_i32, %c0_i32_0 : i32, i32
  }
  func.func @transform_4(%arg0: i32, %arg1: i32) -> (i32, i32) {
    %c0_i32 = arith.constant 0 : i32
    %c0_i32_0 = arith.constant 0 : i32
    %c0_i32_1 = arith.constant 0 : i32
    return %c0_i32, %c0_i32_0 : i32, i32
  }
  func.func @transform_5(%arg0: i32, %arg1: i32) -> (i32, i32) {
    %c0_i32 = arith.constant 0 : i32
    %c0_i32_0 = arith.constant 0 : i32
    %c0_i32_1 = arith.constant 0 : i32
    return %c0_i32, %c0_i32_0 : i32, i32
  }
  func.func @transform_6(%arg0: i32, %arg1: i32) -> (i32, i32) {
    %c0_i32 = arith.constant 0 : i32
    %c0_i32_0 = arith.constant 0 : i32
    %c0_i32_1 = arith.constant 0 : i32
    return %c0_i32, %c0_i32_0 : i32, i32
  }
  func.func @transform_7(%arg0: i32, %arg1: i32) -> (i32, i32) {
    %c0_i32 = arith.constant 0 : i32
    %c0_i32_0 = arith.constant 0 : i32
    %c0_i32_1 = arith.constant 0 : i32
    return %c0_i32, %c0_i32_0 : i32, i32
  }
  func.func @transform_8(%arg0: i32, %arg1: i32) -> (i32, i32) {
    %c0_i32 = arith.constant 0 : i32
    %c0_i32_0 = arith.constant 0 : i32
    %c0_i32_1 = arith.constant 0 : i32
    return %c0_i32, %c0_i32_0 : i32, i32
  }
  func.func @transform_9(%arg0: i32, %arg1: i32) -> (i32, i32, i32) {
    %c0_i32 = arith.constant 0 : i32
    %c0_i32_0 = arith.constant 0 : i32
    return %arg0, %c0_i32, %arg1 : i32, i32, i32
  }
}

</mosaic_0001>

<llo_original>
// kernel: small_object_head_forward.1
$region0: #{small_object_head_forward.1}
  #allocation0 [shape = 'u32[]', space=smem, size = 0x4, offset = 0x4, fixed_abs, tag = 'smem constant byte address 0x4 - core index']
  #allocation1 [shape = 'u32[144,128]{1,0:T(1,128)}', space=vmem, size = 0x12000, scoped, tag = 'internal scratch']
  %s0 = inlined_call_operand.vmem [shape: bf16[2,22,16,4], index: 0, kind: input, shape index: {}]
  %s1 = inlined_call_operand.vmem [shape: bf16[36,64], index: 1, kind: input, shape index: {}]
  %s2 = inlined_call_operand.vmem [shape: f32[1,64], index: 2, kind: input, shape index: {}]
  %s3 = inlined_call_operand.vmem [shape: bf16[576,64], index: 3, kind: input, shape index: {}]
  %s4 = inlined_call_operand.vmem [shape: f32[1,64], index: 4, kind: input, shape index: {}]
  %s5 = inlined_call_operand.vmem [shape: bf16[576,64], index: 5, kind: input, shape index: {}]
  %s6 = inlined_call_operand.vmem [shape: f32[1,64], index: 6, kind: input, shape index: {}]
  %s7 = inlined_call_operand.vmem [shape: bf16[22,64], index: 7, kind: input, shape index: {}]
  %s8 = inlined_call_operand.vmem [shape: f32[22,1], index: 8, kind: input, shape index: {}]
  %s9 = inlined_call_operand.vmem [shape: f32[2,22,256], index: 9, kind: output, shape index: {}]
  %s10 = sld [smem:[#allocation0]]
  $region103: #{small_object_head_forward.1} parent=0
    _
  %s12 = ssub.s32 1, %s10
  %s13 = scalar_select 0, %s12, %s10
  $region1: #{small_object_head_forward.1} parent=0
    #allocation2 [shape = 'u8[24576]{0}', space=vmem, size = 0x6000, scoped, tag = 'output window, operand 0']
    loop: start=0, step=1, limit=6
    $region2: #{small_object_head_forward.1} parent=1 // loop_pre_header
      _
    $region3: #{small_object_head_forward.1} parent=1 // loop_header
      %s15 = sphi 0, %s19
      %p16 = scmp.ge.s32.totalorder %s15, 6
      %s22 = sphi 0, %s34
      %s23 = sphi 0, %s30
      %s24 = sphi 0, %s22
      %s25 = sphi 0, %s23
      %s26 = sphi 0, %s24
      %s27 = sphi 0, %s25
      %s37 = sphi 0, %s39
      %s40 = sphi 0, %s37
      %s41 = sphi 0, %s40
      %s57 = sphi 0, %s41
      %s61 = sphi 0, %s61
      %s63 = sphi 0, %s61
      %s64 = sphi 0, %s63
      %s78 = sphi 0, %s64
      %s82 = sphi 0, %s82
      %s84 = sphi 0, %s82
      %s85 = sphi 0, %s84
      %s99 = sphi 0, %s85
      %s103 = sphi 0, %s103
      %s105 = sphi 0, %s103
      %s106 = sphi 0, %s105
      %s120 = sphi 0, %s106
      %s124 = sphi 0, %s124
      %s126 = sphi 0, %s124
      %s127 = sphi 0, %s126
      %s141 = sphi 0, %s127
      %s145 = sphi 0, %s145
      %s147 = sphi 0, %s145
      %s148 = sphi 0, %s147
      %s162 = sphi 0, %s148
      %s166 = sphi 0, %s166
      %s168 = sphi 0, %s166
      %s169 = sphi 0, %s168
      %s183 = sphi 0, %s169
      %s187 = sphi 0, %s187
      %s189 = sphi 0, %s187
      %s190 = sphi 0, %s189
      %s204 = sphi 0, %s190
      %s208 = sphi 0, %s208
      %s210 = sphi 0, %s208
      %s211 = sphi 0, %s210
      %s225 = sphi 0, %s211
      %s233 = sphi 0, %s235
      %s236 = sphi 0, %s233
      %s237 = sphi 0, %s236
      %s253 = sphi 0, %s237
    $region4: #{small_object_head_forward.1} parent=1 // loop_header_branch
      %18 = sbr.rel (%p16) target = $region8
    $region5: #{small_object_head_forward.1} parent=1 // loop_body
      %s20 = ssub.s32 %s15, 1
      %s21 = ssub.s32 %s15, 2
      %s28 = sadd.s32 1, %s23
      %p29 = scmp.ge.s32.totalorder %s28, 2
      %s30 = scalar_select %p29, 0, %s28
      %s31 = sadd.s32 1, %s22
      %s32 = scalar_select %p29, %s31, %s22
      %p33 = scmp.ge.s32.totalorder %s32, 2
      %s34 = scalar_select %p33, 0, %s32
      %s35 = ssub.s32 %s22, %s34
      %p36 = scmp.eq.s32.totalorder %s35, 0
      %s38 = sadd.s32 %s37, 1
      %s39 = scalar_select %p36, %s37, %s38
      %p42 = pneg %p36
      %p43 = scmp.eq.s32.totalorder %s15, 3
      %p44 = por %p42, %p43
      %p45 = scmp.ne.s32.totalorder %s37, %s40
      %p46 = scmp.eq.s32.totalorder %s15, 0
      %p47 = por %p45, %p46
      %p48 = scmp.ne.s32.totalorder %s37, %s40
      %p49 = scmp.eq.s32.totalorder %s20, 3
      %p50 = por %p48, %p49
      %p51 = scmp.ne.s32.totalorder %s40, %s41
      %p52 = scmp.eq.s32.totalorder %s20, 0
      %p53 = por %p51, %p52
      %p54 = scmp.ne.s32.totalorder %s40, %s41
      %p55 = scmp.eq.s32.totalorder %s21, 3
      %p56 = por %p54, %p55
      %p58 = scmp.ne.s32.totalorder %s41, %s57
      %p59 = scmp.eq.s32.totalorder %s21, 0
      %p60 = por %p58, %p59
      %s62 = sadd.s32 %s61, 1
      %p65 = scmp.eq.s32.totalorder %s15, 3
      %p66 = scmp.ne.s32.totalorder %s61, %s63
      %p67 = scmp.eq.s32.totalorder %s15, 0
      %p68 = por %p66, %p67
      %p69 = scmp.ne.s32.totalorder %s61, %s63
      %p70 = scmp.eq.s32.totalorder %s20, 3
      %p71 = por %p69, %p70
      %p72 = scmp.ne.s32.totalorder %s63, %s64
      %p73 = scmp.eq.s32.totalorder %s20, 0
      %p74 = por %p72, %p73
      %p75 = scmp.ne.s32.totalorder %s63, %s64
      %p76 = scmp.eq.s32.totalorder %s21, 3
      %p77 = por %p75, %p76
      %p79 = scmp.ne.s32.totalorder %s64, %s78
      %p80 = scmp.eq.s32.totalorder %s21, 0
      %p81 = por %p79, %p80
      %s83 = sadd.s32 %s82, 1
      %p86 = scmp.eq.s32.totalorder %s15, 3
      %p87 = scmp.ne.s32.totalorder %s82, %s84
      %p88 = scmp.eq.s32.totalorder %s15, 0
      %p89 = por %p87, %p88
      %p90 = scmp.ne.s32.totalorder %s82, %s84
      %p91 = scmp.eq.s32.totalorder %s20, 3
      %p92 = por %p90, %p91
      %p93 = scmp.ne.s32.totalorder %s84, %s85
      %p94 = scmp.eq.s32.totalorder %s20, 0
      %p95 = por %p93, %p94
      %p96 = scmp.ne.s32.totalorder %s84, %s85
      %p97 = scmp.eq.s32.totalorder %s21, 3
      %p98 = por %p96, %p97
      %p100 = scmp.ne.s32.totalorder %s85, %s99
      %p101 = scmp.eq.s32.totalorder %s21, 0
      %p102 = por %p100, %p101
      %s104 = sadd.s32 %s103, 1
      %p107 = scmp.eq.s32.totalorder %s15, 3
      %p108 = scmp.ne.s32.totalorder %s103, %s105
      %p109 = scmp.eq.s32.totalorder %s15, 0
      %p110 = por %p108, %p109
      %p111 = scmp.ne.s32.totalorder %s103, %s105
      %p112 = scmp.eq.s32.totalorder %s20, 3
      %p113 = por %p111, %p112
      %p114 = scmp.ne.s32.totalorder %s105, %s106
      %p115 = scmp.eq.s32.totalorder %s20, 0
      %p116 = por %p114, %p115
      %p117 = scmp.ne.s32.totalorder %s105, %s106
      %p118 = scmp.eq.s32.totalorder %s21, 3
      %p119 = por %p117, %p118
      %p121 = scmp.ne.s32.totalorder %s106, %s120
      %p122 = scmp.eq.s32.totalorder %s21, 0
      %p123 = por %p121, %p122
      %s125 = sadd.s32 %s124, 1
      %p128 = scmp.eq.s32.totalorder %s15, 3
      %p129 = scmp.ne.s32.totalorder %s124, %s126
      %p130 = scmp.eq.s32.totalorder %s15, 0
      %p131 = por %p129, %p130
      %p132 = scmp.ne.s32.totalorder %s124, %s126
      %p133 = scmp.eq.s32.totalorder %s20, 3
      %p134 = por %p132, %p133
      %p135 = scmp.ne.s32.totalorder %s126, %s127
      %p136 = scmp.eq.s32.totalorder %s20, 0
      %p137 = por %p135, %p136
      %p138 = scmp.ne.s32.totalorder %s126, %s127
      %p139 = scmp.eq.s32.totalorder %s21, 3
      %p140 = por %p138, %p139
      %p142 = scmp.ne.s32.totalorder %s127, %s141
      %p143 = scmp.eq.s32.totalorder %s21, 0
      %p144 = por %p142, %p143
      %s146 = sadd.s32 %s145, 1
      %p149 = scmp.eq.s32.totalorder %s15, 3
      %p150 = scmp.ne.s32.totalorder %s145, %s147
      %p151 = scmp.eq.s32.totalorder %s15, 0
      %p152 = por %p150, %p151
      %p153 = scmp.ne.s32.totalorder %s145, %s147
      %p154 = scmp.eq.s32.totalorder %s20, 3
      %p155 = por %p153, %p154
      %p156 = scmp.ne.s32.totalorder %s147, %s148
      %p157 = scmp.eq.s32.totalorder %s20, 0
      %p158 = por %p156, %p157
      %p159 = scmp.ne.s32.totalorder %s147, %s148
      %p160 = scmp.eq.s32.totalorder %s21, 3
      %p161 = por %p159, %p160
      %p163 = scmp.ne.s32.totalorder %s148, %s162
      %p164 = scmp.eq.s32.totalorder %s21, 0
      %p165 = por %p163, %p164
      %s167 = sadd.s32 %s166, 1
      %p170 = scmp.eq.s32.totalorder %s15, 3
      %p171 = scmp.ne.s32.totalorder %s166, %s168
      %p172 = scmp.eq.s32.totalorder %s15, 0
      %p173 = por %p171, %p172
      %p174 = scmp.ne.s32.totalorder %s166, %s168
      %p175 = scmp.eq.s32.totalorder %s20, 3
      %p176 = por %p174, %p175
      %p177 = scmp.ne.s32.totalorder %s168, %s169
      %p178 = scmp.eq.s32.totalorder %s20, 0
      %p179 = por %p177, %p178
      %p180 = scmp.ne.s32.totalorder %s168, %s169
      %p181 = scmp.eq.s32.totalorder %s21, 3
      %p182 = por %p180, %p181
      %p184 = scmp.ne.s32.totalorder %s169, %s183
      %p185 = scmp.eq.s32.totalorder %s21, 0
      %p186 = por %p184, %p185
      %s188 = sadd.s32 %s187, 1
      %p191 = scmp.eq.s32.totalorder %s15, 3
      %p192 = scmp.ne.s32.totalorder %s187, %s189
      %p193 = scmp.eq.s32.totalorder %s15, 0
      %p194 = por %p192, %p193
      %p195 = scmp.ne.s32.totalorder %s187, %s189
      %p196 = scmp.eq.s32.totalorder %s20, 3
      %p197 = por %p195, %p196
      %p198 = scmp.ne.s32.totalorder %s189, %s190
      %p199 = scmp.eq.s32.totalorder %s20, 0
      %p200 = por %p198, %p199
      %p201 = scmp.ne.s32.totalorder %s189, %s190
      %p202 = scmp.eq.s32.totalorder %s21, 3
      %p203 = por %p201, %p202
      %p205 = scmp.ne.s32.totalorder %s190, %s204
      %p206 = scmp.eq.s32.totalorder %s21, 0
      %p207 = por %p205, %p206
      %s209 = sadd.s32 %s208, 1
      %p212 = scmp.eq.s32.totalorder %s15, 3
      %p213 = scmp.ne.s32.totalorder %s208, %s210
      %p214 = scmp.eq.s32.totalorder %s15, 0
      %p215 = por %p213, %p214
      %p216 = scmp.ne.s32.totalorder %s208, %s210
      %p217 = scmp.eq.s32.totalorder %s20, 3
      %p218 = por %p216, %p217
      %p219 = scmp.ne.s32.totalorder %s210, %s211
      %p220 = scmp.eq.s32.totalorder %s20, 0
      %p221 = por %p219, %p220
      %p222 = scmp.ne.s32.totalorder %s210, %s211
      %p223 = scmp.eq.s32.totalorder %s21, 3
      %p224 = por %p222, %p223
      %p226 = scmp.ne.s32.totalorder %s211, %s225
      %p227 = scmp.eq.s32.totalorder %s21, 0
      %p228 = por %p226, %p227
      %s229 = ssub.s32 %s22, %s34
      %s230 = ssub.s32 %s23, %s30
      %s231 = sor.u32 %s229, %s230
      %p232 = scmp.eq.s32.totalorder %s231, 0
      %s234 = sadd.s32 %s233, 1
      %s235 = scalar_select %p232, %s233, %s234
      %p238 = pneg %p232
      %p239 = scmp.eq.s32.totalorder %s15, 3
      %p240 = por %p238, %p239
      %p241 = scmp.ne.s32.totalorder %s233, %s236
      %p242 = scmp.eq.s32.totalorder %s15, 0
      %p243 = por %p241, %p242
      %p244 = scmp.ne.s32.totalorder %s233, %s236
      %p245 = scmp.eq.s32.totalorder %s20, 3
      %p246 = por %p244, %p245
      %p247 = scmp.ne.s32.totalorder %s236, %s237
      %p248 = scmp.eq.s32.totalorder %s20, 0
      %p249 = por %p247, %p248
      %p250 = scmp.ne.s32.totalorder %s236, %s237
      %p251 = scmp.eq.s32.totalorder %s21, 3
      %p252 = por %p250, %p251
      %p254 = scmp.ne.s32.totalorder %s237, %s253
      %p255 = scmp.eq.s32.totalorder %s21, 0
      %p256 = por %p254, %p255
      %p257 = scmp.le.s32.totalorder 1, %s15
      %p258 = scmp.lt.s32.totalorder %s15, 5
      %p259 = pnand %p257, %p258
      %p260 = pneg %p259
      // Predicated region
      $region9: #{small_object_head_forward.1} parent=5 // pred_check
        _
      $region10: #{small_object_head_forward.1} parent=5 // pred_check_branch
        %262 = sbr.rel (%p259) target = $region12
      $region11: #{small_object_head_forward.1} parent=5 // pred_region
        %s263 = ssub.s32 %s15, 1
        // Predicated region
        $region13: #{small_object_head_forward.1} parent=11 // pred_check
          %p264 = pneg %p74
        $region14: #{small_object_head_forward.1} parent=11 // pred_check_branch
          %266 = sbr.rel (%p264) target = $region16
        $region15: #{small_object_head_forward.1} parent=11 // pred_region
          _
        $region16: #{small_object_head_forward.1} parent=11 // pred_fallthru
          _
        // Predicated region
        $region17: #{small_object_head_forward.1} parent=11 // pred_check
          %p267 = pneg %p95
        $region18: #{small_object_head_forward.1} parent=11 // pred_check_branch
          %269 = sbr.rel (%p267) target = $region20
        $region19: #{small_object_head_forward.1} parent=11 // pred_region
          _
        $region20: #{small_object_head_forward.1} parent=11 // pred_fallthru
          _
        // Predicated region
        $region21: #{small_object_head_forward.1} parent=11 // pred_check
          %p270 = pneg %p116
        $region22: #{small_object_head_forward.1} parent=11 // pred_check_branch
          %272 = sbr.rel (%p270) target = $region24
        $region23: #{small_object_head_forward.1} parent=11 // pred_region
          _
        $region24: #{small_object_head_forward.1} parent=11 // pred_fallthru
          _
        // Predicated region
        $region25: #{small_object_head_forward.1} parent=11 // pred_check
          %p273 = pneg %p137
        $region26: #{small_object_head_forward.1} parent=11 // pred_check_branch
          %275 = sbr.rel (%p273) target = $region28
        $region27: #{small_object_head_forward.1} parent=11 // pred_region
          _
        $region28: #{small_object_head_forward.1} parent=11 // pred_fallthru
          _
        // Predicated region
        $region29: #{small_object_head_forward.1} parent=11 // pred_check
          %p276 = pneg %p158
        $region30: #{small_object_head_forward.1} parent=11 // pred_check_branch
          %278 = sbr.rel (%p276) target = $region32
        $region31: #{small_object_head_forward.1} parent=11 // pred_region
          _
        $region32: #{small_object_head_forward.1} parent=11 // pred_fallthru
          _
        // Predicated region
        $region33: #{small_object_head_forward.1} parent=11 // pred_check
          %p279 = pneg %p179
        $region34: #{small_object_head_forward.1} parent=11 // pred_check_branch
          %281 = sbr.rel (%p279) target = $region36
        $region35: #{small_object_head_forward.1} parent=11 // pred_region
          _
        $region36: #{small_object_head_forward.1} parent=11 // pred_fallthru
          _
        // Predicated region
        $region37: #{small_object_head_forward.1} parent=11 // pred_check
          %p282 = pneg %p200
        $region38: #{small_object_head_forward.1} parent=11 // pred_check_branch
          %284 = sbr.rel (%p282) target = $region40
        $region39: #{small_object_head_forward.1} parent=11 // pred_region
          _
        $region40: #{small_object_head_forward.1} parent=11 // pred_fallthru
          _
        // Predicated region
        $region41: #{small_object_head_forward.1} parent=11 // pred_check
          %p285 = pneg %p221
        $region42: #{small_object_head_forward.1} parent=11 // pred_check_branch
          %287 = sbr.rel (%p285) target = $region44
        $region43: #{small_object_head_forward.1} parent=11 // pred_region
          _
        $region44: #{small_object_head_forward.1} parent=11 // pred_fallthru
          _
      $region12: #{small_object_head_forward.1} parent=5 // pred_fallthru
        _
      %p288 = scmp.lt.s32.totalorder %s15, 4
      // Predicated region
      $region45: #{small_object_head_forward.1} parent=5 // pred_check
        %p289 = pneg %p288
      $region46: #{small_object_head_forward.1} parent=5 // pred_check_branch
        %291 = sbr.rel (%p289) target = $region48
      $region47: #{small_object_head_forward.1} parent=5 // pred_region
        // Predicated region
        $region49: #{small_object_head_forward.1} parent=47 // pred_check
          %p292 = pneg %p47
        $region50: #{small_object_head_forward.1} parent=47 // pred_check_branch
          %294 = sbr.rel (%p292) target = $region52
        $region51: #{small_object_head_forward.1} parent=47 // pred_region
          %p295 = scmp.lt.s32.totalorder %s22, 1
          %s296 = scalar_select %p295, %s22, 1
          %s297 = smul.addr %s296, 44
          %s298 = smul.addr %s297, 4
          %s299 = scalar_lea.vmem %s0, %s298
        $region52: #{small_object_head_forward.1} parent=47 // pred_fallthru
          _
      $region48: #{small_object_head_forward.1} parent=5 // pred_fallthru
        _
      %p300 = scmp.le.s32.totalorder 1, %s15
      %p301 = scmp.lt.s32.totalorder %s15, 5
      %p302 = pnand %p300, %p301
      %p303 = pneg %p302
      // Predicated region
      $region53: #{small_object_head_forward.1} parent=5 // pred_check
        _
      $region54: #{small_object_head_forward.1} parent=5 // pred_check_branch
        %305 = sbr.rel (%p302) target = $region56
      $region55: #{small_object_head_forward.1} parent=5 // pred_region
        %s306 = ssub.s32 %s15, 1
        %p307 = scmp.lt.s32.totalorder %s24, 1
        %s308 = scalar_select %p307, %s24, 1
        %s309 = smul.addr %s308, 44
        %s310 = smul.addr %s309, 4
        %s311 = scalar_lea.vmem %s0, %s310
        %p312 = pneg %p53
        %p313 = pneg %p50
        %p314 = pneg %p74
        %p315 = pneg %p71
        %p316 = pneg %p95
        %p317 = pneg %p92
        %p318 = pneg %p116
        %p319 = pneg %p113
        %p320 = pneg %p137
        %p321 = pneg %p134
        %p322 = pneg %p158
        %p323 = pneg %p155
        %p324 = pneg %p179
        %p325 = pneg %p176
        %p326 = pneg %p200
        %p327 = pneg %p197
        %p328 = pneg %p221
        %p329 = pneg %p218
        %p330 = pneg %p249
        %p331 = pneg %p246
        %s332 = sand.u32 %s236, 1
        %s333 = sand.u32 %s236, 1
        %s334 = smul.addr %s333, 24
        %s335 = scalar_lea.vmem [#allocation2], %s334
        %p336 = scmp.lt.s32.totalorder %s24, 1
        %s337 = scalar_select %p336, %s24, 1
        %s338 = smul.addr %s337, 44
        %s339 = smul.addr %s338, 4
        %s340 = scalar_lea.vmem %s0, %s339
        %s342 = smul.u32 %s25, 8
        %s343 = smul.u32 %s342, 2
        %s344 = smul.addr %s343, 4
        %s345 = scalar_lea.vmem %s340, %s344
        %v346 = vld [vmem:[%s345] sm:$0xf]
        %v347 = vld [vmem:[%s345 + $0x4] sm:$0xf]
        %v348 = vld [vmem:[%s345 + $0x8] sm:$0xf]
        %v349 = vld [vmem:[%s345 + $0xc] sm:$0xf]
        %v350 = vld [vmem:[%s345 + $0x10] sm:$0xf]
        %v351 = vld [vmem:[%s345 + $0x14] sm:$0xf]
        %v352 = vld [vmem:[%s345 + $0x18] sm:$0xf]
        %v353 = vld [vmem:[%s345 + $0x1c] sm:$0xf]
        %v354 = vld [vmem:[%s345 + $0x20] sm:$0xf]
        %v355 = vld [vmem:[%s345 + $0x24] sm:$0xf]
        %v356 = vld [vmem:[%s345 + $0x28] sm:$0xf]
        %v357 = vld [vmem:[%s345 + $0x2c] sm:$0xf]
        %v358 = vld [vmem:[%s345 + $0x30] sm:$0xf]
        %v359 = vld [vmem:[%s345 + $0x34] sm:$0xf]
        %v360 = vld [vmem:[%s345 + $0x38] sm:$0xf]
        %v361 = vld [vmem:[%s345 + $0x3c] sm:$0xf]
        %v362 = vld [vmem:[%s345 + $0x40] sm:$0xf]
        %v363 = vld [vmem:[%s345 + $0x44] sm:$0xf]
        %v364 = vld [vmem:[%s345 + $0x48] sm:$0xf]
        %v365 = vld [vmem:[%s345 + $0x4c] sm:$0xf]
        %v366 = vld [vmem:[%s345 + $0x50] sm:$0xf]
        %v367 = vld [vmem:[%s345 + $0x54] sm:$0xf]
        %v368 = vld [vmem:[%s345 + $0x58] sm:$0xf]
        %v369 = vld [vmem:[%s345 + $0x5c] sm:$0xf]
        %v370 = vld [vmem:[%s345 + $0x60] sm:$0xf]
        %v371 = vld [vmem:[%s345 + $0x64] sm:$0xf]
        %v372 = vld [vmem:[%s345 + $0x68] sm:$0xf]
        %v373 = vld [vmem:[%s345 + $0x6c] sm:$0xf]
        %v402 = vunpack.c.l.b16 %v346
        %v403 = vunpack.c.l.b16 %v347
        %v404 = vunpack.c.l.b16 %v348
        %v405 = vunpack.c.l.b16 %v349
        %v406 = vunpack.c.l.b16 %v350
        %v407 = vunpack.c.l.b16 %v351
        %v408 = vunpack.c.l.b16 %v352
        %v409 = vunpack.c.l.b16 %v353
        %v410 = vunpack.c.l.b16 %v354
        %v411 = vunpack.c.l.b16 %v355
        %v412 = vunpack.c.l.b16 %v356
        %v413 = vunpack.c.l.b16 %v357
        %v414 = vunpack.c.l.b16 %v358
        %v415 = vunpack.c.l.b16 %v359
        %v416 = vunpack.c.l.b16 %v360
        %v417 = vunpack.c.l.b16 %v361
        %v418 = vunpack.c.l.b16 %v362
        %v419 = vunpack.c.l.b16 %v363
        %v420 = vunpack.c.l.b16 %v364
        %v421 = vunpack.c.l.b16 %v365
        %v422 = vunpack.c.l.b16 %v366
        %v423 = vunpack.c.l.b16 %v367
        %v424 = vunpack.c.l.b16 %v368
        %v425 = vunpack.c.l.b16 %v369
        %v426 = vunpack.c.l.b16 %v370
        %v427 = vunpack.c.l.b16 %v371
        %v428 = vunpack.c.l.b16 %v372
        %v429 = vunpack.c.l.b16 %v373
        %v430 = vpack.c.b16 %v403, %v402
        %v431 = vpack.c.b16 %v405, %v404
        %v432 = vpack.c.b16 %v407, %v406
        %v433 = vpack.c.b16 %v409, %v408
        %v434 = vpack.c.b16 %v411, %v410
        %v435 = vpack.c.b16 %v413, %v412
        %v436 = vpack.c.b16 %v415, %v414
        %v437 = vpack.c.b16 %v417, %v416
        %v438 = vpack.c.b16 %v419, %v418
        %v439 = vpack.c.b16 %v421, %v420
        %v440 = vpack.c.b16 %v423, %v422
        %v441 = vpack.c.b16 %v425, %v424
        %v442 = vpack.c.b16 %v427, %v426
        %v443 = vpack.c.b16 %v429, %v428
        %v445 = vshrl.u32 %v430, 16
        %v447 = vrot.slane %v445, 7
        %v448 = vshll.u32 %v430, 16
        %v450 = vor.u32 %v447, %v448
        %v452 = vshrl.u32 %v431, 16
        %v454 = vrot.slane %v452, 7
        %v455 = vshll.u32 %v431, 16
        %v457 = vor.u32 %v454, %v455
        %v459 = vshrl.u32 %v432, 16
        %v461 = vrot.slane %v459, 7
        %v462 = vshll.u32 %v432, 16
        %v464 = vor.u32 %v461, %v462
        %v466 = vshrl.u32 %v433, 16
        %v468 = vrot.slane %v466, 7
        %v469 = vshll.u32 %v433, 16
        %v471 = vor.u32 %v468, %v469
        %v473 = vshrl.u32 %v434, 16
        %v475 = vrot.slane %v473, 7
        %v476 = vshll.u32 %v434, 16
        %v478 = vor.u32 %v475, %v476
        %v480 = vshrl.u32 %v435, 16
        %v482 = vrot.slane %v480, 7
        %v483 = vshll.u32 %v435, 16
        %v485 = vor.u32 %v482, %v483
        %v487 = vshrl.u32 %v436, 16
        %v489 = vrot.slane %v487, 7
        %v490 = vshll.u32 %v436, 16
        %v492 = vor.u32 %v489, %v490
        %v494 = vshrl.u32 %v437, 16
        %v496 = vrot.slane %v494, 7
        %v497 = vshll.u32 %v437, 16
        %v499 = vor.u32 %v496, %v497
        %v501 = vshrl.u32 %v438, 16
        %v503 = vrot.slane %v501, 7
        %v504 = vshll.u32 %v438, 16
        %v506 = vor.u32 %v503, %v504
        %v508 = vshrl.u32 %v439, 16
        %v510 = vrot.slane %v508, 7
        %v511 = vshll.u32 %v439, 16
        %v513 = vor.u32 %v510, %v511
        %v515 = vshrl.u32 %v440, 16
        %v517 = vrot.slane %v515, 7
        %v518 = vshll.u32 %v440, 16
        %v520 = vor.u32 %v517, %v518
        %v522 = vshrl.u32 %v441, 16
        %v524 = vrot.slane %v522, 7
        %v525 = vshll.u32 %v441, 16
        %v527 = vor.u32 %v524, %v525
        %v529 = vshrl.u32 %v442, 16
        %v531 = vrot.slane %v529, 7
        %v532 = vshll.u32 %v442, 16
        %v534 = vor.u32 %v531, %v532
        %v536 = vshrl.u32 %v443, 16
        %v538 = vrot.slane %v536, 7
        %v539 = vshll.u32 %v443, 16
        %v541 = vor.u32 %v538, %v539
        %vm570 = vcmask 1040384
        %vm571 = vsmask.f32 256
        %vm572 = vmand %vm570, %vm571
        %v573 = vsel %vm572, 0, %v450
        %v574 = vsel %vm572, 0, %v457
        %v575 = vsel %vm572, 0, %v464
        %v576 = vsel %vm572, 0, %v471
        %v577 = vsel %vm572, 0, %v478
        %v578 = vsel %vm572, 0, %v485
        %v579 = vsel %vm572, 0, %v492
        %v580 = vsel %vm572, 0, %v499
        %v581 = vsel %vm572, 0, %v506
        %v582 = vsel %vm572, 0, %v513
        %v583 = vsel %vm572, 0, %v520
        %v584 = vsel %vm572, 0, %v527
        %v585 = vsel %vm572, 0, %v534
        %v586 = vsel %vm572, 0, %v541
        %v587 = vsel %vm572, %v447, 0
        %v588 = vsel %vm572, %v454, 0
        %v589 = vsel %vm572, %v461, 0
        %v590 = vsel %vm572, %v468, 0
        %v591 = vsel %vm572, %v475, 0
        %v592 = vsel %vm572, %v482, 0
        %v593 = vsel %vm572, %v489, 0
        %v594 = vsel %vm572, %v496, 0
        %v595 = vsel %vm572, %v503, 0
        %v596 = vsel %vm572, %v510, 0
        %v597 = vsel %vm572, %v517, 0
        %v598 = vsel %vm572, %v524, 0
        %v599 = vsel %vm572, %v531, 0
        %v600 = vsel %vm572, %v538, 0
        %vm601 = vsmask.f32 7424
        %v603 = vshrl.u32 %v573, 16
        %v605 = vshll.u32 %v573, 16
        %v607 = vrot.slane %v605, 1
        %v608 = vor.u32 %v603, %v607
        %v610 = vshll.u32 %v587, 16
        %v612 = vrot.slane %v610, 1
        %v613 = vsel %vm601, %v608, %v612
        %v615 = vshrl.u32 %v574, 16
        %v617 = vshll.u32 %v574, 16
        %v619 = vrot.slane %v617, 1
        %v620 = vor.u32 %v615, %v619
        %v622 = vshll.u32 %v588, 16
        %v624 = vrot.slane %v622, 1
        %v625 = vsel %vm601, %v620, %v624
        %v627 = vshrl.u32 %v575, 16
        %v629 = vshll.u32 %v575, 16
        %v631 = vrot.slane %v629, 1
        %v632 = vor.u32 %v627, %v631
        %v634 = vshll.u32 %v589, 16
        %v636 = vrot.slane %v634, 1
        %v637 = vsel %vm601, %v632, %v636
        %v639 = vshrl.u32 %v576, 16
        %v641 = vshll.u32 %v576, 16
        %v643 = vrot.slane %v641, 1
        %v644 = vor.u32 %v639, %v643
        %v646 = vshll.u32 %v590, 16
        %v648 = vrot.slane %v646, 1
        %v649 = vsel %vm601, %v644, %v648
        %v651 = vshrl.u32 %v577, 16
        %v653 = vshll.u32 %v577, 16
        %v655 = vrot.slane %v653, 1
        %v656 = vor.u32 %v651, %v655
        %v658 = vshll.u32 %v591, 16
        %v660 = vrot.slane %v658, 1
        %v661 = vsel %vm601, %v656, %v660
        %v663 = vshrl.u32 %v578, 16
        %v665 = vshll.u32 %v578, 16
        %v667 = vrot.slane %v665, 1
        %v668 = vor.u32 %v663, %v667
        %v670 = vshll.u32 %v592, 16
        %v672 = vrot.slane %v670, 1
        %v673 = vsel %vm601, %v668, %v672
        %v675 = vshrl.u32 %v579, 16
        %v677 = vshll.u32 %v579, 16
        %v679 = vrot.slane %v677, 1
        %v680 = vor.u32 %v675, %v679
        %v682 = vshll.u32 %v593, 16
        %v684 = vrot.slane %v682, 1
        %v685 = vsel %vm601, %v680, %v684
        %v687 = vshrl.u32 %v580, 16
        %v689 = vshll.u32 %v580, 16
        %v691 = vrot.slane %v689, 1
        %v692 = vor.u32 %v687, %v691
        %v694 = vshll.u32 %v594, 16
        %v696 = vrot.slane %v694, 1
        %v697 = vsel %vm601, %v692, %v696
        %v699 = vshrl.u32 %v581, 16
        %v701 = vshll.u32 %v581, 16
        %v703 = vrot.slane %v701, 1
        %v704 = vor.u32 %v699, %v703
        %v706 = vshll.u32 %v595, 16
        %v708 = vrot.slane %v706, 1
        %v709 = vsel %vm601, %v704, %v708
        %v711 = vshrl.u32 %v582, 16
        %v713 = vshll.u32 %v582, 16
        %v715 = vrot.slane %v713, 1
        %v716 = vor.u32 %v711, %v715
        %v718 = vshll.u32 %v596, 16
        %v720 = vrot.slane %v718, 1
        %v721 = vsel %vm601, %v716, %v720
        %v723 = vshrl.u32 %v583, 16
        %v725 = vshll.u32 %v583, 16
        %v727 = vrot.slane %v725, 1
        %v728 = vor.u32 %v723, %v727
        %v730 = vshll.u32 %v597, 16
        %v732 = vrot.slane %v730, 1
        %v733 = vsel %vm601, %v728, %v732
        %v735 = vshrl.u32 %v584, 16
        %v737 = vshll.u32 %v584, 16
        %v739 = vrot.slane %v737, 1
        %v740 = vor.u32 %v735, %v739
        %v742 = vshll.u32 %v598, 16
        %v744 = vrot.slane %v742, 1
        %v745 = vsel %vm601, %v740, %v744
        %746 = vrot.lane.b32.xlu0 %v613, 4
        %v747 = vpop.permute.xlu0 %746
        %748 = vrot.lane.b32.xlu0 %v625, 4
        %v749 = vpop.permute.xlu0 %748
        %750 = vrot.lane.b32.xlu0 %v637, 4
        %v751 = vpop.permute.xlu0 %750
        %752 = vrot.lane.b32.xlu0 %v649, 4
        %v753 = vpop.permute.xlu0 %752
        %754 = vrot.lane.b32.xlu0 %v661, 4
        %v755 = vpop.permute.xlu0 %754
        %756 = vrot.lane.b32.xlu0 %v673, 4
        %v757 = vpop.permute.xlu0 %756
        %758 = vrot.lane.b32.xlu0 %v685, 4
        %v759 = vpop.permute.xlu0 %758
        %760 = vrot.lane.b32.xlu0 %v697, 4
        %v761 = vpop.permute.xlu0 %760
        %762 = vrot.lane.b32.xlu0 %v709, 4
        %v763 = vpop.permute.xlu0 %762
        %764 = vrot.lane.b32.xlu0 %v721, 4
        %v765 = vpop.permute.xlu0 %764
        %766 = vrot.lane.b32.xlu0 %v733, 4
        %v767 = vpop.permute.xlu0 %766
        %768 = vrot.lane.b32.xlu0 %v745, 4
        %v769 = vpop.permute.xlu0 %768
        %vm794 = vcmask 1046528
        %v795 = vrot.slane %v573, 1
        %v796 = vrot.slane %v587, 1
        %v797 = vsel %vm794, %v795, %v796
        %v798 = vrot.slane %v574, 1
        %v799 = vrot.slane %v588, 1
        %v800 = vsel %vm794, %v798, %v799
        %v801 = vrot.slane %v575, 1
        %v802 = vrot.slane %v589, 1
        %v803 = vsel %vm794, %v801, %v802
        %v804 = vrot.slane %v576, 1
        %v805 = vrot.slane %v590, 1
        %v806 = vsel %vm794, %v804, %v805
        %v807 = vrot.slane %v577, 1
        %v808 = vrot.slane %v591, 1
        %v809 = vsel %vm794, %v807, %v808
        %v810 = vrot.slane %v578, 1
        %v811 = vrot.slane %v592, 1
        %v812 = vsel %vm794, %v810, %v811
        %v813 = vrot.slane %v579, 1
        %v814 = vrot.slane %v593, 1
        %v815 = vsel %vm794, %v813, %v814
        %v816 = vrot.slane %v580, 1
        %v817 = vrot.slane %v594, 1
        %v818 = vsel %vm794, %v816, %v817
        %v819 = vrot.slane %v581, 1
        %v820 = vrot.slane %v595, 1
        %v821 = vsel %vm794, %v819, %v820
        %v822 = vrot.slane %v582, 1
        %v823 = vrot.slane %v596, 1
        %v824 = vsel %vm794, %v822, %v823
        %v825 = vrot.slane %v583, 1
        %v826 = vrot.slane %v597, 1
        %v827 = vsel %vm794, %v825, %v826
        %v828 = vrot.slane %v584, 1
        %v829 = vrot.slane %v598, 1
        %v830 = vsel %vm794, %v828, %v829
        %831 = vrot.lane.b32.xlu0 %v797, 8
        %v832 = vpop.permute.xlu0 %831
        %833 = vrot.lane.b32.xlu0 %v800, 8
        %v834 = vpop.permute.xlu0 %833
        %835 = vrot.lane.b32.xlu0 %v803, 8
        %v836 = vpop.permute.xlu0 %835
        %837 = vrot.lane.b32.xlu0 %v806, 8
        %v838 = vpop.permute.xlu0 %837
        %839 = vrot.lane.b32.xlu0 %v809, 8
        %v840 = vpop.permute.xlu0 %839
        %841 = vrot.lane.b32.xlu0 %v812, 8
        %v842 = vpop.permute.xlu0 %841
        %843 = vrot.lane.b32.xlu0 %v815, 8
        %v844 = vpop.permute.xlu0 %843
        %845 = vrot.lane.b32.xlu0 %v818, 8
        %v846 = vpop.permute.xlu0 %845
        %847 = vrot.lane.b32.xlu0 %v821, 8
        %v848 = vpop.permute.xlu0 %847
        %849 = vrot.lane.b32.xlu0 %v824, 8
        %v850 = vpop.permute.xlu0 %849
        %851 = vrot.lane.b32.xlu0 %v827, 8
        %v852 = vpop.permute.xlu0 %851
        %853 = vrot.lane.b32.xlu0 %v830, 8
        %v854 = vpop.permute.xlu0 %853
        %856 = vrot.lane.b32.xlu0 %v574, 12
        %v857 = vpop.permute.xlu0 %856
        %858 = vrot.lane.b32.xlu0 %v575, 12
        %v859 = vpop.permute.xlu0 %858
        %860 = vrot.lane.b32.xlu0 %v576, 12
        %v861 = vpop.permute.xlu0 %860
        %862 = vrot.lane.b32.xlu0 %v577, 12
        %v863 = vpop.permute.xlu0 %862
        %864 = vrot.lane.b32.xlu0 %v578, 12
        %v865 = vpop.permute.xlu0 %864
        %866 = vrot.lane.b32.xlu0 %v579, 12
        %v867 = vpop.permute.xlu0 %866
        %868 = vrot.lane.b32.xlu0 %v580, 12
        %v869 = vpop.permute.xlu0 %868
        %870 = vrot.lane.b32.xlu0 %v581, 12
        %v871 = vpop.permute.xlu0 %870
        %872 = vrot.lane.b32.xlu0 %v582, 12
        %v873 = vpop.permute.xlu0 %872
        %874 = vrot.lane.b32.xlu0 %v583, 12
        %v875 = vpop.permute.xlu0 %874
        %876 = vrot.lane.b32.xlu0 %v584, 12
        %v877 = vpop.permute.xlu0 %876
        %878 = vrot.lane.b32.xlu0 %v585, 12
        %v879 = vpop.permute.xlu0 %878
        %v881 = vshrl.u32 %v585, 16
        %v883 = vshll.u32 %v585, 16
        %v885 = vrot.slane %v883, 1
        %v886 = vor.u32 %v881, %v885
        %v888 = vshll.u32 %v599, 16
        %v890 = vrot.slane %v888, 1
        %v891 = vsel %vm601, %v886, %v890
        %892 = vrot.lane.b32.xlu0 %v625, 16
        %v893 = vpop.permute.xlu0 %892
        %894 = vrot.lane.b32.xlu0 %v637, 16
        %v895 = vpop.permute.xlu0 %894
        %896 = vrot.lane.b32.xlu0 %v649, 16
        %v897 = vpop.permute.xlu0 %896
        %898 = vrot.lane.b32.xlu0 %v661, 16
        %v899 = vpop.permute.xlu0 %898
        %900 = vrot.lane.b32.xlu0 %v673, 16
        %v901 = vpop.permute.xlu0 %900
        %902 = vrot.lane.b32.xlu0 %v685, 16
        %v903 = vpop.permute.xlu0 %902
        %904 = vrot.lane.b32.xlu0 %v697, 16
        %v905 = vpop.permute.xlu0 %904
        %906 = vrot.lane.b32.xlu0 %v709, 16
        %v907 = vpop.permute.xlu0 %906
        %908 = vrot.lane.b32.xlu0 %v721, 16
        %v909 = vpop.permute.xlu0 %908
        %910 = vrot.lane.b32.xlu0 %v733, 16
        %v911 = vpop.permute.xlu0 %910
        %912 = vrot.lane.b32.xlu0 %v745, 16
        %v913 = vpop.permute.xlu0 %912
        %914 = vrot.lane.b32.xlu0 %v891, 16
        %v915 = vpop.permute.xlu0 %914
        %v917 = vrot.slane %v585, 1
        %v918 = vrot.slane %v599, 1
        %v919 = vsel %vm794, %v917, %v918
        %920 = vrot.lane.b32.xlu0 %v800, 20
        %v921 = vpop.permute.xlu0 %920
        %922 = vrot.lane.b32.xlu0 %v803, 20
        %v923 = vpop.permute.xlu0 %922
        %924 = vrot.lane.b32.xlu0 %v806, 20
        %v925 = vpop.permute.xlu0 %924
        %926 = vrot.lane.b32.xlu0 %v809, 20
        %v927 = vpop.permute.xlu0 %926
        %928 = vrot.lane.b32.xlu0 %v812, 20
        %v929 = vpop.permute.xlu0 %928
        %930 = vrot.lane.b32.xlu0 %v815, 20
        %v931 = vpop.permute.xlu0 %930
        %932 = vrot.lane.b32.xlu0 %v818, 20
        %v933 = vpop.permute.xlu0 %932
        %934 = vrot.lane.b32.xlu0 %v821, 20
        %v935 = vpop.permute.xlu0 %934
        %936 = vrot.lane.b32.xlu0 %v824, 20
        %v937 = vpop.permute.xlu0 %936
        %938 = vrot.lane.b32.xlu0 %v827, 20
        %v939 = vpop.permute.xlu0 %938
        %940 = vrot.lane.b32.xlu0 %v830, 20
        %v941 = vpop.permute.xlu0 %940
        %942 = vrot.lane.b32.xlu0 %v919, 20
        %v943 = vpop.permute.xlu0 %942
        %945 = vrot.lane.b32.xlu0 %v575, 24
        %v946 = vpop.permute.xlu0 %945
        %947 = vrot.lane.b32.xlu0 %v576, 24
        %v948 = vpop.permute.xlu0 %947
        %949 = vrot.lane.b32.xlu0 %v577, 24
        %v950 = vpop.permute.xlu0 %949
        %951 = vrot.lane.b32.xlu0 %v578, 24
        %v952 = vpop.permute.xlu0 %951
        %953 = vrot.lane.b32.xlu0 %v579, 24
        %v954 = vpop.permute.xlu0 %953
        %955 = vrot.lane.b32.xlu0 %v580, 24
        %v956 = vpop.permute.xlu0 %955
        %957 = vrot.lane.b32.xlu0 %v581, 24
        %v958 = vpop.permute.xlu0 %957
        %959 = vrot.lane.b32.xlu0 %v582, 24
        %v960 = vpop.permute.xlu0 %959
        %961 = vrot.lane.b32.xlu0 %v583, 24
        %v962 = vpop.permute.xlu0 %961
        %963 = vrot.lane.b32.xlu0 %v584, 24
        %v964 = vpop.permute.xlu0 %963
        %965 = vrot.lane.b32.xlu0 %v585, 24
        %v966 = vpop.permute.xlu0 %965
        %967 = vrot.lane.b32.xlu0 %v586, 24
        %v968 = vpop.permute.xlu0 %967
        %v970 = vshrl.u32 %v586, 16
        %v972 = vshll.u32 %v586, 16
        %v974 = vrot.slane %v972, 1
        %v975 = vor.u32 %v970, %v974
        %v977 = vshll.u32 %v600, 16
        %v979 = vrot.slane %v977, 1
        %v980 = vsel %vm601, %v975, %v979
        %981 = vrot.lane.b32.xlu0 %v637, 28
        %v982 = vpop.permute.xlu0 %981
        %983 = vrot.lane.b32.xlu0 %v649, 28
        %v984 = vpop.permute.xlu0 %983
        %985 = vrot.lane.b32.xlu0 %v661, 28
        %v986 = vpop.permute.xlu0 %985
        %987 = vrot.lane.b32.xlu0 %v673, 28
        %v988 = vpop.permute.xlu0 %987
        %989 = vrot.lane.b32.xlu0 %v685, 28
        %v990 = vpop.permute.xlu0 %989
        %991 = vrot.lane.b32.xlu0 %v697, 28
        %v992 = vpop.permute.xlu0 %991
        %993 = vrot.lane.b32.xlu0 %v709, 28
        %v994 = vpop.permute.xlu0 %993
        %995 = vrot.lane.b32.xlu0 %v721, 28
        %v996 = vpop.permute.xlu0 %995
        %997 = vrot.lane.b32.xlu0 %v733, 28
        %v998 = vpop.permute.xlu0 %997
        %999 = vrot.lane.b32.xlu0 %v745, 28
        %v1000 = vpop.permute.xlu0 %999
        %1001 = vrot.lane.b32.xlu0 %v891, 28
        %v1002 = vpop.permute.xlu0 %1001
        %1003 = vrot.lane.b32.xlu0 %v980, 28
        %v1004 = vpop.permute.xlu0 %1003
        %v1006 = vrot.slane %v586, 1
        %v1007 = vrot.slane %v600, 1
        %v1008 = vsel %vm794, %v1006, %v1007
        %1009 = vrot.lane.b32.xlu0 %v803, 32
        %v1010 = vpop.permute.xlu0 %1009
        %1011 = vrot.lane.b32.xlu0 %v806, 32
        %v1012 = vpop.permute.xlu0 %1011
        %1013 = vrot.lane.b32.xlu0 %v809, 32
        %v1014 = vpop.permute.xlu0 %1013
        %1015 = vrot.lane.b32.xlu0 %v812, 32
        %v1016 = vpop.permute.xlu0 %1015
        %1017 = vrot.lane.b32.xlu0 %v815, 32
        %v1018 = vpop.permute.xlu0 %1017
        %1019 = vrot.lane.b32.xlu0 %v818, 32
        %v1020 = vpop.permute.xlu0 %1019
        %1021 = vrot.lane.b32.xlu0 %v821, 32
        %v1022 = vpop.permute.xlu0 %1021
        %1023 = vrot.lane.b32.xlu0 %v824, 32
        %v1024 = vpop.permute.xlu0 %1023
        %1025 = vrot.lane.b32.xlu0 %v827, 32
        %v1026 = vpop.permute.xlu0 %1025
        %1027 = vrot.lane.b32.xlu0 %v830, 32
        %v1028 = vpop.permute.xlu0 %1027
        %1029 = vrot.lane.b32.xlu0 %v919, 32
        %v1030 = vpop.permute.xlu0 %1029
        %1031 = vrot.lane.b32.xlu0 %v1008, 32
        %v1032 = vpop.permute.xlu0 %1031
        %vm1033 = vcmask 31744
        %v1035 = vsel %vm1033, %v573, %v747
        %v1037 = vsel %vm1033, %v574, %v749
        %v1039 = vsel %vm1033, %v575, %v751
        %v1041 = vsel %vm1033, %v576, %v753
        %v1043 = vsel %vm1033, %v577, %v755
        %v1045 = vsel %vm1033, %v578, %v757
        %v1047 = vsel %vm1033, %v579, %v759
        %v1049 = vsel %vm1033, %v580, %v761
        %v1051 = vsel %vm1033, %v581, %v763
        %v1053 = vsel %vm1033, %v582, %v765
        %v1055 = vsel %vm1033, %v583, %v767
        %v1057 = vsel %vm1033, %v584, %v769
        %vm1058 = vcmask 64512
        %v1060 = vsel %vm1058, %v1035, %v832
        %v1062 = vsel %vm1058, %v1037, %v834
        %v1064 = vsel %vm1058, %v1039, %v836
        %v1066 = vsel %vm1058, %v1041, %v838
        %v1068 = vsel %vm1058, %v1043, %v840
        %v1070 = vsel %vm1058, %v1045, %v842
        %v1072 = vsel %vm1058, %v1047, %v844
        %v1074 = vsel %vm1058, %v1049, %v846
        %v1076 = vsel %vm1058, %v1051, %v848
        %v1078 = vsel %vm1058, %v1053, %v850
        %v1080 = vsel %vm1058, %v1055, %v852
        %v1082 = vsel %vm1058, %v1057, %v854
        %vm1083 = vcmask 97280
        %v1085 = vsel %vm1083, %v1060, %v857
        %v1087 = vsel %vm1083, %v1062, %v859
        %v1089 = vsel %vm1083, %v1064, %v861
        %v1091 = vsel %vm1083, %v1066, %v863
        %v1093 = vsel %vm1083, %v1068, %v865
        %v1095 = vsel %vm1083, %v1070, %v867
        %v1097 = vsel %vm1083, %v1072, %v869
        %v1099 = vsel %vm1083, %v1074, %v871
        %v1101 = vsel %vm1083, %v1076, %v873
        %v1103 = vsel %vm1083, %v1078, %v875
        %v1105 = vsel %vm1083, %v1080, %v877
        %v1107 = vsel %vm1083, %v1082, %v879
        %vm1108 = vcmask 130048
        %v1110 = vsel %vm1108, %v1085, %v893
        %v1112 = vsel %vm1108, %v1087, %v895
        %v1114 = vsel %vm1108, %v1089, %v897
        %v1116 = vsel %vm1108, %v1091, %v899
        %v1118 = vsel %vm1108, %v1093, %v901
        %v1120 = vsel %vm1108, %v1095, %v903
        %v1122 = vsel %vm1108, %v1097, %v905
        %v1124 = vsel %vm1108, %v1099, %v907
        %v1126 = vsel %vm1108, %v1101, %v909
        %v1128 = vsel %vm1108, %v1103, %v911
        %v1130 = vsel %vm1108, %v1105, %v913
        %v1132 = vsel %vm1108, %v1107, %v915
        %vm1133 = vcmask 162816
        %v1135 = vsel %vm1133, %v1110, %v921
        %v1137 = vsel %vm1133, %v1112, %v923
        %v1139 = vsel %vm1133, %v1114, %v925
        %v1141 = vsel %vm1133, %v1116, %v927
        %v1143 = vsel %vm1133, %v1118, %v929
        %v1145 = vsel %vm1133, %v1120, %v931
        %v1147 = vsel %vm1133, %v1122, %v933
        %v1149 = vsel %vm1133, %v1124, %v935
        %v1151 = vsel %vm1133, %v1126, %v937
        %v1153 = vsel %vm1133, %v1128, %v939
        %v1155 = vsel %vm1133, %v1130, %v941
        %v1157 = vsel %vm1133, %v1132, %v943
        %vm1158 = vcmask 195584
        %v1160 = vsel %vm1158, %v1135, %v946
        %v1162 = vsel %vm1158, %v1137, %v948
        %v1164 = vsel %vm1158, %v1139, %v950
        %v1166 = vsel %vm1158, %v1141, %v952
        %v1168 = vsel %vm1158, %v1143, %v954
        %v1170 = vsel %vm1158, %v1145, %v956
        %v1172 = vsel %vm1158, %v1147, %v958
        %v1174 = vsel %vm1158, %v1149, %v960
        %v1176 = vsel %vm1158, %v1151, %v962
        %v1178 = vsel %vm1158, %v1153, %v964
        %v1180 = vsel %vm1158, %v1155, %v966
        %v1182 = vsel %vm1158, %v1157, %v968
        %vm1183 = vcmask 228352
        %v1185 = vsel %vm1183, %v1160, %v982
        %v1187 = vsel %vm1183, %v1162, %v984
        %v1189 = vsel %vm1183, %v1164, %v986
        %v1191 = vsel %vm1183, %v1166, %v988
        %v1193 = vsel %vm1183, %v1168, %v990
        %v1195 = vsel %vm1183, %v1170, %v992
        %v1197 = vsel %vm1183, %v1172, %v994
        %v1199 = vsel %vm1183, %v1174, %v996
        %v1201 = vsel %vm1183, %v1176, %v998
        %v1203 = vsel %vm1183, %v1178, %v1000
        %v1205 = vsel %vm1183, %v1180, %v1002
        %v1207 = vsel %vm1183, %v1182, %v1004
        %vm1208 = vcmask 261120
        %v1210 = vsel %vm1208, %v1185, %v1010
        %v1212 = vsel %vm1208, %v1187, %v1012
        %v1214 = vsel %vm1208, %v1189, %v1014
        %v1216 = vsel %vm1208, %v1191, %v1016
        %v1218 = vsel %vm1208, %v1193, %v1018
        %v1220 = vsel %vm1208, %v1195, %v1020
        %v1222 = vsel %vm1208, %v1197, %v1022
        %v1224 = vsel %vm1208, %v1199, %v1024
        %v1226 = vsel %vm1208, %v1201, %v1026
        %v1228 = vsel %vm1208, %v1203, %v1028
        %v1230 = vsel %vm1208, %v1205, %v1030
        %v1232 = vsel %vm1208, %v1207, %v1032
        %v1233 = vld [vmem:[%s1] sm:$0xf]
        %v1234 = vld [vmem:[%s1 + $0x4] sm:$0xf]
        %v1235 = vld [vmem:[%s1 + $0x8] sm:$0xf]
        %v1236 = vld [vmem:[%s1 + $0xc] sm:$0xf]
        %v1237 = vld [vmem:[%s1 + $0x10] sm:$0x3]
        %v1238 = vld [vmem:[%s2] sm:$0x1]
        %v1240 = vlaneseq
        %v1241 = vshrl.u32 %v1240, 7
        %v1242 = vsub.s32 0, %v1241
        %v1243 = vrot.slane %v1238, %v1242
        %v1250 = vunpack.c.l.b16 %v1233
        %v1251 = vunpack.c.l.b16 %v1234
        %v1252 = vunpack.c.l.b16 %v1235
        %v1253 = vunpack.c.l.b16 %v1236
        %v1254 = vunpack.c.l.b16 %v1237
        %v1255 = vpack.c.b16 %v1251, %v1250
        %v1256 = vpack.c.b16 %v1253, %v1252
        %v1257 = vpack.c.b16 %v1254, %v1254
        %vm1260 = vcmask 293888
        %v1261 = vsel %vm1260, %v1210, 0
        %v1263 = vsel %vm1260, %v1212, 0
        %v1265 = vsel %vm1260, %v1214, 0
        %v1267 = vsel %vm1260, %v1216, 0
        %v1269 = vsel %vm1260, %v1218, 0
        %v1271 = vsel %vm1260, %v1220, 0
        %v1273 = vsel %vm1260, %v1222, 0
        %v1275 = vsel %vm1260, %v1224, 0
        %v1277 = vsel %vm1260, %v1226, 0
        %v1279 = vsel %vm1260, %v1228, 0
        %v1281 = vsel %vm1260, %v1230, 0
        %v1283 = vsel %vm1260, %v1232, 0
        %vm1285 = vcmask 1041408
        %v1287 = vsel %vm1285, %v1257, 0
        %1289 = vmatprep.subr.bf16.mxu0 0
        %1290 = vmatpush1.bf16.msra.mxu0 0
        %1291 = vmatprep.subr.bf16.mxu0 0
        %1292 = vmatpush1.bf16.msra.mxu0 0
        %1293 = vmatprep.subr.bf16.mxu0 0
        %1294 = vmatpush1.bf16.msra.mxu0 0
        %1295 = vmatprep.subr.bf16.mxu0 0
        %1296 = vmatpush1.bf16.msra.mxu0 0
        %1297 = vmatprep.subr.bf16.mxu0 0
        %1298 = vmatpush1.bf16.msra.mxu0 0
        %1299 = vmatprep.subr.bf16.mxu0 0
        %1300 = vmatpush1.bf16.msra.mxu0 %v1287
        %1301 = vmatprep.subr.bf16.mxu0 0
        %1302 = vmatpush1.bf16.msra.mxu0 %v1256
        %1303 = vmatprep.subr.bf16.mxu0 0
        %1304 = vmatpush1.bf16.msra.mxu0 %v1255
        %1305 = vmatprep.subr.bf16.mxu0 0
        %1306 = vmatpush2.bf16.msra.mxu0 0
        %1307 = vmatprep.subr.bf16.mxu0 0
        %1308 = vmatpush2.bf16.msra.mxu0 0
        %1309 = vmatprep.subr.bf16.mxu0 0
        %1310 = vmatpush2.bf16.msra.mxu0 0
        %1311 = vmatprep.subr.bf16.mxu0 0
        %1312 = vmatpush2.bf16.msra.mxu0 0
        %1313 = vmatprep.subr.bf16.mxu0 0
        %1314 = vmatpush2.bf16.msra.mxu0 0
        %1315 = vmatprep.subr.bf16.mxu0 0
        %1316 = vmatpush2.bf16.msra.mxu0 0
        %1317 = vmatprep.subr.bf16.mxu0 0
        %1318 = vmatpush2.bf16.msra.mxu0 0
        %1319 = vmatprep.subr.bf16.mxu0 0
        %1320 = vmatpush2.bf16.msra.mxu0 0
        %1321 = vmatprep.mubr.bf16.mxu0 0
        %1322 = vmatmul.mubr.bf16.gmra.mxu0 %v1261
        %v1323 = vpop.f32.mrf.mxu0
        %v1324 = vadd.f32 %v1243, %v1323
        %v1325 = vpop.f32.mrf.mxu0
        %v1326 = vpop.f32.mrf.mxu0
        %v1327 = vadd.f32 %v1243, %v1326
        %v1328 = vpop.f32.mrf.mxu0
        %1329 = vmatprep.mubr.bf16.mxu0 0
        %1330 = vmatmul.mubr.bf16.gmra.mxu0 %v1263
        %v1331 = vpop.f32.mrf.mxu0
        %v1332 = vadd.f32 %v1243, %v1331
        %v1333 = vpop.f32.mrf.mxu0
        %v1334 = vpop.f32.mrf.mxu0
        %v1335 = vadd.f32 %v1243, %v1334
        %v1336 = vpop.f32.mrf.mxu0
        %1337 = vmatprep.mubr.bf16.mxu0 0
        %1338 = vmatmul.mubr.bf16.gmra.mxu0 %v1265
        %v1339 = vpop.f32.mrf.mxu0
        %v1340 = vadd.f32 %v1243, %v1339
        %v1341 = vpop.f32.mrf.mxu0
        %v1342 = vpop.f32.mrf.mxu0
        %v1343 = vadd.f32 %v1243, %v1342
        %v1344 = vpop.f32.mrf.mxu0
        %1345 = vmatprep.mubr.bf16.mxu0 0
        %1346 = vmatmul.mubr.bf16.gmra.mxu0 %v1267
        %v1347 = vpop.f32.mrf.mxu0
        %v1348 = vadd.f32 %v1243, %v1347
        %v1349 = vpop.f32.mrf.mxu0
        %v1350 = vpop.f32.mrf.mxu0
        %v1351 = vadd.f32 %v1243, %v1350
        %v1352 = vpop.f32.mrf.mxu0
        %1353 = vmatprep.mubr.bf16.mxu0 0
        %1354 = vmatmul.mubr.bf16.gmra.mxu0 %v1269
        %v1355 = vpop.f32.mrf.mxu0
        %v1356 = vadd.f32 %v1243, %v1355
        %v1357 = vpop.f32.mrf.mxu0
        %v1358 = vpop.f32.mrf.mxu0
        %v1359 = vadd.f32 %v1243, %v1358
        %v1360 = vpop.f32.mrf.mxu0
        %1361 = vmatprep.mubr.bf16.mxu0 0
        %1362 = vmatmul.mubr.bf16.gmra.mxu0 %v1271
        %v1363 = vpop.f32.mrf.mxu0
        %v1364 = vadd.f32 %v1243, %v1363
        %v1365 = vpop.f32.mrf.mxu0
        %v1366 = vpop.f32.mrf.mxu0
        %v1367 = vadd.f32 %v1243, %v1366
        %v1368 = vpop.f32.mrf.mxu0
        %1369 = vmatprep.mubr.bf16.mxu0 0
        %1370 = vmatmul.mubr.bf16.gmra.mxu0 %v1273
        %v1371 = vpop.f32.mrf.mxu0
        %v1372 = vadd.f32 %v1243, %v1371
        %v1373 = vpop.f32.mrf.mxu0
        %v1374 = vpop.f32.mrf.mxu0
        %v1375 = vadd.f32 %v1243, %v1374
        %v1376 = vpop.f32.mrf.mxu0
        %1377 = vmatprep.mubr.bf16.mxu0 0
        %1378 = vmatmul.mubr.bf16.gmra.mxu0 %v1275
        %v1379 = vpop.f32.mrf.mxu0
        %v1380 = vadd.f32 %v1243, %v1379
        %v1381 = vpop.f32.mrf.mxu0
        %v1382 = vpop.f32.mrf.mxu0
        %v1383 = vadd.f32 %v1243, %v1382
        %v1384 = vpop.f32.mrf.mxu0
        %1385 = vmatprep.mubr.bf16.mxu0 0
        %1386 = vmatmul.mubr.bf16.gmra.mxu0 %v1277
        %v1387 = vpop.f32.mrf.mxu0
        %v1388 = vadd.f32 %v1243, %v1387
        %v1389 = vpop.f32.mrf.mxu0
        %v1390 = vpop.f32.mrf.mxu0
        %v1391 = vadd.f32 %v1243, %v1390
        %v1392 = vpop.f32.mrf.mxu0
        %1393 = vmatprep.mubr.bf16.mxu0 0
        %1394 = vmatmul.mubr.bf16.gmra.mxu0 %v1279
        %v1395 = vpop.f32.mrf.mxu0
        %v1396 = vadd.f32 %v1243, %v1395
        %v1397 = vpop.f32.mrf.mxu0
        %v1398 = vpop.f32.mrf.mxu0
        %v1399 = vadd.f32 %v1243, %v1398
        %v1400 = vpop.f32.mrf.mxu0
        %1401 = vmatprep.mubr.bf16.mxu0 0
        %1402 = vmatmul.mubr.bf16.gmra.mxu0 %v1281
        %v1403 = vpop.f32.mrf.mxu0
        %v1404 = vadd.f32 %v1243, %v1403
        %v1405 = vpop.f32.mrf.mxu0
        %v1406 = vpop.f32.mrf.mxu0
        %v1407 = vadd.f32 %v1243, %v1406
        %v1408 = vpop.f32.mrf.mxu0
        %1409 = vmatprep.mubr.bf16.mxu0 0
        %1410 = vmatmul.mubr.bf16.gmra.mxu0 %v1283
        %v1411 = vpop.f32.mrf.mxu0
        %v1412 = vadd.f32 %v1243, %v1411
        %v1413 = vpop.f32.mrf.mxu0
        %v1414 = vpop.f32.mrf.mxu0
        %v1415 = vadd.f32 %v1243, %v1414
        %v1416 = vpop.f32.mrf.mxu0
        %1417 = vdwg.mxu0
        %v1418 = vmax.f32 %v1324, 0.0
        %v1419 = vmax.f32 %v1327, 0.0
        %v1420 = vmax.f32 %v1332, 0.0
        %v1421 = vmax.f32 %v1335, 0.0
        %v1422 = vmax.f32 %v1340, 0.0
        %v1423 = vmax.f32 %v1343, 0.0
        %v1424 = vmax.f32 %v1348, 0.0
        %v1425 = vmax.f32 %v1351, 0.0
        %v1426 = vmax.f32 %v1356, 0.0
        %v1427 = vmax.f32 %v1359, 0.0
        %v1428 = vmax.f32 %v1364, 0.0
        %v1429 = vmax.f32 %v1367, 0.0
        %v1430 = vmax.f32 %v1372, 0.0
        %v1431 = vmax.f32 %v1375, 0.0
        %v1432 = vmax.f32 %v1380, 0.0
        %v1433 = vmax.f32 %v1383, 0.0
        %v1434 = vmax.f32 %v1388, 0.0
        %v1435 = vmax.f32 %v1391, 0.0
        %v1436 = vmax.f32 %v1396, 0.0
        %v1437 = vmax.f32 %v1399, 0.0
        %v1438 = vmax.f32 %v1404, 0.0
        %v1439 = vmax.f32 %v1407, 0.0
        %v1440 = vmax.f32 %v1412, 0.0
        %v1441 = vmax.f32 %v1415, 0.0
        %v1442 = vpack.c.bf16 %v1419, %v1418
        %v1443 = vpack.c.bf16 %v1421, %v1420
        %v1444 = vpack.c.bf16 %v1423, %v1422
        %v1445 = vpack.c.bf16 %v1425, %v1424
        %v1446 = vpack.c.bf16 %v1427, %v1426
        %v1447 = vpack.c.bf16 %v1429, %v1428
        %v1448 = vpack.c.bf16 %v1431, %v1430
        %v1449 = vpack.c.bf16 %v1433, %v1432
        %v1450 = vpack.c.bf16 %v1435, %v1434
        %v1451 = vpack.c.bf16 %v1437, %v1436
        %v1452 = vpack.c.bf16 %v1439, %v1438
        %v1453 = vpack.c.bf16 %v1441, %v1440
        %s1454 = ssub.s32 %s342, 2
        %v1455 = vstv %s1454
        %v1456 = vadd.s32 %v1455, 1
        %v1457 = vadd.s32 %v1455, 2
        %v1458 = vadd.s32 %v1455, 3
        %v1459 = vadd.s32 %v1455, 4
        %v1460 = vadd.s32 %v1455, 5
        %v1461 = vadd.s32 %v1455, 6
        %v1462 = vadd.s32 %v1455, 7
        %v1463 = vadd.s32 %v1455, 8
        %v1464 = vadd.s32 %v1455, 9
        %v1465 = vadd.s32 %v1455, 10
        %v1466 = vadd.s32 %v1455, 11
        %vm1467 = vcmp.ge.s32.totalorder %v1455, 0
        %vm1468 = vcmp.ge.s32.totalorder %v1456, 0
        %vm1469 = vcmp.ge.s32.totalorder %v1457, 0
        %vm1470 = vcmp.ge.s32.totalorder %v1458, 0
        %vm1471 = vcmp.ge.s32.totalorder %v1459, 0
        %vm1472 = vcmp.ge.s32.totalorder %v1460, 0
        %vm1473 = vcmp.ge.s32.totalorder %v1461, 0
        %vm1474 = vcmp.ge.s32.totalorder %v1462, 0
        %vm1475 = vcmp.ge.s32.totalorder %v1463, 0
        %vm1476 = vcmp.ge.s32.totalorder %v1464, 0
        %vm1477 = vcmp.ge.s32.totalorder %v1465, 0
        %vm1478 = vcmp.ge.s32.totalorder %v1466, 0
        %vm1479 = vcmp.lt.s32.totalorder %v1455, 16
        %vm1480 = vcmp.lt.s32.totalorder %v1456, 16
        %vm1481 = vcmp.lt.s32.totalorder %v1457, 16
        %vm1482 = vcmp.lt.s32.totalorder %v1458, 16
        %vm1483 = vcmp.lt.s32.totalorder %v1459, 16
        %vm1484 = vcmp.lt.s32.totalorder %v1460, 16
        %vm1485 = vcmp.lt.s32.totalorder %v1461, 16
        %vm1486 = vcmp.lt.s32.totalorder %v1462, 16
        %vm1487 = vcmp.lt.s32.totalorder %v1463, 16
        %vm1488 = vcmp.lt.s32.totalorder %v1464, 16
        %vm1489 = vcmp.lt.s32.totalorder %v1465, 16
        %vm1490 = vcmp.lt.s32.totalorder %v1466, 16
        %vm1491 = vmand %vm1467, %vm1479
        %vm1492 = vmand %vm1468, %vm1480
        %vm1493 = vmand %vm1469, %vm1481
        %vm1494 = vmand %vm1470, %vm1482
        %vm1495 = vmand %vm1471, %vm1483
        %vm1496 = vmand %vm1472, %vm1484
        %vm1497 = vmand %vm1473, %vm1485
        %vm1498 = vmand %vm1474, %vm1486
        %vm1499 = vmand %vm1475, %vm1487
        %vm1500 = vmand %vm1476, %vm1488
        %vm1501 = vmand %vm1477, %vm1489
        %vm1502 = vmand %vm1478, %vm1490
        %v1503 = vsel %vm1491, 1, 0
        %v1504 = vsel %vm1492, 1, 0
        %v1505 = vsel %vm1493, 1, 0
        %v1506 = vsel %vm1494, 1, 0
        %v1507 = vsel %vm1495, 1, 0
        %v1508 = vsel %vm1496, 1, 0
        %v1509 = vsel %vm1497, 1, 0
        %v1510 = vsel %vm1498, 1, 0
        %v1511 = vsel %vm1499, 1, 0
        %v1512 = vsel %vm1500, 1, 0
        %v1513 = vsel %vm1501, 1, 0
        %v1514 = vsel %vm1502, 1, 0
        %vm1515 = vcmp.eq.s32.totalorder %v1503, 1
        %vm1516 = vcmp.eq.s32.totalorder %v1504, 1
        %vm1517 = vcmp.eq.s32.totalorder %v1505, 1
        %vm1518 = vcmp.eq.s32.totalorder %v1506, 1
        %vm1519 = vcmp.eq.s32.totalorder %v1507, 1
        %vm1520 = vcmp.eq.s32.totalorder %v1508, 1
        %vm1521 = vcmp.eq.s32.totalorder %v1509, 1
        %vm1522 = vcmp.eq.s32.totalorder %v1510, 1
        %vm1523 = vcmp.eq.s32.totalorder %v1511, 1
        %vm1524 = vcmp.eq.s32.totalorder %v1512, 1
        %vm1525 = vcmp.eq.s32.totalorder %v1513, 1
        %vm1526 = vcmp.eq.s32.totalorder %v1514, 1
        %v1527 = vsel %vm1515, %v1442, 0
        %v1528 = vsel %vm1516, %v1443, 0
        %v1529 = vsel %vm1517, %v1444, 0
        %v1530 = vsel %vm1518, %v1445, 0
        %v1531 = vsel %vm1519, %v1446, 0
        %v1532 = vsel %vm1520, %v1447, 0
        %v1533 = vsel %vm1521, %v1448, 0
        %v1534 = vsel %vm1522, %v1449, 0
        %v1535 = vsel %vm1523, %v1450, 0
        %v1536 = vsel %vm1524, %v1451, 0
        %v1537 = vsel %vm1525, %v1452, 0
        %v1538 = vsel %vm1526, %v1453, 0
        %v1540 = vshrl.u32 %v1527, 16
        %v1542 = vrot.slane %v1540, 7
        %v1543 = vshll.u32 %v1527, 16
        %v1545 = vor.u32 %v1542, %v1543
        %v1547 = vshrl.u32 %v1528, 16
        %v1549 = vrot.slane %v1547, 7
        %v1550 = vshll.u32 %v1528, 16
        %v1552 = vor.u32 %v1549, %v1550
        %v1554 = vshrl.u32 %v1529, 16
        %v1556 = vrot.slane %v1554, 7
        %v1557 = vshll.u32 %v1529, 16
        %v1559 = vor.u32 %v1556, %v1557
        %v1561 = vshrl.u32 %v1530, 16
        %v1563 = vrot.slane %v1561, 7
        %v1564 = vshll.u32 %v1530, 16
        %v1566 = vor.u32 %v1563, %v1564
        %v1568 = vshrl.u32 %v1531, 16
        %v1570 = vrot.slane %v1568, 7
        %v1571 = vshll.u32 %v1531, 16
        %v1573 = vor.u32 %v1570, %v1571
        %v1575 = vshrl.u32 %v1532, 16
        %v1577 = vrot.slane %v1575, 7
        %v1578 = vshll.u32 %v1532, 16
        %v1580 = vor.u32 %v1577, %v1578
        %v1582 = vshrl.u32 %v1533, 16
        %v1584 = vrot.slane %v1582, 7
        %v1585 = vshll.u32 %v1533, 16
        %v1587 = vor.u32 %v1584, %v1585
        %v1589 = vshrl.u32 %v1534, 16
        %v1591 = vrot.slane %v1589, 7
        %v1592 = vshll.u32 %v1534, 16
        %v1594 = vor.u32 %v1591, %v1592
        %v1596 = vshrl.u32 %v1535, 16
        %v1598 = vrot.slane %v1596, 7
        %v1599 = vshll.u32 %v1535, 16
        %v1601 = vor.u32 %v1598, %v1599
        %v1603 = vshrl.u32 %v1536, 16
        %v1605 = vrot.slane %v1603, 7
        %v1606 = vshll.u32 %v1536, 16
        %v1608 = vor.u32 %v1605, %v1606
        %v1610 = vshrl.u32 %v1537, 16
        %v1612 = vrot.slane %v1610, 7
        %v1613 = vshll.u32 %v1537, 16
        %v1615 = vor.u32 %v1612, %v1613
        %v1617 = vshrl.u32 %v1538, 16
        %v1619 = vrot.slane %v1617, 7
        %v1620 = vshll.u32 %v1538, 16
        %v1622 = vor.u32 %v1619, %v1620
        %v1647 = vsel %vm572, 0, %v1545
        %v1648 = vsel %vm572, 0, %v1552
        %v1649 = vsel %vm572, 0, %v1559
        %v1650 = vsel %vm572, 0, %v1566
        %v1651 = vsel %vm572, 0, %v1573
        %v1652 = vsel %vm572, 0, %v1580
        %v1653 = vsel %vm572, 0, %v1587
        %v1654 = vsel %vm572, 0, %v1594
        %v1655 = vsel %vm572, 0, %v1601
        %v1656 = vsel %vm572, 0, %v1608
        %v1657 = vsel %vm572, 0, %v1615
        %v1658 = vsel %vm572, 0, %v1622
        %v1659 = vsel %vm572, %v1542, 0
        %v1660 = vsel %vm572, %v1549, 0
        %v1661 = vsel %vm572, %v1556, 0
        %v1662 = vsel %vm572, %v1563, 0
        %v1663 = vsel %vm572, %v1570, 0
        %v1664 = vsel %vm572, %v1577, 0
        %v1665 = vsel %vm572, %v1584, 0
        %v1666 = vsel %vm572, %v1591, 0
        %v1667 = vsel %vm572, %v1598, 0
        %v1668 = vsel %vm572, %v1605, 0
        %v1669 = vsel %vm572, %v1612, 0
        %v1670 = vsel %vm572, %v1619, 0
        %v1672 = vshrl.u32 %v1647, 16
        %v1674 = vshll.u32 %v1647, 16
        %v1676 = vrot.slane %v1674, 1
        %v1677 = vor.u32 %v1672, %v1676
        %v1679 = vshll.u32 %v1659, 16
        %v1681 = vrot.slane %v1679, 1
        %v1682 = vsel %vm601, %v1677, %v1681
        %v1684 = vshrl.u32 %v1648, 16
        %v1686 = vshll.u32 %v1648, 16
        %v1688 = vrot.slane %v1686, 1
        %v1689 = vor.u32 %v1684, %v1688
        %v1691 = vshll.u32 %v1660, 16
        %v1693 = vrot.slane %v1691, 1
        %v1694 = vsel %vm601, %v1689, %v1693
        %v1696 = vshrl.u32 %v1649, 16
        %v1698 = vshll.u32 %v1649, 16
        %v1700 = vrot.slane %v1698, 1
        %v1701 = vor.u32 %v1696, %v1700
        %v1703 = vshll.u32 %v1661, 16
        %v1705 = vrot.slane %v1703, 1
        %v1706 = vsel %vm601, %v1701, %v1705
        %v1708 = vshrl.u32 %v1650, 16
        %v1710 = vshll.u32 %v1650, 16
        %v1712 = vrot.slane %v1710, 1
        %v1713 = vor.u32 %v1708, %v1712
        %v1715 = vshll.u32 %v1662, 16
        %v1717 = vrot.slane %v1715, 1
        %v1718 = vsel %vm601, %v1713, %v1717
        %v1720 = vshrl.u32 %v1651, 16
        %v1722 = vshll.u32 %v1651, 16
        %v1724 = vrot.slane %v1722, 1
        %v1725 = vor.u32 %v1720, %v1724
        %v1727 = vshll.u32 %v1663, 16
        %v1729 = vrot.slane %v1727, 1
        %v1730 = vsel %vm601, %v1725, %v1729
        %v1732 = vshrl.u32 %v1652, 16
        %v1734 = vshll.u32 %v1652, 16
        %v1736 = vrot.slane %v1734, 1
        %v1737 = vor.u32 %v1732, %v1736
        %v1739 = vshll.u32 %v1664, 16
        %v1741 = vrot.slane %v1739, 1
        %v1742 = vsel %vm601, %v1737, %v1741
        %v1744 = vshrl.u32 %v1653, 16
        %v1746 = vshll.u32 %v1653, 16
        %v1748 = vrot.slane %v1746, 1
        %v1749 = vor.u32 %v1744, %v1748
        %v1751 = vshll.u32 %v1665, 16
        %v1753 = vrot.slane %v1751, 1
        %v1754 = vsel %vm601, %v1749, %v1753
        %v1756 = vshrl.u32 %v1654, 16
        %v1758 = vshll.u32 %v1654, 16
        %v1760 = vrot.slane %v1758, 1
        %v1761 = vor.u32 %v1756, %v1760
        %v1763 = vshll.u32 %v1666, 16
        %v1765 = vrot.slane %v1763, 1
        %v1766 = vsel %vm601, %v1761, %v1765
        %v1768 = vshrl.u32 %v1655, 16
        %v1770 = vshll.u32 %v1655, 16
        %v1772 = vrot.slane %v1770, 1
        %v1773 = vor.u32 %v1768, %v1772
        %v1775 = vshll.u32 %v1667, 16
        %v1777 = vrot.slane %v1775, 1
        %v1778 = vsel %vm601, %v1773, %v1777
        %v1780 = vshrl.u32 %v1656, 16
        %v1782 = vshll.u32 %v1656, 16
        %v1784 = vrot.slane %v1782, 1
        %v1785 = vor.u32 %v1780, %v1784
        %v1787 = vshll.u32 %v1668, 16
        %v1789 = vrot.slane %v1787, 1
        %v1790 = vsel %vm601, %v1785, %v1789
        %1791 = vrot.lane.b32.xlu0 %v1682, 64
        %v1792 = vpop.permute.xlu0 %1791
        %1793 = vrot.lane.b32.xlu0 %v1694, 64
        %v1794 = vpop.permute.xlu0 %1793
        %1795 = vrot.lane.b32.xlu0 %v1706, 64
        %v1796 = vpop.permute.xlu0 %1795
        %1797 = vrot.lane.b32.xlu0 %v1718, 64
        %v1798 = vpop.permute.xlu0 %1797
        %1799 = vrot.lane.b32.xlu0 %v1730, 64
        %v1800 = vpop.permute.xlu0 %1799
        %1801 = vrot.lane.b32.xlu0 %v1742, 64
        %v1802 = vpop.permute.xlu0 %1801
        %1803 = vrot.lane.b32.xlu0 %v1754, 64
        %v1804 = vpop.permute.xlu0 %1803
        %1805 = vrot.lane.b32.xlu0 %v1766, 64
        %v1806 = vpop.permute.xlu0 %1805
        %1807 = vrot.lane.b32.xlu0 %v1778, 64
        %v1808 = vpop.permute.xlu0 %1807
        %1809 = vrot.lane.b32.xlu0 %v1790, 64
        %v1810 = vpop.permute.xlu0 %1809
        %v1831 = vrot.slane %v1647, 1
        %v1832 = vrot.slane %v1659, 1
        %v1833 = vsel %vm794, %v1831, %v1832
        %v1834 = vrot.slane %v1648, 1
        %v1835 = vrot.slane %v1660, 1
        %v1836 = vsel %vm794, %v1834, %v1835
        %v1837 = vrot.slane %v1649, 1
        %v1838 = vrot.slane %v1661, 1
        %v1839 = vsel %vm794, %v1837, %v1838
        %v1840 = vrot.slane %v1650, 1
        %v1841 = vrot.slane %v1662, 1
        %v1842 = vsel %vm794, %v1840, %v1841
        %v1843 = vrot.slane %v1651, 1
        %v1844 = vrot.slane %v1663, 1
        %v1845 = vsel %vm794, %v1843, %v1844
        %v1846 = vrot.slane %v1652, 1
        %v1847 = vrot.slane %v1664, 1
        %v1848 = vsel %vm794, %v1846, %v1847
        %v1849 = vrot.slane %v1653, 1
        %v1850 = vrot.slane %v1665, 1
        %v1851 = vsel %vm794, %v1849, %v1850
        %v1852 = vrot.slane %v1654, 1
        %v1853 = vrot.slane %v1666, 1
        %v1854 = vsel %vm794, %v1852, %v1853
        %v1855 = vrot.slane %v1655, 1
        %v1856 = vrot.slane %v1667, 1
        %v1857 = vsel %vm794, %v1855, %v1856
        %v1858 = vrot.slane %v1656, 1
        %v1859 = vrot.slane %v1668, 1
        %v1860 = vsel %vm794, %v1858, %v1859
        %1862 = vrot.lane.b32.xlu0 %v1648, 64
        %v1863 = vpop.permute.xlu0 %1862
        %1864 = vrot.lane.b32.xlu0 %v1649, 64
        %v1865 = vpop.permute.xlu0 %1864
        %1866 = vrot.lane.b32.xlu0 %v1650, 64
        %v1867 = vpop.permute.xlu0 %1866
        %1868 = vrot.lane.b32.xlu0 %v1651, 64
        %v1869 = vpop.permute.xlu0 %1868
        %1870 = vrot.lane.b32.xlu0 %v1652, 64
        %v1871 = vpop.permute.xlu0 %1870
        %1872 = vrot.lane.b32.xlu0 %v1653, 64
        %v1873 = vpop.permute.xlu0 %1872
        %1874 = vrot.lane.b32.xlu0 %v1654, 64
        %v1875 = vpop.permute.xlu0 %1874
        %1876 = vrot.lane.b32.xlu0 %v1655, 64
        %v1877 = vpop.permute.xlu0 %1876
        %1878 = vrot.lane.b32.xlu0 %v1656, 64
        %v1879 = vpop.permute.xlu0 %1878
        %1880 = vrot.lane.b32.xlu0 %v1657, 64
        %v1881 = vpop.permute.xlu0 %1880
        %v1883 = vshrl.u32 %v1657, 16
        %v1885 = vshll.u32 %v1657, 16
        %v1887 = vrot.slane %v1885, 1
        %v1888 = vor.u32 %v1883, %v1887
        %v1890 = vshll.u32 %v1669, 16
        %v1892 = vrot.slane %v1890, 1
        %v1893 = vsel %vm601, %v1888, %v1892
        %v1895 = vrot.slane %v1657, 1
        %v1896 = vrot.slane %v1669, 1
        %v1897 = vsel %vm794, %v1895, %v1896
        %1898 = vrot.lane.b32.xlu0 %v1836, 64
        %v1899 = vpop.permute.xlu0 %1898
        %1900 = vrot.lane.b32.xlu0 %v1839, 64
        %v1901 = vpop.permute.xlu0 %1900
        %1902 = vrot.lane.b32.xlu0 %v1842, 64
        %v1903 = vpop.permute.xlu0 %1902
        %1904 = vrot.lane.b32.xlu0 %v1845, 64
        %v1905 = vpop.permute.xlu0 %1904
        %1906 = vrot.lane.b32.xlu0 %v1848, 64
        %v1907 = vpop.permute.xlu0 %1906
        %1908 = vrot.lane.b32.xlu0 %v1851, 64
        %v1909 = vpop.permute.xlu0 %1908
        %1910 = vrot.lane.b32.xlu0 %v1854, 64
        %v1911 = vpop.permute.xlu0 %1910
        %1912 = vrot.lane.b32.xlu0 %v1857, 64
        %v1913 = vpop.permute.xlu0 %1912
        %1914 = vrot.lane.b32.xlu0 %v1860, 64
        %v1915 = vpop.permute.xlu0 %1914
        %1916 = vrot.lane.b32.xlu0 %v1897, 64
        %v1917 = vpop.permute.xlu0 %1916
        %v1919 = vshrl.u32 %v1658, 16
        %v1921 = vshll.u32 %v1658, 16
        %v1923 = vrot.slane %v1921, 1
        %v1924 = vor.u32 %v1919, %v1923
        %v1926 = vshll.u32 %v1670, 16
        %v1928 = vrot.slane %v1926, 1
        %v1929 = vsel %vm601, %v1924, %v1928
        %1930 = vrot.lane.b32.xlu0 %v1893, 64
        %v1931 = vpop.permute.xlu0 %1930
        %1932 = vrot.lane.b32.xlu0 %v1929, 64
        %v1933 = vpop.permute.xlu0 %1932
        %v1936 = vrot.slane %v1658, 1
        %v1937 = vrot.slane %v1670, 1
        %v1938 = vsel %vm794, %v1936, %v1937
        %vm1939 = vcmask 523264
        %v1941 = vsel %vm1939, %v1647, %v1792
        %v1944 = vsel %vm1939, %v1648, %v1794
        %v1947 = vsel %vm1939, %v1649, %v1796
        %v1950 = vsel %vm1939, %v1650, %v1798
        %v1953 = vsel %vm1939, %v1651, %v1800
        %v1956 = vsel %vm1939, %v1652, %v1802
        %v1959 = vsel %vm1939, %v1653, %v1804
        %v1962 = vsel %vm1939, %v1654, %v1806
        %v1965 = vsel %vm1939, %v1655, %v1808
        %v1968 = vsel %vm1939, %v1656, %v1810
        %v1972 = vsel %vm1939, %v1833, %v1863
        %v1976 = vsel %vm1939, %v1836, %v1865
        %v1980 = vsel %vm1939, %v1839, %v1867
        %v1984 = vsel %vm1939, %v1842, %v1869
        %v1988 = vsel %vm1939, %v1845, %v1871
        %v1992 = vsel %vm1939, %v1848, %v1873
        %v1996 = vsel %vm1939, %v1851, %v1875
        %v2000 = vsel %vm1939, %v1854, %v1877
        %v2004 = vsel %vm1939, %v1857, %v1879
        %v2008 = vsel %vm1939, %v1860, %v1881
        %v2012 = vsel %vm1939, %v1694, %v1899
        %v2016 = vsel %vm1939, %v1706, %v1901
        %v2020 = vsel %vm1939, %v1718, %v1903
        %v2024 = vsel %vm1939, %v1730, %v1905
        %v2028 = vsel %vm1939, %v1742, %v1907
        %v2032 = vsel %vm1939, %v1754, %v1909
        %v2036 = vsel %vm1939, %v1766, %v1911
        %v2040 = vsel %vm1939, %v1778, %v1913
        %v2044 = vsel %vm1939, %v1790, %v1915
        %v2048 = vsel %vm1939, %v1893, %v1917
        %v2051 = vsel %vm1939, %v1657, %v1931
        %v2054 = vsel %vm1939, %v1658, %v1933
        %v2056 = vld [vmem:[%s3] sm:$0xf]
        %v2057 = vld [vmem:[%s3 + $0x4] sm:$0xf]
        %v2058 = vld [vmem:[%s3 + $0x8] sm:$0xf]
        %v2059 = vld [vmem:[%s3 + $0xc] sm:$0xf]
        %v2060 = vld [vmem:[%s3 + $0x10] sm:$0xf]
        %v2061 = vld [vmem:[%s3 + $0x14] sm:$0xf]
        %v2062 = vld [vmem:[%s3 + $0x18] sm:$0xf]
        %v2063 = vld [vmem:[%s3 + $0x1c] sm:$0xf]
        %v2064 = vld [vmem:[%s3 + $0x20] sm:$0xf]
        %v2065 = vld [vmem:[%s3 + $0x24] sm:$0xf]
        %v2066 = vld [vmem:[%s3 + $0x28] sm:$0xf]
        %v2067 = vld [vmem:[%s3 + $0x2c] sm:$0xf]
        %v2068 = vld [vmem:[%s3 + $0x30] sm:$0xf]
        %v2069 = vld [vmem:[%s3 + $0x34] sm:$0xf]
        %v2070 = vld [vmem:[%s3 + $0x38] sm:$0xf]
        %v2071 = vld [vmem:[%s3 + $0x3c] sm:$0xf]
        %v2072 = vld [vmem:[%s3 + $0x40] sm:$0xf]
        %v2073 = vld [vmem:[%s3 + $0x44] sm:$0xf]
        %v2074 = vld [vmem:[%s3 + $0x48] sm:$0xf]
        %v2075 = vld [vmem:[%s3 + $0x4c] sm:$0xf]
        %v2076 = vld [vmem:[%s3 + $0x50] sm:$0xf]
        %v2077 = vld [vmem:[%s3 + $0x54] sm:$0xf]
        %v2078 = vld [vmem:[%s3 + $0x58] sm:$0xf]
        %v2079 = vld [vmem:[%s3 + $0x5c] sm:$0xf]
        %v2080 = vld [vmem:[%s3 + $0x60] sm:$0xf]
        %v2081 = vld [vmem:[%s3 + $0x64] sm:$0xf]
        %v2082 = vld [vmem:[%s3 + $0x68] sm:$0xf]
        %v2083 = vld [vmem:[%s3 + $0x6c] sm:$0xf]
        %v2084 = vld [vmem:[%s3 + $0x70] sm:$0xf]
        %v2085 = vld [vmem:[%s3 + $0x74] sm:$0xf]
        %v2086 = vld [vmem:[%s3 + $0x78] sm:$0xf]
        %v2087 = vld [vmem:[%s3 + $0x7c] sm:$0xf]
        %v2088 = vld [vmem:[%s3 + $0x80] sm:$0xf]
        %v2089 = vld [vmem:[%s3 + $0x84] sm:$0xf]
        %v2090 = vld [vmem:[%s3 + $0x88] sm:$0xf]
        %v2091 = vld [vmem:[%s3 + $0x8c] sm:$0xf]
        %v2092 = vld [vmem:[%s3 + $0x90] sm:$0xf]
        %v2093 = vld [vmem:[%s3 + $0x94] sm:$0xf]
        %v2094 = vld [vmem:[%s3 + $0x98] sm:$0xf]
        %v2095 = vld [vmem:[%s3 + $0x9c] sm:$0xf]
        %v2096 = vld [vmem:[%s3 + $0xa0] sm:$0xf]
        %v2097 = vld [vmem:[%s3 + $0xa4] sm:$0xf]
        %v2098 = vld [vmem:[%s3 + $0xa8] sm:$0xf]
        %v2099 = vld [vmem:[%s3 + $0xac] sm:$0xf]
        %v2100 = vld [vmem:[%s3 + $0xb0] sm:$0xf]
        %v2101 = vld [vmem:[%s3 + $0xb4] sm:$0xf]
        %v2102 = vld [vmem:[%s3 + $0xb8] sm:$0xf]
        %v2103 = vld [vmem:[%s3 + $0xbc] sm:$0xf]
        %v2104 = vld [vmem:[%s3 + $0xc0] sm:$0xf]
        %v2105 = vld [vmem:[%s3 + $0xc4] sm:$0xf]
        %v2106 = vld [vmem:[%s3 + $0xc8] sm:$0xf]
        %v2107 = vld [vmem:[%s3 + $0xcc] sm:$0xf]
        %v2108 = vld [vmem:[%s3 + $0xd0] sm:$0xf]
        %v2109 = vld [vmem:[%s3 + $0xd4] sm:$0xf]
        %v2110 = vld [vmem:[%s3 + $0xd8] sm:$0xf]
        %v2111 = vld [vmem:[%s3 + $0xdc] sm:$0xf]
        %v2112 = vld [vmem:[%s3 + $0xe0] sm:$0xf]
        %v2113 = vld [vmem:[%s3 + $0xe4] sm:$0xf]
        %v2114 = vld [vmem:[%s3 + $0xe8] sm:$0xf]
        %v2115 = vld [vmem:[%s3 + $0xec] sm:$0xf]
        %v2116 = vld [vmem:[%s3 + $0xf0] sm:$0xf]
        %v2117 = vld [vmem:[%s3 + $0xf4] sm:$0xf]
        %v2118 = vld [vmem:[%s3 + $0xf8] sm:$0xf]
        %v2119 = vld [vmem:[%s3 + $0xfc] sm:$0xf]
        %v2120 = vld [vmem:[%s3 + $0x100] sm:$0xf]
        %v2121 = vld [vmem:[%s3 + $0x104] sm:$0xf]
        %v2122 = vld [vmem:[%s3 + $0x108] sm:$0xf]
        %v2123 = vld [vmem:[%s3 + $0x10c] sm:$0xf]
        %v2124 = vld [vmem:[%s3 + $0x110] sm:$0xf]
        %v2125 = vld [vmem:[%s3 + $0x114] sm:$0xf]
        %v2126 = vld [vmem:[%s3 + $0x118] sm:$0xf]
        %v2127 = vld [vmem:[%s3 + $0x11c] sm:$0xf]
        %v2128 = vld [vmem:[%s4] sm:$0x1]
        %v2130 = vlaneseq
        %v2131 = vshrl.u32 %v2130, 7
        %v2132 = vsub.s32 0, %v2131
        %v2133 = vrot.slane %v2128, %v2132
        %v2207 = vunpack.c.l.b16 %v2056
        %v2208 = vunpack.c.l.b16 %v2057
        %v2209 = vunpack.c.l.b16 %v2058
        %v2210 = vunpack.c.l.b16 %v2059
        %v2211 = vunpack.c.l.b16 %v2060
        %v2212 = vunpack.c.l.b16 %v2061
        %v2213 = vunpack.c.l.b16 %v2062
        %v2214 = vunpack.c.l.b16 %v2063
        %v2215 = vunpack.c.l.b16 %v2064
        %v2216 = vunpack.c.l.b16 %v2065
        %v2217 = vunpack.c.l.b16 %v2066
        %v2218 = vunpack.c.l.b16 %v2067
        %v2219 = vunpack.c.l.b16 %v2068
        %v2220 = vunpack.c.l.b16 %v2069
        %v2221 = vunpack.c.l.b16 %v2070
        %v2222 = vunpack.c.l.b16 %v2071
        %v2223 = vunpack.c.l.b16 %v2072
        %v2224 = vunpack.c.l.b16 %v2073
        %v2225 = vunpack.c.l.b16 %v2074
        %v2226 = vunpack.c.l.b16 %v2075
        %v2227 = vunpack.c.l.b16 %v2076
        %v2228 = vunpack.c.l.b16 %v2077
        %v2229 = vunpack.c.l.b16 %v2078
        %v2230 = vunpack.c.l.b16 %v2079
        %v2231 = vunpack.c.l.b16 %v2080
        %v2232 = vunpack.c.l.b16 %v2081
        %v2233 = vunpack.c.l.b16 %v2082
        %v2234 = vunpack.c.l.b16 %v2083
        %v2235 = vunpack.c.l.b16 %v2084
        %v2236 = vunpack.c.l.b16 %v2085
        %v2237 = vunpack.c.l.b16 %v2086
        %v2238 = vunpack.c.l.b16 %v2087
        %v2239 = vunpack.c.l.b16 %v2088
        %v2240 = vunpack.c.l.b16 %v2089
        %v2241 = vunpack.c.l.b16 %v2090
        %v2242 = vunpack.c.l.b16 %v2091
        %v2243 = vunpack.c.l.b16 %v2092
        %v2244 = vunpack.c.l.b16 %v2093
        %v2245 = vunpack.c.l.b16 %v2094
        %v2246 = vunpack.c.l.b16 %v2095
        %v2247 = vunpack.c.l.b16 %v2096
        %v2248 = vunpack.c.l.b16 %v2097
        %v2249 = vunpack.c.l.b16 %v2098
        %v2250 = vunpack.c.l.b16 %v2099
        %v2251 = vunpack.c.l.b16 %v2100
        %v2252 = vunpack.c.l.b16 %v2101
        %v2253 = vunpack.c.l.b16 %v2102
        %v2254 = vunpack.c.l.b16 %v2103
        %v2255 = vunpack.c.l.b16 %v2104
        %v2256 = vunpack.c.l.b16 %v2105
        %v2257 = vunpack.c.l.b16 %v2106
        %v2258 = vunpack.c.l.b16 %v2107
        %v2259 = vunpack.c.l.b16 %v2108
        %v2260 = vunpack.c.l.b16 %v2109
        %v2261 = vunpack.c.l.b16 %v2110
        %v2262 = vunpack.c.l.b16 %v2111
        %v2263 = vunpack.c.l.b16 %v2112
        %v2264 = vunpack.c.l.b16 %v2113
        %v2265 = vunpack.c.l.b16 %v2114
        %v2266 = vunpack.c.l.b16 %v2115
        %v2267 = vunpack.c.l.b16 %v2116
        %v2268 = vunpack.c.l.b16 %v2117
        %v2269 = vunpack.c.l.b16 %v2118
        %v2270 = vunpack.c.l.b16 %v2119
        %v2271 = vunpack.c.l.b16 %v2120
        %v2272 = vunpack.c.l.b16 %v2121
        %v2273 = vunpack.c.l.b16 %v2122
        %v2274 = vunpack.c.l.b16 %v2123
        %v2275 = vunpack.c.l.b16 %v2124
        %v2276 = vunpack.c.l.b16 %v2125
        %v2277 = vunpack.c.l.b16 %v2126
        %v2278 = vunpack.c.l.b16 %v2127
        %v2279 = vpack.c.b16 %v2208, %v2207
        %v2280 = vpack.c.b16 %v2210, %v2209
        %v2281 = vpack.c.b16 %v2212, %v2211
        %v2282 = vpack.c.b16 %v2214, %v2213
        %v2283 = vpack.c.b16 %v2216, %v2215
        %v2284 = vpack.c.b16 %v2218, %v2217
        %v2285 = vpack.c.b16 %v2220, %v2219
        %v2286 = vpack.c.b16 %v2222, %v2221
        %v2287 = vpack.c.b16 %v2224, %v2223
        %v2288 = vpack.c.b16 %v2226, %v2225
        %v2289 = vpack.c.b16 %v2228, %v2227
        %v2290 = vpack.c.b16 %v2230, %v2229
        %v2291 = vpack.c.b16 %v2232, %v2231
        %v2292 = vpack.c.b16 %v2234, %v2233
        %v2293 = vpack.c.b16 %v2236, %v2235
        %v2294 = vpack.c.b16 %v2238, %v2237
        %v2295 = vpack.c.b16 %v2240, %v2239
        %v2296 = vpack.c.b16 %v2242, %v2241
        %v2297 = vpack.c.b16 %v2244, %v2243
        %v2298 = vpack.c.b16 %v2246, %v2245
        %v2299 = vpack.c.b16 %v2248, %v2247
        %v2300 = vpack.c.b16 %v2250, %v2249
        %v2301 = vpack.c.b16 %v2252, %v2251
        %v2302 = vpack.c.b16 %v2254, %v2253
        %v2303 = vpack.c.b16 %v2256, %v2255
        %v2304 = vpack.c.b16 %v2258, %v2257
        %v2305 = vpack.c.b16 %v2260, %v2259
        %v2306 = vpack.c.b16 %v2262, %v2261
        %v2307 = vpack.c.b16 %v2264, %v2263
        %v2308 = vpack.c.b16 %v2266, %v2265
        %v2309 = vpack.c.b16 %v2268, %v2267
        %v2310 = vpack.c.b16 %v2270, %v2269
        %v2311 = vpack.c.b16 %v2272, %v2271
        %v2312 = vpack.c.b16 %v2274, %v2273
        %v2313 = vpack.c.b16 %v2276, %v2275
        %v2314 = vpack.c.b16 %v2278, %v2277
        %v2351 = vsel %vm1939, %v1839, 0
        %v2353 = vsel %vm1939, %v1842, 0
        %v2355 = vsel %vm1939, %v1845, 0
        %v2357 = vsel %vm1939, %v1848, 0
        %v2359 = vsel %vm1939, %v1851, 0
        %v2361 = vsel %vm1939, %v1854, 0
        %v2363 = vsel %vm1939, %v1857, 0
        %v2365 = vsel %vm1939, %v1860, 0
        %v2368 = vsel %vm1939, %v1897, 0
        %v2371 = vsel %vm1939, %v1938, 0
        %2373 = vmatprep.subr.bf16.mxu0 0
        %2374 = vmatpush1.bf16.msra.mxu0 %v2286
        %2375 = vmatprep.subr.bf16.mxu0 0
        %2376 = vmatpush1.bf16.msra.mxu0 %v2285
        %2377 = vmatprep.subr.bf16.mxu0 0
        %2378 = vmatpush1.bf16.msra.mxu0 %v2284
        %2379 = vmatprep.subr.bf16.mxu0 0
        %2380 = vmatpush1.bf16.msra.mxu0 %v2283
        %2381 = vmatprep.subr.bf16.mxu0 0
        %2382 = vmatpush1.bf16.msra.mxu0 %v2282
        %2383 = vmatprep.subr.bf16.mxu0 0
        %2384 = vmatpush1.bf16.msra.mxu0 %v2281
        %2385 = vmatprep.subr.bf16.mxu0 0
        %2386 = vmatpush1.bf16.msra.mxu0 %v2280
        %2387 = vmatprep.subr.bf16.mxu0 0
        %2388 = vmatpush1.bf16.msra.mxu0 %v2279
        %2389 = vmatprep.subr.bf16.mxu0 0
        %2390 = vmatpush2.bf16.msra.mxu0 %v2294
        %2391 = vmatprep.subr.bf16.mxu0 0
        %2392 = vmatpush2.bf16.msra.mxu0 %v2293
        %2393 = vmatprep.subr.bf16.mxu0 0
        %2394 = vmatpush2.bf16.msra.mxu0 %v2292
        %2395 = vmatprep.subr.bf16.mxu0 0
        %2396 = vmatpush2.bf16.msra.mxu0 %v2291
        %2397 = vmatprep.subr.bf16.mxu0 0
        %2398 = vmatpush2.bf16.msra.mxu0 %v2290
        %2399 = vmatprep.subr.bf16.mxu0 0
        %2400 = vmatpush2.bf16.msra.mxu0 %v2289
        %2401 = vmatprep.subr.bf16.mxu0 0
        %2402 = vmatpush2.bf16.msra.mxu0 %v2288
        %2403 = vmatprep.subr.bf16.mxu0 0
        %2404 = vmatpush2.bf16.msra.mxu0 %v2287
        %2405 = vmatprep.mubr.bf16.mxu0 %v1972
        %2406 = vmatmul.mubr.bf16.gmra.mxu0 %v1941
        %v2407 = vpop.f32.mrf.mxu0
        %v2408 = vadd.f32 %v2133, %v2407
        %v2409 = vpop.f32.mrf.mxu0
        %v2410 = vpop.f32.mrf.mxu0
        %v2411 = vadd.f32 %v2133, %v2410
        %v2412 = vpop.f32.mrf.mxu0
        %2413 = vmatprep.mubr.bf16.mxu0 %v1976
        %2414 = vmatmul.mubr.bf16.gmra.mxu0 %v1944
        %v2415 = vpop.f32.mrf.mxu0
        %v2416 = vadd.f32 %v2133, %v2415
        %v2417 = vpop.f32.mrf.mxu0
        %v2418 = vpop.f32.mrf.mxu0
        %v2419 = vadd.f32 %v2133, %v2418
        %v2420 = vpop.f32.mrf.mxu0
        %2421 = vmatprep.mubr.bf16.mxu0 %v1980
        %2422 = vmatmul.mubr.bf16.gmra.mxu0 %v1947
        %v2423 = vpop.f32.mrf.mxu0
        %v2424 = vadd.f32 %v2133, %v2423
        %v2425 = vpop.f32.mrf.mxu0
        %v2426 = vpop.f32.mrf.mxu0
        %v2427 = vadd.f32 %v2133, %v2426
        %v2428 = vpop.f32.mrf.mxu0
        %2429 = vmatprep.mubr.bf16.mxu0 %v1984
        %2430 = vmatmul.mubr.bf16.gmra.mxu0 %v1950
        %v2431 = vpop.f32.mrf.mxu0
        %v2432 = vadd.f32 %v2133, %v2431
        %v2433 = vpop.f32.mrf.mxu0
        %v2434 = vpop.f32.mrf.mxu0
        %v2435 = vadd.f32 %v2133, %v2434
        %v2436 = vpop.f32.mrf.mxu0
        %2437 = vmatprep.mubr.bf16.mxu0 %v1988
        %2438 = vmatmul.mubr.bf16.gmra.mxu0 %v1953
        %v2439 = vpop.f32.mrf.mxu0
        %v2440 = vadd.f32 %v2133, %v2439
        %v2441 = vpop.f32.mrf.mxu0
        %v2442 = vpop.f32.mrf.mxu0
        %v2443 = vadd.f32 %v2133, %v2442
        %v2444 = vpop.f32.mrf.mxu0
        %2445 = vmatprep.mubr.bf16.mxu0 %v1992
        %2446 = vmatmul.mubr.bf16.gmra.mxu0 %v1956
        %v2447 = vpop.f32.mrf.mxu0
        %v2448 = vadd.f32 %v2133, %v2447
        %v2449 = vpop.f32.mrf.mxu0
        %v2450 = vpop.f32.mrf.mxu0
        %v2451 = vadd.f32 %v2133, %v2450
        %v2452 = vpop.f32.mrf.mxu0
        %2453 = vmatprep.mubr.bf16.mxu0 %v1996
        %2454 = vmatmul.mubr.bf16.gmra.mxu0 %v1959
        %v2455 = vpop.f32.mrf.mxu0
        %v2456 = vadd.f32 %v2133, %v2455
        %v2457 = vpop.f32.mrf.mxu0
        %v2458 = vpop.f32.mrf.mxu0
        %v2459 = vadd.f32 %v2133, %v2458
        %v2460 = vpop.f32.mrf.mxu0
        %2461 = vmatprep.mubr.bf16.mxu0 %v2000
        %2462 = vmatmul.mubr.bf16.gmra.mxu0 %v1962
        %v2463 = vpop.f32.mrf.mxu0
        %v2464 = vadd.f32 %v2133, %v2463
        %v2465 = vpop.f32.mrf.mxu0
        %v2466 = vpop.f32.mrf.mxu0
        %v2467 = vadd.f32 %v2133, %v2466
        %v2468 = vpop.f32.mrf.mxu0
        %2469 = vmatprep.mubr.bf16.mxu0 %v2004
        %2470 = vmatmul.mubr.bf16.gmra.mxu0 %v1965
        %v2471 = vpop.f32.mrf.mxu0
        %v2472 = vadd.f32 %v2133, %v2471
        %v2473 = vpop.f32.mrf.mxu0
        %v2474 = vpop.f32.mrf.mxu0
        %v2475 = vadd.f32 %v2133, %v2474
        %v2476 = vpop.f32.mrf.mxu0
        %2477 = vmatprep.mubr.bf16.mxu0 %v2008
        %2478 = vmatmul.mubr.bf16.gmra.mxu0 %v1968
        %v2479 = vpop.f32.mrf.mxu0
        %v2480 = vadd.f32 %v2133, %v2479
        %v2481 = vpop.f32.mrf.mxu0
        %v2482 = vpop.f32.mrf.mxu0
        %v2483 = vadd.f32 %v2133, %v2482
        %v2484 = vpop.f32.mrf.mxu0
        %2485 = vdwg.mxu0
        %2486 = vmatprep.subr.bf16.mxu0 0
        %2487 = vmatpush1.bf16.msra.mxu0 %v2302
        %2488 = vmatprep.subr.bf16.mxu0 0
        %2489 = vmatpush1.bf16.msra.mxu0 %v2301
        %2490 = vmatprep.subr.bf16.mxu0 0
        %2491 = vmatpush1.bf16.msra.mxu0 %v2300
        %2492 = vmatprep.subr.bf16.mxu0 0
        %2493 = vmatpush1.bf16.msra.mxu0 %v2299
        %2494 = vmatprep.subr.bf16.mxu0 0
        %2495 = vmatpush1.bf16.msra.mxu0 %v2298
        %2496 = vmatprep.subr.bf16.mxu0 0
        %2497 = vmatpush1.bf16.msra.mxu0 %v2297
        %2498 = vmatprep.subr.bf16.mxu0 0
        %2499 = vmatpush1.bf16.msra.mxu0 %v2296
        %2500 = vmatprep.subr.bf16.mxu0 0
        %2501 = vmatpush1.bf16.msra.mxu0 %v2295
        %2502 = vmatprep.subr.bf16.mxu0 0
        %2503 = vmatpush2.bf16.msra.mxu0 %v2310
        %2504 = vmatprep.subr.bf16.mxu0 0
        %2505 = vmatpush2.bf16.msra.mxu0 %v2309
        %2506 = vmatprep.subr.bf16.mxu0 0
        %2507 = vmatpush2.bf16.msra.mxu0 %v2308
        %2508 = vmatprep.subr.bf16.mxu0 0
        %2509 = vmatpush2.bf16.msra.mxu0 %v2307
        %2510 = vmatprep.subr.bf16.mxu0 0
        %2511 = vmatpush2.bf16.msra.mxu0 %v2306
        %2512 = vmatprep.subr.bf16.mxu0 0
        %2513 = vmatpush2.bf16.msra.mxu0 %v2305
        %2514 = vmatprep.subr.bf16.mxu0 0
        %2515 = vmatpush2.bf16.msra.mxu0 %v2304
        %2516 = vmatprep.subr.bf16.mxu0 0
        %2517 = vmatpush2.bf16.msra.mxu0 %v2303
        %2518 = vmatprep.mubr.bf16.mxu0 %v1947
        %2519 = vmatmul.mubr.bf16.gmra.mxu0 %v2012
        %v2520 = vpop.f32.mrf.mxu0
        %v2521 = vadd.f32 %v2408, %v2520
        %v2522 = vpop.f32.mrf.mxu0
        %v2523 = vpop.f32.mrf.mxu0
        %v2524 = vadd.f32 %v2411, %v2523
        %v2525 = vpop.f32.mrf.mxu0
        %2526 = vmatprep.mubr.bf16.mxu0 %v1950
        %2527 = vmatmul.mubr.bf16.gmra.mxu0 %v2016
        %v2528 = vpop.f32.mrf.mxu0
        %v2529 = vadd.f32 %v2416, %v2528
        %v2530 = vpop.f32.mrf.mxu0
        %v2531 = vpop.f32.mrf.mxu0
        %v2532 = vadd.f32 %v2419, %v2531
        %v2533 = vpop.f32.mrf.mxu0
        %2534 = vmatprep.mubr.bf16.mxu0 %v1953
        %2535 = vmatmul.mubr.bf16.gmra.mxu0 %v2020
        %v2536 = vpop.f32.mrf.mxu0
        %v2537 = vadd.f32 %v2424, %v2536
        %v2538 = vpop.f32.mrf.mxu0
        %v2539 = vpop.f32.mrf.mxu0
        %v2540 = vadd.f32 %v2427, %v2539
        %v2541 = vpop.f32.mrf.mxu0
        %2542 = vmatprep.mubr.bf16.mxu0 %v1956
        %2543 = vmatmul.mubr.bf16.gmra.mxu0 %v2024
        %v2544 = vpop.f32.mrf.mxu0
        %v2545 = vadd.f32 %v2432, %v2544
        %v2546 = vpop.f32.mrf.mxu0
        %v2547 = vpop.f32.mrf.mxu0
        %v2548 = vadd.f32 %v2435, %v2547
        %v2549 = vpop.f32.mrf.mxu0
        %2550 = vmatprep.mubr.bf16.mxu0 %v1959
        %2551 = vmatmul.mubr.bf16.gmra.mxu0 %v2028
        %v2552 = vpop.f32.mrf.mxu0
        %v2553 = vadd.f32 %v2440, %v2552
        %v2554 = vpop.f32.mrf.mxu0
        %v2555 = vpop.f32.mrf.mxu0
        %v2556 = vadd.f32 %v2443, %v2555
        %v2557 = vpop.f32.mrf.mxu0
        %2558 = vmatprep.mubr.bf16.mxu0 %v1962
        %2559 = vmatmul.mubr.bf16.gmra.mxu0 %v2032
        %v2560 = vpop.f32.mrf.mxu0
        %v2561 = vadd.f32 %v2448, %v2560
        %v2562 = vpop.f32.mrf.mxu0
        %v2563 = vpop.f32.mrf.mxu0
        %v2564 = vadd.f32 %v2451, %v2563
        %v2565 = vpop.f32.mrf.mxu0
        %2566 = vmatprep.mubr.bf16.mxu0 %v1965
        %2567 = vmatmul.mubr.bf16.gmra.mxu0 %v2036
        %v2568 = vpop.f32.mrf.mxu0
        %v2569 = vadd.f32 %v2456, %v2568
        %v2570 = vpop.f32.mrf.mxu0
        %v2571 = vpop.f32.mrf.mxu0
        %v2572 = vadd.f32 %v2459, %v2571
        %v2573 = vpop.f32.mrf.mxu0
        %2574 = vmatprep.mubr.bf16.mxu0 %v1968
        %2575 = vmatmul.mubr.bf16.gmra.mxu0 %v2040
        %v2576 = vpop.f32.mrf.mxu0
        %v2577 = vadd.f32 %v2464, %v2576
        %v2578 = vpop.f32.mrf.mxu0
        %v2579 = vpop.f32.mrf.mxu0
        %v2580 = vadd.f32 %v2467, %v2579
        %v2581 = vpop.f32.mrf.mxu0
        %2582 = vmatprep.mubr.bf16.mxu0 %v2051
        %2583 = vmatmul.mubr.bf16.gmra.mxu0 %v2044
        %v2584 = vpop.f32.mrf.mxu0
        %v2585 = vadd.f32 %v2472, %v2584
        %v2586 = vpop.f32.mrf.mxu0
        %v2587 = vpop.f32.mrf.mxu0
        %v2588 = vadd.f32 %v2475, %v2587
        %v2589 = vpop.f32.mrf.mxu0
        %2590 = vmatprep.mubr.bf16.mxu0 %v2054
        %2591 = vmatmul.mubr.bf16.gmra.mxu0 %v2048
        %v2592 = vpop.f32.mrf.mxu0
        %v2593 = vadd.f32 %v2480, %v2592
        %v2594 = vpop.f32.mrf.mxu0
        %v2595 = vpop.f32.mrf.mxu0
        %v2596 = vadd.f32 %v2483, %v2595
        %v2597 = vpop.f32.mrf.mxu0
        %2598 = vdwg.mxu0
        %2599 = vmatprep.subr.bf16.mxu0 0
        %2600 = vmatpush1.bf16.msra.mxu0 0
        %2601 = vmatprep.subr.bf16.mxu0 0
        %2602 = vmatpush1.bf16.msra.mxu0 0
        %2603 = vmatprep.subr.bf16.mxu0 0
        %2604 = vmatpush1.bf16.msra.mxu0 0
        %2605 = vmatprep.subr.bf16.mxu0 0
        %2606 = vmatpush1.bf16.msra.mxu0 0
        %2607 = vmatprep.subr.bf16.mxu0 0
        %2608 = vmatpush1.bf16.msra.mxu0 %v2314
        %2609 = vmatprep.subr.bf16.mxu0 0
        %2610 = vmatpush1.bf16.msra.mxu0 %v2313
        %2611 = vmatprep.subr.bf16.mxu0 0
        %2612 = vmatpush1.bf16.msra.mxu0 %v2312
        %2613 = vmatprep.subr.bf16.mxu0 0
        %2614 = vmatpush1.bf16.msra.mxu0 %v2311
        %2615 = vmatprep.subr.bf16.mxu0 0
        %2616 = vmatpush2.bf16.msra.mxu0 0
        %2617 = vmatprep.subr.bf16.mxu0 0
        %2618 = vmatpush2.bf16.msra.mxu0 0
        %2619 = vmatprep.subr.bf16.mxu0 0
        %2620 = vmatpush2.bf16.msra.mxu0 0
        %2621 = vmatprep.subr.bf16.mxu0 0
        %2622 = vmatpush2.bf16.msra.mxu0 0
        %2623 = vmatprep.subr.bf16.mxu0 0
        %2624 = vmatpush2.bf16.msra.mxu0 0
        %2625 = vmatprep.subr.bf16.mxu0 0
        %2626 = vmatpush2.bf16.msra.mxu0 0
        %2627 = vmatprep.subr.bf16.mxu0 0
        %2628 = vmatpush2.bf16.msra.mxu0 0
        %2629 = vmatprep.subr.bf16.mxu0 0
        %2630 = vmatpush2.bf16.msra.mxu0 0
        %2631 = vmatprep.mubr.bf16.mxu0 0
        %2632 = vmatmul.mubr.bf16.gmra.mxu0 %v2351
        %v2633 = vpop.f32.mrf.mxu0
        %v2634 = vadd.f32 %v2521, %v2633
        %v2635 = vpop.f32.mrf.mxu0
        %v2636 = vpop.f32.mrf.mxu0
        %v2637 = vadd.f32 %v2524, %v2636
        %v2638 = vpop.f32.mrf.mxu0
        %2639 = vmatprep.mubr.bf16.mxu0 0
        %2640 = vmatmul.mubr.bf16.gmra.mxu0 %v2353
        %v2641 = vpop.f32.mrf.mxu0
        %v2642 = vadd.f32 %v2529, %v2641
        %v2643 = vpop.f32.mrf.mxu0
        %v2644 = vpop.f32.mrf.mxu0
        %v2645 = vadd.f32 %v2532, %v2644
        %v2646 = vpop.f32.mrf.mxu0
        %2647 = vmatprep.mubr.bf16.mxu0 0
        %2648 = vmatmul.mubr.bf16.gmra.mxu0 %v2355
        %v2649 = vpop.f32.mrf.mxu0
        %v2650 = vadd.f32 %v2537, %v2649
        %v2651 = vpop.f32.mrf.mxu0
        %v2652 = vpop.f32.mrf.mxu0
        %v2653 = vadd.f32 %v2540, %v2652
        %v2654 = vpop.f32.mrf.mxu0
        %2655 = vmatprep.mubr.bf16.mxu0 0
        %2656 = vmatmul.mubr.bf16.gmra.mxu0 %v2357
        %v2657 = vpop.f32.mrf.mxu0
        %v2658 = vadd.f32 %v2545, %v2657
        %v2659 = vpop.f32.mrf.mxu0
        %v2660 = vpop.f32.mrf.mxu0
        %v2661 = vadd.f32 %v2548, %v2660
        %v2662 = vpop.f32.mrf.mxu0
        %2663 = vmatprep.mubr.bf16.mxu0 0
        %2664 = vmatmul.mubr.bf16.gmra.mxu0 %v2359
        %v2665 = vpop.f32.mrf.mxu0
        %v2666 = vadd.f32 %v2553, %v2665
        %v2667 = vpop.f32.mrf.mxu0
        %v2668 = vpop.f32.mrf.mxu0
        %v2669 = vadd.f32 %v2556, %v2668
        %v2670 = vpop.f32.mrf.mxu0
        %2671 = vmatprep.mubr.bf16.mxu0 0
        %2672 = vmatmul.mubr.bf16.gmra.mxu0 %v2361
        %v2673 = vpop.f32.mrf.mxu0
        %v2674 = vadd.f32 %v2561, %v2673
        %v2675 = vpop.f32.mrf.mxu0
        %v2676 = vpop.f32.mrf.mxu0
        %v2677 = vadd.f32 %v2564, %v2676
        %v2678 = vpop.f32.mrf.mxu0
        %2679 = vmatprep.mubr.bf16.mxu0 0
        %2680 = vmatmul.mubr.bf16.gmra.mxu0 %v2363
        %v2681 = vpop.f32.mrf.mxu0
        %v2682 = vadd.f32 %v2569, %v2681
        %v2683 = vpop.f32.mrf.mxu0
        %v2684 = vpop.f32.mrf.mxu0
        %v2685 = vadd.f32 %v2572, %v2684
        %v2686 = vpop.f32.mrf.mxu0
        %2687 = vmatprep.mubr.bf16.mxu0 0
        %2688 = vmatmul.mubr.bf16.gmra.mxu0 %v2365
        %v2689 = vpop.f32.mrf.mxu0
        %v2690 = vadd.f32 %v2577, %v2689
        %v2691 = vpop.f32.mrf.mxu0
        %v2692 = vpop.f32.mrf.mxu0
        %v2693 = vadd.f32 %v2580, %v2692
        %v2694 = vpop.f32.mrf.mxu0
        %2695 = vmatprep.mubr.bf16.mxu0 0
        %2696 = vmatmul.mubr.bf16.gmra.mxu0 %v2368
        %v2697 = vpop.f32.mrf.mxu0
        %v2698 = vadd.f32 %v2585, %v2697
        %v2699 = vpop.f32.mrf.mxu0
        %v2700 = vpop.f32.mrf.mxu0
        %v2701 = vadd.f32 %v2588, %v2700
        %v2702 = vpop.f32.mrf.mxu0
        %2703 = vmatprep.mubr.bf16.mxu0 0
        %2704 = vmatmul.mubr.bf16.gmra.mxu0 %v2371
        %v2705 = vpop.f32.mrf.mxu0
        %v2706 = vadd.f32 %v2593, %v2705
        %v2707 = vpop.f32.mrf.mxu0
        %v2708 = vpop.f32.mrf.mxu0
        %v2709 = vadd.f32 %v2596, %v2708
        %v2710 = vpop.f32.mrf.mxu0
        %2711 = vdwg.mxu0
        %v2712 = vmax.f32 %v2634, 0.0
        %v2713 = vmax.f32 %v2637, 0.0
        %v2714 = vmax.f32 %v2642, 0.0
        %v2715 = vmax.f32 %v2645, 0.0
        %v2716 = vmax.f32 %v2650, 0.0
        %v2717 = vmax.f32 %v2653, 0.0
        %v2718 = vmax.f32 %v2658, 0.0
        %v2719 = vmax.f32 %v2661, 0.0
        %v2720 = vmax.f32 %v2666, 0.0
        %v2721 = vmax.f32 %v2669, 0.0
        %v2722 = vmax.f32 %v2674, 0.0
        %v2723 = vmax.f32 %v2677, 0.0
        %v2724 = vmax.f32 %v2682, 0.0
        %v2725 = vmax.f32 %v2685, 0.0
        %v2726 = vmax.f32 %v2690, 0.0
        %v2727 = vmax.f32 %v2693, 0.0
        %v2728 = vmax.f32 %v2698, 0.0
        %v2729 = vmax.f32 %v2701, 0.0
        %v2730 = vmax.f32 %v2706, 0.0
        %v2731 = vmax.f32 %v2709, 0.0
        %v2732 = vpack.c.bf16 %v2713, %v2712
        %v2733 = vpack.c.bf16 %v2715, %v2714
        %v2734 = vpack.c.bf16 %v2717, %v2716
        %v2735 = vpack.c.bf16 %v2719, %v2718
        %v2736 = vpack.c.bf16 %v2721, %v2720
        %v2737 = vpack.c.bf16 %v2723, %v2722
        %v2738 = vpack.c.bf16 %v2725, %v2724
        %v2739 = vpack.c.bf16 %v2727, %v2726
        %v2740 = vpack.c.bf16 %v2729, %v2728
        %v2741 = vpack.c.bf16 %v2731, %v2730
        %s2742 = ssub.s32 %s342, 1
        %v2743 = vstv %s2742
        %v2744 = vadd.s32 %v2743, 1
        %v2745 = vadd.s32 %v2743, 2
        %v2746 = vadd.s32 %v2743, 3
        %v2747 = vadd.s32 %v2743, 4
        %v2748 = vadd.s32 %v2743, 5
        %v2749 = vadd.s32 %v2743, 6
        %v2750 = vadd.s32 %v2743, 7
        %v2751 = vadd.s32 %v2743, 8
        %v2752 = vadd.s32 %v2743, 9
        %vm2753 = vcmp.ge.s32.totalorder %v2743, 0
        %vm2754 = vcmp.ge.s32.totalorder %v2744, 0
        %vm2755 = vcmp.ge.s32.totalorder %v2745, 0
        %vm2756 = vcmp.ge.s32.totalorder %v2746, 0
        %vm2757 = vcmp.ge.s32.totalorder %v2747, 0
        %vm2758 = vcmp.ge.s32.totalorder %v2748, 0
        %vm2759 = vcmp.ge.s32.totalorder %v2749, 0
        %vm2760 = vcmp.ge.s32.totalorder %v2750, 0
        %vm2761 = vcmp.ge.s32.totalorder %v2751, 0
        %vm2762 = vcmp.ge.s32.totalorder %v2752, 0
        %vm2763 = vcmp.lt.s32.totalorder %v2743, 16
        %vm2764 = vcmp.lt.s32.totalorder %v2744, 16
        %vm2765 = vcmp.lt.s32.totalorder %v2745, 16
        %vm2766 = vcmp.lt.s32.totalorder %v2746, 16
        %vm2767 = vcmp.lt.s32.totalorder %v2747, 16
        %vm2768 = vcmp.lt.s32.totalorder %v2748, 16
        %vm2769 = vcmp.lt.s32.totalorder %v2749, 16
        %vm2770 = vcmp.lt.s32.totalorder %v2750, 16
        %vm2771 = vcmp.lt.s32.totalorder %v2751, 16
        %vm2772 = vcmp.lt.s32.totalorder %v2752, 16
        %vm2773 = vmand %vm2753, %vm2763
        %vm2774 = vmand %vm2754, %vm2764
        %vm2775 = vmand %vm2755, %vm2765
        %vm2776 = vmand %vm2756, %vm2766
        %vm2777 = vmand %vm2757, %vm2767
        %vm2778 = vmand %vm2758, %vm2768
        %vm2779 = vmand %vm2759, %vm2769
        %vm2780 = vmand %vm2760, %vm2770
        %vm2781 = vmand %vm2761, %vm2771
        %vm2782 = vmand %vm2762, %vm2772
        %v2783 = vsel %vm2773, 1, 0
        %v2784 = vsel %vm2774, 1, 0
        %v2785 = vsel %vm2775, 1, 0
        %v2786 = vsel %vm2776, 1, 0
        %v2787 = vsel %vm2777, 1, 0
        %v2788 = vsel %vm2778, 1, 0
        %v2789 = vsel %vm2779, 1, 0
        %v2790 = vsel %vm2780, 1, 0
        %v2791 = vsel %vm2781, 1, 0
        %v2792 = vsel %vm2782, 1, 0
        %vm2793 = vcmp.eq.s32.totalorder %v2783, 1
        %vm2794 = vcmp.eq.s32.totalorder %v2784, 1
        %vm2795 = vcmp.eq.s32.totalorder %v2785, 1
        %vm2796 = vcmp.eq.s32.totalorder %v2786, 1
        %vm2797 = vcmp.eq.s32.totalorder %v2787, 1
        %vm2798 = vcmp.eq.s32.totalorder %v2788, 1
        %vm2799 = vcmp.eq.s32.totalorder %v2789, 1
        %vm2800 = vcmp.eq.s32.totalorder %v2790, 1
        %vm2801 = vcmp.eq.s32.totalorder %v2791, 1
        %vm2802 = vcmp.eq.s32.totalorder %v2792, 1
        %v2803 = vsel %vm2793, %v2732, 0
        %v2804 = vsel %vm2794, %v2733, 0
        %v2805 = vsel %vm2795, %v2734, 0
        %v2806 = vsel %vm2796, %v2735, 0
        %v2807 = vsel %vm2797, %v2736, 0
        %v2808 = vsel %vm2798, %v2737, 0
        %v2809 = vsel %vm2799, %v2738, 0
        %v2810 = vsel %vm2800, %v2739, 0
        %v2811 = vsel %vm2801, %v2740, 0
        %v2812 = vsel %vm2802, %v2741, 0
        %v2814 = vshrl.u32 %v2803, 16
        %v2816 = vrot.slane %v2814, 7
        %v2817 = vshll.u32 %v2803, 16
        %v2819 = vor.u32 %v2816, %v2817
        %v2821 = vshrl.u32 %v2804, 16
        %v2823 = vrot.slane %v2821, 7
        %v2824 = vshll.u32 %v2804, 16
        %v2826 = vor.u32 %v2823, %v2824
        %v2828 = vshrl.u32 %v2805, 16
        %v2830 = vrot.slane %v2828, 7
        %v2831 = vshll.u32 %v2805, 16
        %v2833 = vor.u32 %v2830, %v2831
        %v2835 = vshrl.u32 %v2806, 16
        %v2837 = vrot.slane %v2835, 7
        %v2838 = vshll.u32 %v2806, 16
        %v2840 = vor.u32 %v2837, %v2838
        %v2842 = vshrl.u32 %v2807, 16
        %v2844 = vrot.slane %v2842, 7
        %v2845 = vshll.u32 %v2807, 16
        %v2847 = vor.u32 %v2844, %v2845
        %v2849 = vshrl.u32 %v2808, 16
        %v2851 = vrot.slane %v2849, 7
        %v2852 = vshll.u32 %v2808, 16
        %v2854 = vor.u32 %v2851, %v2852
        %v2856 = vshrl.u32 %v2809, 16
        %v2858 = vrot.slane %v2856, 7
        %v2859 = vshll.u32 %v2809, 16
        %v2861 = vor.u32 %v2858, %v2859
        %v2863 = vshrl.u32 %v2810, 16
        %v2865 = vrot.slane %v2863, 7
        %v2866 = vshll.u32 %v2810, 16
        %v2868 = vor.u32 %v2865, %v2866
        %v2870 = vshrl.u32 %v2811, 16
        %v2872 = vrot.slane %v2870, 7
        %v2873 = vshll.u32 %v2811, 16
        %v2875 = vor.u32 %v2872, %v2873
        %v2877 = vshrl.u32 %v2812, 16
        %v2879 = vrot.slane %v2877, 7
        %v2880 = vshll.u32 %v2812, 16
        %v2882 = vor.u32 %v2879, %v2880
        %v2903 = vsel %vm572, 0, %v2819
        %v2904 = vsel %vm572, 0, %v2826
        %v2905 = vsel %vm572, 0, %v2833
        %v2906 = vsel %vm572, 0, %v2840
        %v2907 = vsel %vm572, 0, %v2847
        %v2908 = vsel %vm572, 0, %v2854
        %v2909 = vsel %vm572, 0, %v2861
        %v2910 = vsel %vm572, 0, %v2868
        %v2911 = vsel %vm572, 0, %v2875
        %v2912 = vsel %vm572, 0, %v2882
        %v2913 = vsel %vm572, %v2816, 0
        %v2914 = vsel %vm572, %v2823, 0
        %v2915 = vsel %vm572, %v2830, 0
        %v2916 = vsel %vm572, %v2837, 0
        %v2917 = vsel %vm572, %v2844, 0
        %v2918 = vsel %vm572, %v2851, 0
        %v2919 = vsel %vm572, %v2858, 0
        %v2920 = vsel %vm572, %v2865, 0
        %v2921 = vsel %vm572, %v2872, 0
        %v2922 = vsel %vm572, %v2879, 0
        %v2924 = vshrl.u32 %v2903, 16
        %v2926 = vshll.u32 %v2903, 16
        %v2928 = vrot.slane %v2926, 1
        %v2929 = vor.u32 %v2924, %v2928
        %v2931 = vshll.u32 %v2913, 16
        %v2933 = vrot.slane %v2931, 1
        %v2934 = vsel %vm601, %v2929, %v2933
        %v2936 = vshrl.u32 %v2904, 16
        %v2938 = vshll.u32 %v2904, 16
        %v2940 = vrot.slane %v2938, 1
        %v2941 = vor.u32 %v2936, %v2940
        %v2943 = vshll.u32 %v2914, 16
        %v2945 = vrot.slane %v2943, 1
        %v2946 = vsel %vm601, %v2941, %v2945
        %v2948 = vshrl.u32 %v2905, 16
        %v2950 = vshll.u32 %v2905, 16
        %v2952 = vrot.slane %v2950, 1
        %v2953 = vor.u32 %v2948, %v2952
        %v2955 = vshll.u32 %v2915, 16
        %v2957 = vrot.slane %v2955, 1
        %v2958 = vsel %vm601, %v2953, %v2957
        %v2960 = vshrl.u32 %v2906, 16
        %v2962 = vshll.u32 %v2906, 16
        %v2964 = vrot.slane %v2962, 1
        %v2965 = vor.u32 %v2960, %v2964
        %v2967 = vshll.u32 %v2916, 16
        %v2969 = vrot.slane %v2967, 1
        %v2970 = vsel %vm601, %v2965, %v2969
        %v2972 = vshrl.u32 %v2907, 16
        %v2974 = vshll.u32 %v2907, 16
        %v2976 = vrot.slane %v2974, 1
        %v2977 = vor.u32 %v2972, %v2976
        %v2979 = vshll.u32 %v2917, 16
        %v2981 = vrot.slane %v2979, 1
        %v2982 = vsel %vm601, %v2977, %v2981
        %v2984 = vshrl.u32 %v2908, 16
        %v2986 = vshll.u32 %v2908, 16
        %v2988 = vrot.slane %v2986, 1
        %v2989 = vor.u32 %v2984, %v2988
        %v2991 = vshll.u32 %v2918, 16
        %v2993 = vrot.slane %v2991, 1
        %v2994 = vsel %vm601, %v2989, %v2993
        %v2996 = vshrl.u32 %v2909, 16
        %v2998 = vshll.u32 %v2909, 16
        %v3000 = vrot.slane %v2998, 1
        %v3001 = vor.u32 %v2996, %v3000
        %v3003 = vshll.u32 %v2919, 16
        %v3005 = vrot.slane %v3003, 1
        %v3006 = vsel %vm601, %v3001, %v3005
        %v3008 = vshrl.u32 %v2910, 16
        %v3010 = vshll.u32 %v2910, 16
        %v3012 = vrot.slane %v3010, 1
        %v3013 = vor.u32 %v3008, %v3012
        %v3015 = vshll.u32 %v2920, 16
        %v3017 = vrot.slane %v3015, 1
        %v3018 = vsel %vm601, %v3013, %v3017
        %3019 = vrot.lane.b32.xlu0 %v2934, 64
        %v3020 = vpop.permute.xlu0 %3019
        %3021 = vrot.lane.b32.xlu0 %v2946, 64
        %v3022 = vpop.permute.xlu0 %3021
        %3023 = vrot.lane.b32.xlu0 %v2958, 64
        %v3024 = vpop.permute.xlu0 %3023
        %3025 = vrot.lane.b32.xlu0 %v2970, 64
        %v3026 = vpop.permute.xlu0 %3025
        %3027 = vrot.lane.b32.xlu0 %v2982, 64
        %v3028 = vpop.permute.xlu0 %3027
        %3029 = vrot.lane.b32.xlu0 %v2994, 64
        %v3030 = vpop.permute.xlu0 %3029
        %3031 = vrot.lane.b32.xlu0 %v3006, 64
        %v3032 = vpop.permute.xlu0 %3031
        %3033 = vrot.lane.b32.xlu0 %v3018, 64
        %v3034 = vpop.permute.xlu0 %3033
        %v3051 = vrot.slane %v2903, 1
        %v3052 = vrot.slane %v2913, 1
        %v3053 = vsel %vm794, %v3051, %v3052
        %v3054 = vrot.slane %v2904, 1
        %v3055 = vrot.slane %v2914, 1
        %v3056 = vsel %vm794, %v3054, %v3055
        %v3057 = vrot.slane %v2905, 1
        %v3058 = vrot.slane %v2915, 1
        %v3059 = vsel %vm794, %v3057, %v3058
        %v3060 = vrot.slane %v2906, 1
        %v3061 = vrot.slane %v2916, 1
        %v3062 = vsel %vm794, %v3060, %v3061
        %v3063 = vrot.slane %v2907, 1
        %v3064 = vrot.slane %v2917, 1
        %v3065 = vsel %vm794, %v3063, %v3064
        %v3066 = vrot.slane %v2908, 1
        %v3067 = vrot.slane %v2918, 1
        %v3068 = vsel %vm794, %v3066, %v3067
        %v3069 = vrot.slane %v2909, 1
        %v3070 = vrot.slane %v2919, 1
        %v3071 = vsel %vm794, %v3069, %v3070
        %v3072 = vrot.slane %v2910, 1
        %v3073 = vrot.slane %v2920, 1
        %v3074 = vsel %vm794, %v3072, %v3073
        %3076 = vrot.lane.b32.xlu0 %v2904, 64
        %v3077 = vpop.permute.xlu0 %3076
        %3078 = vrot.lane.b32.xlu0 %v2905, 64
        %v3079 = vpop.permute.xlu0 %3078
        %3080 = vrot.lane.b32.xlu0 %v2906, 64
        %v3081 = vpop.permute.xlu0 %3080
        %3082 = vrot.lane.b32.xlu0 %v2907, 64
        %v3083 = vpop.permute.xlu0 %3082
        %3084 = vrot.lane.b32.xlu0 %v2908, 64
        %v3085 = vpop.permute.xlu0 %3084
        %3086 = vrot.lane.b32.xlu0 %v2909, 64
        %v3087 = vpop.permute.xlu0 %3086
        %3088 = vrot.lane.b32.xlu0 %v2910, 64
        %v3089 = vpop.permute.xlu0 %3088
        %3090 = vrot.lane.b32.xlu0 %v2911, 64
        %v3091 = vpop.permute.xlu0 %3090
        %v3093 = vshrl.u32 %v2911, 16
        %v3095 = vshll.u32 %v2911, 16
        %v3097 = vrot.slane %v3095, 1
        %v3098 = vor.u32 %v3093, %v3097
        %v3100 = vshll.u32 %v2921, 16
        %v3102 = vrot.slane %v3100, 1
        %v3103 = vsel %vm601, %v3098, %v3102
        %v3105 = vrot.slane %v2911, 1
        %v3106 = vrot.slane %v2921, 1
        %v3107 = vsel %vm794, %v3105, %v3106
        %3108 = vrot.lane.b32.xlu0 %v3056, 64
        %v3109 = vpop.permute.xlu0 %3108
        %3110 = vrot.lane.b32.xlu0 %v3059, 64
        %v3111 = vpop.permute.xlu0 %3110
        %3112 = vrot.lane.b32.xlu0 %v3062, 64
        %v3113 = vpop.permute.xlu0 %3112
        %3114 = vrot.lane.b32.xlu0 %v3065, 64
        %v3115 = vpop.permute.xlu0 %3114
        %3116 = vrot.lane.b32.xlu0 %v3068, 64
        %v3117 = vpop.permute.xlu0 %3116
        %3118 = vrot.lane.b32.xlu0 %v3071, 64
        %v3119 = vpop.permute.xlu0 %3118
        %3120 = vrot.lane.b32.xlu0 %v3074, 64
        %v3121 = vpop.permute.xlu0 %3120
        %3122 = vrot.lane.b32.xlu0 %v3107, 64
        %v3123 = vpop.permute.xlu0 %3122
        %v3125 = vshrl.u32 %v2912, 16
        %v3127 = vshll.u32 %v2912, 16
        %v3129 = vrot.slane %v3127, 1
        %v3130 = vor.u32 %v3125, %v3129
        %v3132 = vshll.u32 %v2922, 16
        %v3134 = vrot.slane %v3132, 1
        %v3135 = vsel %vm601, %v3130, %v3134
        %3136 = vrot.lane.b32.xlu0 %v3103, 64
        %v3137 = vpop.permute.xlu0 %3136
        %3138 = vrot.lane.b32.xlu0 %v3135, 64
        %v3139 = vpop.permute.xlu0 %3138
        %v3142 = vrot.slane %v2912, 1
        %v3143 = vrot.slane %v2922, 1
        %v3144 = vsel %vm794, %v3142, %v3143
        %v3146 = vsel %vm1939, %v2903, %v3020
        %v3149 = vsel %vm1939, %v2904, %v3022
        %v3152 = vsel %vm1939, %v2905, %v3024
        %v3155 = vsel %vm1939, %v2906, %v3026
        %v3158 = vsel %vm1939, %v2907, %v3028
        %v3161 = vsel %vm1939, %v2908, %v3030
        %v3164 = vsel %vm1939, %v2909, %v3032
        %v3167 = vsel %vm1939, %v2910, %v3034
        %v3171 = vsel %vm1939, %v3053, %v3077
        %v3175 = vsel %vm1939, %v3056, %v3079
        %v3179 = vsel %vm1939, %v3059, %v3081
        %v3183 = vsel %vm1939, %v3062, %v3083
        %v3187 = vsel %vm1939, %v3065, %v3085
        %v3191 = vsel %vm1939, %v3068, %v3087
        %v3195 = vsel %vm1939, %v3071, %v3089
        %v3199 = vsel %vm1939, %v3074, %v3091
        %v3203 = vsel %vm1939, %v2946, %v3109
        %v3207 = vsel %vm1939, %v2958, %v3111
        %v3211 = vsel %vm1939, %v2970, %v3113
        %v3215 = vsel %vm1939, %v2982, %v3115
        %v3219 = vsel %vm1939, %v2994, %v3117
        %v3223 = vsel %vm1939, %v3006, %v3119
        %v3227 = vsel %vm1939, %v3018, %v3121
        %v3231 = vsel %vm1939, %v3103, %v3123
        %v3234 = vsel %vm1939, %v2911, %v3137
        %v3237 = vsel %vm1939, %v2912, %v3139
        %v3239 = vld [vmem:[%s5] sm:$0xf]
        %v3240 = vld [vmem:[%s5 + $0x4] sm:$0xf]
        %v3241 = vld [vmem:[%s5 + $0x8] sm:$0xf]
        %v3242 = vld [vmem:[%s5 + $0xc] sm:$0xf]
        %v3243 = vld [vmem:[%s5 + $0x10] sm:$0xf]
        %v3244 = vld [vmem:[%s5 + $0x14] sm:$0xf]
        %v3245 = vld [vmem:[%s5 + $0x18] sm:$0xf]
        %v3246 = vld [vmem:[%s5 + $0x1c] sm:$0xf]
        %v3247 = vld [vmem:[%s5 + $0x20] sm:$0xf]
        %v3248 = vld [vmem:[%s5 + $0x24] sm:$0xf]
        %v3249 = vld [vmem:[%s5 + $0x28] sm:$0xf]
        %v3250 = vld [vmem:[%s5 + $0x2c] sm:$0xf]
        %v3251 = vld [vmem:[%s5 + $0x30] sm:$0xf]
        %v3252 = vld [vmem:[%s5 + $0x34] sm:$0xf]
        %v3253 = vld [vmem:[%s5 + $0x38] sm:$0xf]
        %v3254 = vld [vmem:[%s5 + $0x3c] sm:$0xf]
        %v3255 = vld [vmem:[%s5 + $0x40] sm:$0xf]
        %v3256 = vld [vmem:[%s5 + $0x44] sm:$0xf]
        %v3257 = vld [vmem:[%s5 + $0x48] sm:$0xf]
        %v3258 = vld [vmem:[%s5 + $0x4c] sm:$0xf]
        %v3259 = vld [vmem:[%s5 + $0x50] sm:$0xf]
        %v3260 = vld [vmem:[%s5 + $0x54] sm:$0xf]
        %v3261 = vld [vmem:[%s5 + $0x58] sm:$0xf]
        %v3262 = vld [vmem:[%s5 + $0x5c] sm:$0xf]
        %v3263 = vld [vmem:[%s5 + $0x60] sm:$0xf]
        %v3264 = vld [vmem:[%s5 + $0x64] sm:$0xf]
        %v3265 = vld [vmem:[%s5 + $0x68] sm:$0xf]
        %v3266 = vld [vmem:[%s5 + $0x6c] sm:$0xf]
        %v3267 = vld [vmem:[%s5 + $0x70] sm:$0xf]
        %v3268 = vld [vmem:[%s5 + $0x74] sm:$0xf]
        %v3269 = vld [vmem:[%s5 + $0x78] sm:$0xf]
        %v3270 = vld [vmem:[%s5 + $0x7c] sm:$0xf]
        %v3271 = vld [vmem:[%s5 + $0x80] sm:$0xf]
        %v3272 = vld [vmem:[%s5 + $0x84] sm:$0xf]
        %v3273 = vld [vmem:[%s5 + $0x88] sm:$0xf]
        %v3274 = vld [vmem:[%s5 + $0x8c] sm:$0xf]
        %v3275 = vld [vmem:[%s5 + $0x90] sm:$0xf]
        %v3276 = vld [vmem:[%s5 + $0x94] sm:$0xf]
        %v3277 = vld [vmem:[%s5 + $0x98] sm:$0xf]
        %v3278 = vld [vmem:[%s5 + $0x9c] sm:$0xf]
        %v3279 = vld [vmem:[%s5 + $0xa0] sm:$0xf]
        %v3280 = vld [vmem:[%s5 + $0xa4] sm:$0xf]
        %v3281 = vld [vmem:[%s5 + $0xa8] sm:$0xf]
        %v3282 = vld [vmem:[%s5 + $0xac] sm:$0xf]
        %v3283 = vld [vmem:[%s5 + $0xb0] sm:$0xf]
        %v3284 = vld [vmem:[%s5 + $0xb4] sm:$0xf]
        %v3285 = vld [vmem:[%s5 + $0xb8] sm:$0xf]
        %v3286 = vld [vmem:[%s5 + $0xbc] sm:$0xf]
        %v3287 = vld [vmem:[%s5 + $0xc0] sm:$0xf]
        %v3288 = vld [vmem:[%s5 + $0xc4] sm:$0xf]
        %v3289 = vld [vmem:[%s5 + $0xc8] sm:$0xf]
        %v3290 = vld [vmem:[%s5 + $0xcc] sm:$0xf]
        %v3291 = vld [vmem:[%s5 + $0xd0] sm:$0xf]
        %v3292 = vld [vmem:[%s5 + $0xd4] sm:$0xf]
        %v3293 = vld [vmem:[%s5 + $0xd8] sm:$0xf]
        %v3294 = vld [vmem:[%s5 + $0xdc] sm:$0xf]
        %v3295 = vld [vmem:[%s5 + $0xe0] sm:$0xf]
        %v3296 = vld [vmem:[%s5 + $0xe4] sm:$0xf]
        %v3297 = vld [vmem:[%s5 + $0xe8] sm:$0xf]
        %v3298 = vld [vmem:[%s5 + $0xec] sm:$0xf]
        %v3299 = vld [vmem:[%s5 + $0xf0] sm:$0xf]
        %v3300 = vld [vmem:[%s5 + $0xf4] sm:$0xf]
        %v3301 = vld [vmem:[%s5 + $0xf8] sm:$0xf]
        %v3302 = vld [vmem:[%s5 + $0xfc] sm:$0xf]
        %v3303 = vld [vmem:[%s5 + $0x100] sm:$0xf]
        %v3304 = vld [vmem:[%s5 + $0x104] sm:$0xf]
        %v3305 = vld [vmem:[%s5 + $0x108] sm:$0xf]
        %v3306 = vld [vmem:[%s5 + $0x10c] sm:$0xf]
        %v3307 = vld [vmem:[%s5 + $0x110] sm:$0xf]
        %v3308 = vld [vmem:[%s5 + $0x114] sm:$0xf]
        %v3309 = vld [vmem:[%s5 + $0x118] sm:$0xf]
        %v3310 = vld [vmem:[%s5 + $0x11c] sm:$0xf]
        %v3311 = vld [vmem:[%s6] sm:$0x1]
        %v3313 = vlaneseq
        %v3314 = vshrl.u32 %v3313, 7
        %v3315 = vsub.s32 0, %v3314
        %v3316 = vrot.slane %v3311, %v3315
        %v3390 = vunpack.c.l.b16 %v3239
        %v3391 = vunpack.c.l.b16 %v3240
        %v3392 = vunpack.c.l.b16 %v3241
        %v3393 = vunpack.c.l.b16 %v3242
        %v3394 = vunpack.c.l.b16 %v3243
        %v3395 = vunpack.c.l.b16 %v3244
        %v3396 = vunpack.c.l.b16 %v3245
        %v3397 = vunpack.c.l.b16 %v3246
        %v3398 = vunpack.c.l.b16 %v3247
        %v3399 = vunpack.c.l.b16 %v3248
        %v3400 = vunpack.c.l.b16 %v3249
        %v3401 = vunpack.c.l.b16 %v3250
        %v3402 = vunpack.c.l.b16 %v3251
        %v3403 = vunpack.c.l.b16 %v3252
        %v3404 = vunpack.c.l.b16 %v3253
        %v3405 = vunpack.c.l.b16 %v3254
        %v3406 = vunpack.c.l.b16 %v3255
        %v3407 = vunpack.c.l.b16 %v3256
        %v3408 = vunpack.c.l.b16 %v3257
        %v3409 = vunpack.c.l.b16 %v3258
        %v3410 = vunpack.c.l.b16 %v3259
        %v3411 = vunpack.c.l.b16 %v3260
        %v3412 = vunpack.c.l.b16 %v3261
        %v3413 = vunpack.c.l.b16 %v3262
        %v3414 = vunpack.c.l.b16 %v3263
        %v3415 = vunpack.c.l.b16 %v3264
        %v3416 = vunpack.c.l.b16 %v3265
        %v3417 = vunpack.c.l.b16 %v3266
        %v3418 = vunpack.c.l.b16 %v3267
        %v3419 = vunpack.c.l.b16 %v3268
        %v3420 = vunpack.c.l.b16 %v3269
        %v3421 = vunpack.c.l.b16 %v3270
        %v3422 = vunpack.c.l.b16 %v3271
        %v3423 = vunpack.c.l.b16 %v3272
        %v3424 = vunpack.c.l.b16 %v3273
        %v3425 = vunpack.c.l.b16 %v3274
        %v3426 = vunpack.c.l.b16 %v3275
        %v3427 = vunpack.c.l.b16 %v3276
        %v3428 = vunpack.c.l.b16 %v3277
        %v3429 = vunpack.c.l.b16 %v3278
        %v3430 = vunpack.c.l.b16 %v3279
        %v3431 = vunpack.c.l.b16 %v3280
        %v3432 = vunpack.c.l.b16 %v3281
        %v3433 = vunpack.c.l.b16 %v3282
        %v3434 = vunpack.c.l.b16 %v3283
        %v3435 = vunpack.c.l.b16 %v3284
        %v3436 = vunpack.c.l.b16 %v3285
        %v3437 = vunpack.c.l.b16 %v3286
        %v3438 = vunpack.c.l.b16 %v3287
        %v3439 = vunpack.c.l.b16 %v3288
        %v3440 = vunpack.c.l.b16 %v3289
        %v3441 = vunpack.c.l.b16 %v3290
        %v3442 = vunpack.c.l.b16 %v3291
        %v3443 = vunpack.c.l.b16 %v3292
        %v3444 = vunpack.c.l.b16 %v3293
        %v3445 = vunpack.c.l.b16 %v3294
        %v3446 = vunpack.c.l.b16 %v3295
        %v3447 = vunpack.c.l.b16 %v3296
        %v3448 = vunpack.c.l.b16 %v3297
        %v3449 = vunpack.c.l.b16 %v3298
        %v3450 = vunpack.c.l.b16 %v3299
        %v3451 = vunpack.c.l.b16 %v3300
        %v3452 = vunpack.c.l.b16 %v3301
        %v3453 = vunpack.c.l.b16 %v3302
        %v3454 = vunpack.c.l.b16 %v3303
        %v3455 = vunpack.c.l.b16 %v3304
        %v3456 = vunpack.c.l.b16 %v3305
        %v3457 = vunpack.c.l.b16 %v3306
        %v3458 = vunpack.c.l.b16 %v3307
        %v3459 = vunpack.c.l.b16 %v3308
        %v3460 = vunpack.c.l.b16 %v3309
        %v3461 = vunpack.c.l.b16 %v3310
        %v3462 = vpack.c.b16 %v3391, %v3390
        %v3463 = vpack.c.b16 %v3393, %v3392
        %v3464 = vpack.c.b16 %v3395, %v3394
        %v3465 = vpack.c.b16 %v3397, %v3396
        %v3466 = vpack.c.b16 %v3399, %v3398
        %v3467 = vpack.c.b16 %v3401, %v3400
        %v3468 = vpack.c.b16 %v3403, %v3402
        %v3469 = vpack.c.b16 %v3405, %v3404
        %v3470 = vpack.c.b16 %v3407, %v3406
        %v3471 = vpack.c.b16 %v3409, %v3408
        %v3472 = vpack.c.b16 %v3411, %v3410
        %v3473 = vpack.c.b16 %v3413, %v3412
        %v3474 = vpack.c.b16 %v3415, %v3414
        %v3475 = vpack.c.b16 %v3417, %v3416
        %v3476 = vpack.c.b16 %v3419, %v3418
        %v3477 = vpack.c.b16 %v3421, %v3420
        %v3478 = vpack.c.b16 %v3423, %v3422
        %v3479 = vpack.c.b16 %v3425, %v3424
        %v3480 = vpack.c.b16 %v3427, %v3426
        %v3481 = vpack.c.b16 %v3429, %v3428
        %v3482 = vpack.c.b16 %v3431, %v3430
        %v3483 = vpack.c.b16 %v3433, %v3432
        %v3484 = vpack.c.b16 %v3435, %v3434
        %v3485 = vpack.c.b16 %v3437, %v3436
        %v3486 = vpack.c.b16 %v3439, %v3438
        %v3487 = vpack.c.b16 %v3441, %v3440
        %v3488 = vpack.c.b16 %v3443, %v3442
        %v3489 = vpack.c.b16 %v3445, %v3444
        %v3490 = vpack.c.b16 %v3447, %v3446
        %v3491 = vpack.c.b16 %v3449, %v3448
        %v3492 = vpack.c.b16 %v3451, %v3450
        %v3493 = vpack.c.b16 %v3453, %v3452
        %v3494 = vpack.c.b16 %v3455, %v3454
        %v3495 = vpack.c.b16 %v3457, %v3456
        %v3496 = vpack.c.b16 %v3459, %v3458
        %v3497 = vpack.c.b16 %v3461, %v3460
        %v3534 = vsel %vm1939, %v3059, 0
        %v3536 = vsel %vm1939, %v3062, 0
        %v3538 = vsel %vm1939, %v3065, 0
        %v3540 = vsel %vm1939, %v3068, 0
        %v3542 = vsel %vm1939, %v3071, 0
        %v3544 = vsel %vm1939, %v3074, 0
        %v3547 = vsel %vm1939, %v3107, 0
        %v3550 = vsel %vm1939, %v3144, 0
        %3552 = vmatprep.subr.bf16.mxu0 0
        %3553 = vmatpush1.bf16.msra.mxu0 %v3469
        %3554 = vmatprep.subr.bf16.mxu0 0
        %3555 = vmatpush1.bf16.msra.mxu0 %v3468
        %3556 = vmatprep.subr.bf16.mxu0 0
        %3557 = vmatpush1.bf16.msra.mxu0 %v3467
        %3558 = vmatprep.subr.bf16.mxu0 0
        %3559 = vmatpush1.bf16.msra.mxu0 %v3466
        %3560 = vmatprep.subr.bf16.mxu0 0
        %3561 = vmatpush1.bf16.msra.mxu0 %v3465
        %3562 = vmatprep.subr.bf16.mxu0 0
        %3563 = vmatpush1.bf16.msra.mxu0 %v3464
        %3564 = vmatprep.subr.bf16.mxu0 0
        %3565 = vmatpush1.bf16.msra.mxu0 %v3463
        %3566 = vmatprep.subr.bf16.mxu0 0
        %3567 = vmatpush1.bf16.msra.mxu0 %v3462
        %3568 = vmatprep.subr.bf16.mxu0 0
        %3569 = vmatpush2.bf16.msra.mxu0 %v3477
        %3570 = vmatprep.subr.bf16.mxu0 0
        %3571 = vmatpush2.bf16.msra.mxu0 %v3476
        %3572 = vmatprep.subr.bf16.mxu0 0
        %3573 = vmatpush2.bf16.msra.mxu0 %v3475
        %3574 = vmatprep.subr.bf16.mxu0 0
        %3575 = vmatpush2.bf16.msra.mxu0 %v3474
        %3576 = vmatprep.subr.bf16.mxu0 0
        %3577 = vmatpush2.bf16.msra.mxu0 %v3473
        %3578 = vmatprep.subr.bf16.mxu0 0
        %3579 = vmatpush2.bf16.msra.mxu0 %v3472
        %3580 = vmatprep.subr.bf16.mxu0 0
        %3581 = vmatpush2.bf16.msra.mxu0 %v3471
        %3582 = vmatprep.subr.bf16.mxu0 0
        %3583 = vmatpush2.bf16.msra.mxu0 %v3470
        %3584 = vmatprep.mubr.bf16.mxu0 %v3171
        %3585 = vmatmul.mubr.bf16.gmra.mxu0 %v3146
        %v3586 = vpop.f32.mrf.mxu0
        %v3587 = vadd.f32 %v3316, %v3586
        %v3588 = vpop.f32.mrf.mxu0
        %v3589 = vpop.f32.mrf.mxu0
        %v3590 = vadd.f32 %v3316, %v3589
        %v3591 = vpop.f32.mrf.mxu0
        %3592 = vmatprep.mubr.bf16.mxu0 %v3175
        %3593 = vmatmul.mubr.bf16.gmra.mxu0 %v3149
        %v3594 = vpop.f32.mrf.mxu0
        %v3595 = vadd.f32 %v3316, %v3594
        %v3596 = vpop.f32.mrf.mxu0
        %v3597 = vpop.f32.mrf.mxu0
        %v3598 = vadd.f32 %v3316, %v3597
        %v3599 = vpop.f32.mrf.mxu0
        %3600 = vmatprep.mubr.bf16.mxu0 %v3179
        %3601 = vmatmul.mubr.bf16.gmra.mxu0 %v3152
        %v3602 = vpop.f32.mrf.mxu0
        %v3603 = vadd.f32 %v3316, %v3602
        %v3604 = vpop.f32.mrf.mxu0
        %v3605 = vpop.f32.mrf.mxu0
        %v3606 = vadd.f32 %v3316, %v3605
        %v3607 = vpop.f32.mrf.mxu0
        %3608 = vmatprep.mubr.bf16.mxu0 %v3183
        %3609 = vmatmul.mubr.bf16.gmra.mxu0 %v3155
        %v3610 = vpop.f32.mrf.mxu0
        %v3611 = vadd.f32 %v3316, %v3610
        %v3612 = vpop.f32.mrf.mxu0
        %v3613 = vpop.f32.mrf.mxu0
        %v3614 = vadd.f32 %v3316, %v3613
        %v3615 = vpop.f32.mrf.mxu0
        %3616 = vmatprep.mubr.bf16.mxu0 %v3187
        %3617 = vmatmul.mubr.bf16.gmra.mxu0 %v3158
        %v3618 = vpop.f32.mrf.mxu0
        %v3619 = vadd.f32 %v3316, %v3618
        %v3620 = vpop.f32.mrf.mxu0
        %v3621 = vpop.f32.mrf.mxu0
        %v3622 = vadd.f32 %v3316, %v3621
        %v3623 = vpop.f32.mrf.mxu0
        %3624 = vmatprep.mubr.bf16.mxu0 %v3191
        %3625 = vmatmul.mubr.bf16.gmra.mxu0 %v3161
        %v3626 = vpop.f32.mrf.mxu0
        %v3627 = vadd.f32 %v3316, %v3626
        %v3628 = vpop.f32.mrf.mxu0
        %v3629 = vpop.f32.mrf.mxu0
        %v3630 = vadd.f32 %v3316, %v3629
        %v3631 = vpop.f32.mrf.mxu0
        %3632 = vmatprep.mubr.bf16.mxu0 %v3195
        %3633 = vmatmul.mubr.bf16.gmra.mxu0 %v3164
        %v3634 = vpop.f32.mrf.mxu0
        %v3635 = vadd.f32 %v3316, %v3634
        %v3636 = vpop.f32.mrf.mxu0
        %v3637 = vpop.f32.mrf.mxu0
        %v3638 = vadd.f32 %v3316, %v3637
        %v3639 = vpop.f32.mrf.mxu0
        %3640 = vmatprep.mubr.bf16.mxu0 %v3199
        %3641 = vmatmul.mubr.bf16.gmra.mxu0 %v3167
        %v3642 = vpop.f32.mrf.mxu0
        %v3643 = vadd.f32 %v3316, %v3642
        %v3644 = vpop.f32.mrf.mxu0
        %v3645 = vpop.f32.mrf.mxu0
        %v3646 = vadd.f32 %v3316, %v3645
        %v3647 = vpop.f32.mrf.mxu0
        %3648 = vdwg.mxu0
        %3649 = vmatprep.subr.bf16.mxu0 0
        %3650 = vmatpush1.bf16.msra.mxu0 %v3485
        %3651 = vmatprep.subr.bf16.mxu0 0
        %3652 = vmatpush1.bf16.msra.mxu0 %v3484
        %3653 = vmatprep.subr.bf16.mxu0 0
        %3654 = vmatpush1.bf16.msra.mxu0 %v3483
        %3655 = vmatprep.subr.bf16.mxu0 0
        %3656 = vmatpush1.bf16.msra.mxu0 %v3482
        %3657 = vmatprep.subr.bf16.mxu0 0
        %3658 = vmatpush1.bf16.msra.mxu0 %v3481
        %3659 = vmatprep.subr.bf16.mxu0 0
        %3660 = vmatpush1.bf16.msra.mxu0 %v3480
        %3661 = vmatprep.subr.bf16.mxu0 0
        %3662 = vmatpush1.bf16.msra.mxu0 %v3479
        %3663 = vmatprep.subr.bf16.mxu0 0
        %3664 = vmatpush1.bf16.msra.mxu0 %v3478
        %3665 = vmatprep.subr.bf16.mxu0 0
        %3666 = vmatpush2.bf16.msra.mxu0 %v3493
        %3667 = vmatprep.subr.bf16.mxu0 0
        %3668 = vmatpush2.bf16.msra.mxu0 %v3492
        %3669 = vmatprep.subr.bf16.mxu0 0
        %3670 = vmatpush2.bf16.msra.mxu0 %v3491
        %3671 = vmatprep.subr.bf16.mxu0 0
        %3672 = vmatpush2.bf16.msra.mxu0 %v3490
        %3673 = vmatprep.subr.bf16.mxu0 0
        %3674 = vmatpush2.bf16.msra.mxu0 %v3489
        %3675 = vmatprep.subr.bf16.mxu0 0
        %3676 = vmatpush2.bf16.msra.mxu0 %v3488
        %3677 = vmatprep.subr.bf16.mxu0 0
        %3678 = vmatpush2.bf16.msra.mxu0 %v3487
        %3679 = vmatprep.subr.bf16.mxu0 0
        %3680 = vmatpush2.bf16.msra.mxu0 %v3486
        %3681 = vmatprep.mubr.bf16.mxu0 %v3152
        %3682 = vmatmul.mubr.bf16.gmra.mxu0 %v3203
        %v3683 = vpop.f32.mrf.mxu0
        %v3684 = vadd.f32 %v3587, %v3683
        %v3685 = vpop.f32.mrf.mxu0
        %v3686 = vpop.f32.mrf.mxu0
        %v3687 = vadd.f32 %v3590, %v3686
        %v3688 = vpop.f32.mrf.mxu0
        %3689 = vmatprep.mubr.bf16.mxu0 %v3155
        %3690 = vmatmul.mubr.bf16.gmra.mxu0 %v3207
        %v3691 = vpop.f32.mrf.mxu0
        %v3692 = vadd.f32 %v3595, %v3691
        %v3693 = vpop.f32.mrf.mxu0
        %v3694 = vpop.f32.mrf.mxu0
        %v3695 = vadd.f32 %v3598, %v3694
        %v3696 = vpop.f32.mrf.mxu0
        %3697 = vmatprep.mubr.bf16.mxu0 %v3158
        %3698 = vmatmul.mubr.bf16.gmra.mxu0 %v3211
        %v3699 = vpop.f32.mrf.mxu0
        %v3700 = vadd.f32 %v3603, %v3699
        %v3701 = vpop.f32.mrf.mxu0
        %v3702 = vpop.f32.mrf.mxu0
        %v3703 = vadd.f32 %v3606, %v3702
        %v3704 = vpop.f32.mrf.mxu0
        %3705 = vmatprep.mubr.bf16.mxu0 %v3161
        %3706 = vmatmul.mubr.bf16.gmra.mxu0 %v3215
        %v3707 = vpop.f32.mrf.mxu0
        %v3708 = vadd.f32 %v3611, %v3707
        %v3709 = vpop.f32.mrf.mxu0
        %v3710 = vpop.f32.mrf.mxu0
        %v3711 = vadd.f32 %v3614, %v3710
        %v3712 = vpop.f32.mrf.mxu0
        %3713 = vmatprep.mubr.bf16.mxu0 %v3164
        %3714 = vmatmul.mubr.bf16.gmra.mxu0 %v3219
        %v3715 = vpop.f32.mrf.mxu0
        %v3716 = vadd.f32 %v3619, %v3715
        %v3717 = vpop.f32.mrf.mxu0
        %v3718 = vpop.f32.mrf.mxu0
        %v3719 = vadd.f32 %v3622, %v3718
        %v3720 = vpop.f32.mrf.mxu0
        %3721 = vmatprep.mubr.bf16.mxu0 %v3167
        %3722 = vmatmul.mubr.bf16.gmra.mxu0 %v3223
        %v3723 = vpop.f32.mrf.mxu0
        %v3724 = vadd.f32 %v3627, %v3723
        %v3725 = vpop.f32.mrf.mxu0
        %v3726 = vpop.f32.mrf.mxu0
        %v3727 = vadd.f32 %v3630, %v3726
        %v3728 = vpop.f32.mrf.mxu0
        %3729 = vmatprep.mubr.bf16.mxu0 %v3234
        %3730 = vmatmul.mubr.bf16.gmra.mxu0 %v3227
        %v3731 = vpop.f32.mrf.mxu0
        %v3732 = vadd.f32 %v3635, %v3731
        %v3733 = vpop.f32.mrf.mxu0
        %v3734 = vpop.f32.mrf.mxu0
        %v3735 = vadd.f32 %v3638, %v3734
        %v3736 = vpop.f32.mrf.mxu0
        %3737 = vmatprep.mubr.bf16.mxu0 %v3237
        %3738 = vmatmul.mubr.bf16.gmra.mxu0 %v3231
        %v3739 = vpop.f32.mrf.mxu0
        %v3740 = vadd.f32 %v3643, %v3739
        %v3741 = vpop.f32.mrf.mxu0
        %v3742 = vpop.f32.mrf.mxu0
        %v3743 = vadd.f32 %v3646, %v3742
        %v3744 = vpop.f32.mrf.mxu0
        %3745 = vdwg.mxu0
        %3746 = vmatprep.subr.bf16.mxu0 0
        %3747 = vmatpush1.bf16.msra.mxu0 0
        %3748 = vmatprep.subr.bf16.mxu0 0
        %3749 = vmatpush1.bf16.msra.mxu0 0
        %3750 = vmatprep.subr.bf16.mxu0 0
        %3751 = vmatpush1.bf16.msra.mxu0 0
        %3752 = vmatprep.subr.bf16.mxu0 0
        %3753 = vmatpush1.bf16.msra.mxu0 0
        %3754 = vmatprep.subr.bf16.mxu0 0
        %3755 = vmatpush1.bf16.msra.mxu0 %v3497
        %3756 = vmatprep.subr.bf16.mxu0 0
        %3757 = vmatpush1.bf16.msra.mxu0 %v3496
        %3758 = vmatprep.subr.bf16.mxu0 0
        %3759 = vmatpush1.bf16.msra.mxu0 %v3495
        %3760 = vmatprep.subr.bf16.mxu0 0
        %3761 = vmatpush1.bf16.msra.mxu0 %v3494
        %3762 = vmatprep.subr.bf16.mxu0 0
        %3763 = vmatpush2.bf16.msra.mxu0 0
        %3764 = vmatprep.subr.bf16.mxu0 0
        %3765 = vmatpush2.bf16.msra.mxu0 0
        %3766 = vmatprep.subr.bf16.mxu0 0
        %3767 = vmatpush2.bf16.msra.mxu0 0
        %3768 = vmatprep.subr.bf16.mxu0 0
        %3769 = vmatpush2.bf16.msra.mxu0 0
        %3770 = vmatprep.subr.bf16.mxu0 0
        %3771 = vmatpush2.bf16.msra.mxu0 0
        %3772 = vmatprep.subr.bf16.mxu0 0
        %3773 = vmatpush2.bf16.msra.mxu0 0
        %3774 = vmatprep.subr.bf16.mxu0 0
        %3775 = vmatpush2.bf16.msra.mxu0 0
        %3776 = vmatprep.subr.bf16.mxu0 0
        %3777 = vmatpush2.bf16.msra.mxu0 0
        %3778 = vmatprep.mubr.bf16.mxu0 0
        %3779 = vmatmul.mubr.bf16.gmra.mxu0 %v3534
        %v3780 = vpop.f32.mrf.mxu0
        %v3781 = vadd.f32 %v3684, %v3780
        %v3782 = vpop.f32.mrf.mxu0
        %v3783 = vpop.f32.mrf.mxu0
        %v3784 = vadd.f32 %v3687, %v3783
        %v3785 = vpop.f32.mrf.mxu0
        %3786 = vmatprep.mubr.bf16.mxu0 0
        %3787 = vmatmul.mubr.bf16.gmra.mxu0 %v3536
        %v3788 = vpop.f32.mrf.mxu0
        %v3789 = vadd.f32 %v3692, %v3788
        %v3790 = vpop.f32.mrf.mxu0
        %v3791 = vpop.f32.mrf.mxu0
        %v3792 = vadd.f32 %v3695, %v3791
        %v3793 = vpop.f32.mrf.mxu0
        %3794 = vmatprep.mubr.bf16.mxu0 0
        %3795 = vmatmul.mubr.bf16.gmra.mxu0 %v3538
        %v3796 = vpop.f32.mrf.mxu0
        %v3797 = vadd.f32 %v3700, %v3796
        %v3798 = vpop.f32.mrf.mxu0
        %v3799 = vpop.f32.mrf.mxu0
        %v3800 = vadd.f32 %v3703, %v3799
        %v3801 = vpop.f32.mrf.mxu0
        %3802 = vmatprep.mubr.bf16.mxu0 0
        %3803 = vmatmul.mubr.bf16.gmra.mxu0 %v3540
        %v3804 = vpop.f32.mrf.mxu0
        %v3805 = vadd.f32 %v3708, %v3804
        %v3806 = vpop.f32.mrf.mxu0
        %v3807 = vpop.f32.mrf.mxu0
        %v3808 = vadd.f32 %v3711, %v3807
        %v3809 = vpop.f32.mrf.mxu0
        %3810 = vmatprep.mubr.bf16.mxu0 0
        %3811 = vmatmul.mubr.bf16.gmra.mxu0 %v3542
        %v3812 = vpop.f32.mrf.mxu0
        %v3813 = vadd.f32 %v3716, %v3812
        %v3814 = vpop.f32.mrf.mxu0
        %v3815 = vpop.f32.mrf.mxu0
        %v3816 = vadd.f32 %v3719, %v3815
        %v3817 = vpop.f32.mrf.mxu0
        %3818 = vmatprep.mubr.bf16.mxu0 0
        %3819 = vmatmul.mubr.bf16.gmra.mxu0 %v3544
        %v3820 = vpop.f32.mrf.mxu0
        %v3821 = vadd.f32 %v3724, %v3820
        %v3822 = vpop.f32.mrf.mxu0
        %v3823 = vpop.f32.mrf.mxu0
        %v3824 = vadd.f32 %v3727, %v3823
        %v3825 = vpop.f32.mrf.mxu0
        %3826 = vmatprep.mubr.bf16.mxu0 0
        %3827 = vmatmul.mubr.bf16.gmra.mxu0 %v3547
        %v3828 = vpop.f32.mrf.mxu0
        %v3829 = vadd.f32 %v3732, %v3828
        %v3830 = vpop.f32.mrf.mxu0
        %v3831 = vpop.f32.mrf.mxu0
        %v3832 = vadd.f32 %v3735, %v3831
        %v3833 = vpop.f32.mrf.mxu0
        %3834 = vmatprep.mubr.bf16.mxu0 0
        %3835 = vmatmul.mubr.bf16.gmra.mxu0 %v3550
        %v3836 = vpop.f32.mrf.mxu0
        %v3837 = vadd.f32 %v3740, %v3836
        %v3838 = vpop.f32.mrf.mxu0
        %v3839 = vpop.f32.mrf.mxu0
        %v3840 = vadd.f32 %v3743, %v3839
        %v3841 = vpop.f32.mrf.mxu0
        %3842 = vdwg.mxu0
        %v3843 = vmax.f32 %v3781, 0.0
        %v3844 = vmax.f32 %v3784, 0.0
        %v3845 = vmax.f32 %v3789, 0.0
        %v3846 = vmax.f32 %v3792, 0.0
        %v3847 = vmax.f32 %v3797, 0.0
        %v3848 = vmax.f32 %v3800, 0.0
        %v3849 = vmax.f32 %v3805, 0.0
        %v3850 = vmax.f32 %v3808, 0.0
        %v3851 = vmax.f32 %v3813, 0.0
        %v3852 = vmax.f32 %v3816, 0.0
        %v3853 = vmax.f32 %v3821, 0.0
        %v3854 = vmax.f32 %v3824, 0.0
        %v3855 = vmax.f32 %v3829, 0.0
        %v3856 = vmax.f32 %v3832, 0.0
        %v3857 = vmax.f32 %v3837, 0.0
        %v3858 = vmax.f32 %v3840, 0.0
        %3859 = vxpose.xlu0.b32.start [1/16] %v3843, 128
        %3860 = vxpose.xlu0.b32.cont [2/16] %v3844, 128
        %3861 = vxpose.xlu0.b32.cont [3/16] %v3845, 128
        %3862 = vxpose.xlu0.b32.cont [4/16] %v3846, 128
        %3863 = vxpose.xlu0.b32.cont [5/16] %v3847, 128
        %3864 = vxpose.xlu0.b32.cont [6/16] %v3848, 128
        %3865 = vxpose.xlu0.b32.cont [7/16] %v3849, 128
        %3866 = vxpose.xlu0.b32.cont [8/16] %v3850, 128
        %3867 = vxpose.xlu0.b32.cont [9/16] %v3851, 128
        %3868 = vxpose.xlu0.b32.cont [10/16] %v3852, 128
        %3869 = vxpose.xlu0.b32.cont [11/16] %v3853, 128
        %3870 = vxpose.xlu0.b32.cont [12/16] %v3854, 128
        %3871 = vxpose.xlu0.b32.cont [13/16] %v3855, 128
        %3872 = vxpose.xlu0.b32.cont [14/16] %v3856, 128
        %3873 = vxpose.xlu0.b32.cont [15/16] %v3857, 128
        %3874 = vxpose.xlu0.b32.end [16/16] %v3858, 128
        %v3875 = vpop.trf.xlu0
        %v3876 = vpop.trf.xlu0
        %v3877 = vpop.trf.xlu0
        %v3878 = vpop.trf.xlu0
        %v3879 = vpop.trf.xlu0
        %v3880 = vpop.trf.xlu0
        %v3881 = vpop.trf.xlu0
        %v3882 = vpop.trf.xlu0
        %v3883 = vpop.trf.xlu0
        %v3884 = vpop.trf.xlu0
        %v3885 = vpop.trf.xlu0
        %v3886 = vpop.trf.xlu0
        %v3887 = vpop.trf.xlu0
        %v3888 = vpop.trf.xlu0
        %v3889 = vpop.trf.xlu0
        %v3890 = vpop.trf.xlu0
        %v3891 = vpack.c.bf16 %v3876, %v3875
        %v3892 = vpack.c.bf16 %v3878, %v3877
        %v3893 = vpack.c.bf16 %v3880, %v3879
        %v3894 = vpack.c.bf16 %v3882, %v3881
        %v3895 = vld [vmem:[%s7] sm:$0xf]
        %v3896 = vld [vmem:[%s7 + $0x4] sm:$0xf]
        %v3897 = vld [vmem:[%s7 + $0x8] sm:$0x7]
        %v3898 = vld [vmem:[%s8] sm:$0xff]
        %v3899 = vld [vmem:[%s8 + $0x8] sm:$0xff]
        %v3900 = vld [vmem:[%s8 + $0x10] sm:$0x3f]
        %3902 = vset.pattern.permute.xlu0 0
        %3903 = vperm.xlu0 %3902, %v3898
        %v3904 = vpop.permute.xlu0 %3903
        %3907 = vset.pattern.permute.xlu0 0
        %3908 = vperm.xlu0 %3907, %v3899
        %v3909 = vpop.permute.xlu0 %3908
        %3912 = vset.pattern.permute.xlu0 0
        %3913 = vperm.xlu0 %3912, %v3900
        %v3914 = vpop.permute.xlu0 %3913
        %v3919 = vunpack.c.l.b16 %v3895
        %v3920 = vunpack.c.l.b16 %v3896
        %v3921 = vunpack.c.l.b16 %v3897
        %v3922 = vpack.c.b16 %v3920, %v3919
        %v3923 = vpack.c.b16 %v3921, %v3921
        %v3925 = vsel %vm1939, %v3922, 0
        %v3928 = vsel %vm1939, %v3923, 0
        %3930 = vmatprep.subr.bf16.mxu0 0
        %3931 = vmatpush1.bf16.msra.mxu0 0
        %3932 = vmatprep.subr.bf16.mxu0 0
        %3933 = vmatpush1.bf16.msra.mxu0 0
        %3934 = vmatprep.subr.bf16.mxu0 0
        %3935 = vmatpush1.bf16.msra.mxu0 0
        %3936 = vmatprep.subr.bf16.mxu0 0
        %3937 = vmatpush1.bf16.msra.mxu0 0
        %3938 = vmatprep.subr.bf16.mxu0 0
        %3939 = vmatpush1.bf16.msra.mxu0 %v3894
        %3940 = vmatprep.subr.bf16.mxu0 0
        %3941 = vmatpush1.bf16.msra.mxu0 %v3893
        %3942 = vmatprep.subr.bf16.mxu0 0
        %3943 = vmatpush1.bf16.msra.mxu0 %v3892
        %3944 = vmatprep.subr.bf16.mxu0 0
        %3945 = vmatpush1.bf16.msra.mxu0 %v3891
        %3946 = vmatprep.subr.bf16.mxu0 0
        %3947 = vmatpush2.bf16.msra.mxu0 0
        %3948 = vmatprep.subr.bf16.mxu0 0
        %3949 = vmatpush2.bf16.msra.mxu0 0
        %3950 = vmatprep.subr.bf16.mxu0 0
        %3951 = vmatpush2.bf16.msra.mxu0 0
        %3952 = vmatprep.subr.bf16.mxu0 0
        %3953 = vmatpush2.bf16.msra.mxu0 0
        %3954 = vmatprep.subr.bf16.mxu0 0
        %3955 = vmatpush2.bf16.msra.mxu0 0
        %3956 = vmatprep.subr.bf16.mxu0 0
        %3957 = vmatpush2.bf16.msra.mxu0 0
        %3958 = vmatprep.subr.bf16.mxu0 0
        %3959 = vmatpush2.bf16.msra.mxu0 0
        %3960 = vmatprep.subr.bf16.mxu0 0
        %3961 = vmatpush2.bf16.msra.mxu0 0
        %3962 = vmatprep.mubr.bf16.mxu0 0
        %3963 = vmatmul.mubr.bf16.gmra.mxu0 %v3925
        %v3964 = vpop.f32.mrf.mxu0
        %v3965 = vadd.f32 %v3904, %v3964
        %v3966 = vpop.f32.mrf.mxu0
        %v3967 = vpop.f32.mrf.mxu0
        %v3968 = vadd.f32 %v3909, %v3967
        %v3969 = vpop.f32.mrf.mxu0
        %3970 = vmatprep.mubr.bf16.mxu0 0
        %3971 = vmatmul.mubr.bf16.gmra.mxu0 %v3928
        %v3972 = vpop.f32.mrf.mxu0
        %v3973 = vadd.f32 %v3914, %v3972
        %v3974 = vpop.f32.mrf.mxu0
        %v3975 = vpop.f32.mrf.mxu0
        %v3976 = vpop.f32.mrf.mxu0
        %3977 = vdwg.mxu0
        %3978 = vst [vmem:[%s335] sm:$0xff] %v3965
        %3979 = vst [vmem:[%s335 + $0x8] sm:$0xff] %v3968
        %3980 = vst [vmem:[%s335 + $0x10] sm:$0x3f] %v3973
        %s3981 = sand.u32 %s236, 1
        %s3982 = sand.u32 %s236, 1
        %s3983 = smul.addr %s3982, 24
        %s3984 = scalar_lea.vmem [#allocation2], %s3983
        // Predicated region
        $region57: #{small_object_head_forward.1} parent=55 // pred_check
          %p3985 = pneg %p246
        $region58: #{small_object_head_forward.1} parent=55 // pred_check_branch
          %3987 = sbr.rel (%p3985) target = $region60
        $region59: #{small_object_head_forward.1} parent=55 // pred_region
          %s3988 = smul.addr %s24, 6
          %s3989 = sadd.s32 %s25, %s3988
          %s3990 = smul.addr %s3989, 8
          %s3991 = scalar_lea.vmem %s9, %s3990
          // Predicated region
          $region61: #{small_object_head_forward.1} parent=59 // pred_check
            _
          $region62: #{small_object_head_forward.1} parent=59 // pred_check_branch
            %3993 = sbr.rel (0) target = $region64
          $region63: #{small_object_head_forward.1} parent=59 // pred_region
            // Predicated region
            $region65: #{small_object_head_forward.1} parent=63 // pred_check
              _
            $region66: #{small_object_head_forward.1} parent=63 // pred_check_branch
              %3995 = sbr.rel (0) target = $region68
            $region67: #{small_object_head_forward.1} parent=63 // pred_region
              // Predicated region
              $region80: #{small_object_head_forward.1} parent=67 // pred_check
                _
              $region81: #{small_object_head_forward.1} parent=67 // pred_check_branch
                %4015 = sbr.rel (0) target = $region83
              $region82: #{small_object_head_forward.1} parent=67 // pred_region
                loop: start=0, step=1, limit=1
                $region84: #{small_object_head_forward.1} parent=82 // loop_pre_header
                  _
                $region85: #{small_object_head_forward.1} parent=82 // loop_header
                  %s4017 = sphi 0, %s4021
                  %p4018 = scmp.ge.s32.totalorder %s4017, 1
                  %s4022 = sphi %s3984, %s3984
                  %s4023 = sphi %s3991, %s3991
                $region86: #{small_object_head_forward.1} parent=82 // loop_header_branch
                  %4020 = sbr.rel (%p4018) target = $region90
                $region87: #{small_object_head_forward.1} parent=82 // loop_body
                  %v4024 = vld [vmem:[%s4022] sm:$0xff]
                  %4025 = vst [vmem:[%s4023] sm:$0xff] %v4024
                  %v4026 = vld [vmem:[%s4022 + $0x8] sm:$0xff]
                  %4027 = vst [vmem:[%s4023 + $0x10] sm:$0xff] %v4026
                  %v4028 = vld [vmem:[%s4022 + $0x10] sm:$0xff]
                  %4029 = vst [vmem:[%s4023 + $0x20] sm:$0xff] %v4028
                $region88: #{small_object_head_forward.1} parent=82 // loop_footer
                  %s4021 = sadd.s32 1, %s4017
                $region89: #{small_object_head_forward.1} parent=82 // loop_footer_branch
                  %4016 = sbr.rel target = $region85
                $region90: #{small_object_head_forward.1} parent=82 // loop_exit
                  _
              $region83: #{small_object_head_forward.1} parent=67 // pred_fallthru
                _
              // Predicated region
              $region91: #{small_object_head_forward.1} parent=67 // pred_check
                _
              $region92: #{small_object_head_forward.1} parent=67 // pred_check_branch
                %4031 = sbr.rel target = $region94
              $region93: #{small_object_head_forward.1} parent=67 // pred_region
                _
              $region94: #{small_object_head_forward.1} parent=67 // pred_fallthru
                _
            $region68: #{small_object_head_forward.1} parent=63 // pred_fallthru
              _
            // Predicated region
            $region69: #{small_object_head_forward.1} parent=63 // pred_check
              _
            $region70: #{small_object_head_forward.1} parent=63 // pred_check_branch
              %3997 = sbr.rel target = $region72
            $region71: #{small_object_head_forward.1} parent=63 // pred_region
              %s3999 = ssub.s32 256, 1
              loop: start=0, step=1, limit=1
              $region73: #{small_object_head_forward.1} parent=71 // loop_pre_header
                _
              $region74: #{small_object_head_forward.1} parent=71 // loop_header
                %s4001 = sphi 0, %s4005
                %p4002 = scmp.ge.s32.totalorder %s4001, 1
                %s4006 = sphi %s3984, %s3984
                %s4007 = sphi %s3991, %s3991
              $region75: #{small_object_head_forward.1} parent=71 // loop_header_branch
                %4004 = sbr.rel (%p4002) target = $region79
              $region76: #{small_object_head_forward.1} parent=71 // loop_body
                %v4008 = vld [vmem:[%s4006] sm:%s3999]
                %4009 = vst [vmem:[%s4007] sm:%s3999] %v4008
                %v4010 = vld [vmem:[%s4006 + $0x8] sm:%s3999]
                %4011 = vst [vmem:[%s4007 + $0x10] sm:%s3999] %v4010
                %v4012 = vld [vmem:[%s4006 + $0x10] sm:%s3999]
                %4013 = vst [vmem:[%s4007 + $0x20] sm:%s3999] %v4012
              $region77: #{small_object_head_forward.1} parent=71 // loop_footer
                %s4005 = sadd.s32 1, %s4001
              $region78: #{small_object_head_forward.1} parent=71 // loop_footer_branch
                %4000 = sbr.rel target = $region74
              $region79: #{small_object_head_forward.1} parent=71 // loop_exit
                _
            $region72: #{small_object_head_forward.1} parent=63 // pred_fallthru
              _
          $region64: #{small_object_head_forward.1} parent=59 // pred_fallthru
            _
          %4032 = vnop
        $region60: #{small_object_head_forward.1} parent=55 // pred_fallthru
          _
      $region56: #{small_object_head_forward.1} parent=5 // pred_fallthru
        _
      %p4033 = scmp.le.s32.totalorder 2, %s15
      // Predicated region
      $region95: #{small_object_head_forward.1} parent=5 // pred_check
        %p4034 = pneg %p4033
      $region96: #{small_object_head_forward.1} parent=5 // pred_check_branch
        %4036 = sbr.rel (%p4034) target = $region98
      $region97: #{small_object_head_forward.1} parent=5 // pred_region
        %s4037 = ssub.s32 %s15, 2
        // Predicated region
        $region99: #{small_object_head_forward.1} parent=97 // pred_check
          %p4038 = pneg %p252
        $region100: #{small_object_head_forward.1} parent=97 // pred_check_branch
          %4040 = sbr.rel (%p4038) target = $region102
        $region101: #{small_object_head_forward.1} parent=97 // pred_region
          %s4041 = sand.u32 %s237, 1
          %s4042 = sand.u32 %s237, 1
          %s4043 = smul.addr %s4042, 24
          %s4044 = scalar_lea.vmem [#allocation2], %s4043
        $region102: #{small_object_head_forward.1} parent=97 // pred_fallthru
          _
      $region98: #{small_object_head_forward.1} parent=5 // pred_fallthru
        _
    $region6: #{small_object_head_forward.1} parent=1 // loop_footer
      %s19 = sadd.s32 1, %s15
    $region7: #{small_object_head_forward.1} parent=1 // loop_footer_branch
      %14 = sbr.rel target = $region3
    $region8: #{small_object_head_forward.1} parent=1 // loop_exit
      _

</llo_original>
